<compile_context>
chip_gen: v6e
topology: v6e:2x2x1
jax: 0.10.0
libtpu: 0.0.40
codegen_flags: <defaults>
</compile_context>

<pallas_src>
import jax
import jax.numpy as jnp
from jax.experimental import pallas as pl
from jax.experimental.pallas import tpu as pltpu


# ----------------------------------------------------------------------------
# Fused kernel: SeparableConv -> ReLU -> BN -> MaxPool(3,2,1)  +  skip(1x1 s2 -> BN)
# ----------------------------------------------------------------------------
def _downsample_block_kernel(x_ref, dww_ref, pww_ref, skw_ref, o_ref,
                             xpad_ref, zpad_ref):
    N, H, W, Cin = x_ref.shape
    Cout = pww_ref.shape[1]
    Ho, Wo = H // 2, W // 2
    f32 = jnp.float32
    eps = 1e-5

    # ---- depthwise 3x3 (pad=1, stride=1): zero halo built in VMEM, halo-only init ----
    zero_row = jnp.zeros((N, 1, W + 2, Cin), f32)
    zero_col = jnp.zeros((N, H, 1, Cin), f32)
    xpad_ref[:, 0:1, :, :] = zero_row
    xpad_ref[:, H + 1:H + 2, :, :] = zero_row
    xpad_ref[:, 1:H + 1, 0:1, :] = zero_col
    xpad_ref[:, 1:H + 1, W + 1:W + 2, :] = zero_col
    xpad_ref[:, 1:H + 1, 1:W + 1, :] = x_ref[...]

    y = xpad_ref[:, 0:H, 0:W, :] * dww_ref[0, 0, :]
    for dh in range(3):
        for dw in range(3):
            if dh == 0 and dw == 0:
                continue
            y = y + xpad_ref[:, dh:dh + H, dw:dw + W, :] * dww_ref[dh, dw, :]

    # ---- pointwise 1x1 (Cin -> Cout) + ReLU on the MXU ----
    z = jnp.dot(y.reshape(N * H * W, Cin), pww_ref[...],
                preferred_element_type=f32)                    # (N*H*W, Cout)
    z = jnp.maximum(z, 0.0)

    # ---- BatchNorm2d stats (training-mode batch stats, centered variance) ----
    cnt = N * H * W
    mean = jnp.sum(z, axis=0, keepdims=True) * (1.0 / cnt)     # (1, Cout)
    z_c = z - mean
    var = jnp.sum(z_c * z_c, axis=0, keepdims=True) * (1.0 / cnt)
    inv = jax.lax.rsqrt(var + eps)                             # (1, Cout)

    # ---- MaxPool2d(3, stride=2, pad=1) on z (BN affine commutes with max) ----
    ninf_row = jnp.full((N, 1, W + 2, Cout), -jnp.inf, f32)
    ninf_col = jnp.full((N, H, 1, Cout), -jnp.inf, f32)
    zpad_ref[:, 0:1, :, :] = ninf_row
    zpad_ref[:, H + 1:H + 2, :, :] = ninf_row
    zpad_ref[:, 1:H + 1, 0:1, :] = ninf_col
    zpad_ref[:, 1:H + 1, W + 1:W + 2, :] = ninf_col
    zpad_ref[:, 1:H + 1, 1:W + 1, :] = z.reshape(N, H, W, Cout)

    # stride-2 W selection: strided reads straight from the padded ref
    colmax = jnp.maximum(
        jnp.maximum(zpad_ref[:, :, pl.ds(0, Wo, 2), :],
                    zpad_ref[:, :, pl.ds(1, Wo, 2), :]),
        zpad_ref[:, :, pl.ds(2, Wo, 2), :])                    # (N, H+2, Wo, Cout)

    # stride-2 H selection: relayout-free leading-dim reshape (no scratch round trip)
    def row_sel(dh):
        return colmax[:, dh:dh + 2 * Ho, :, :].reshape(
            N, Ho, 2, Wo, Cout)[:, :, 0, :, :]                 # rows dh + 2*ho

    pooled = jnp.maximum(jnp.maximum(row_sel(0), row_sel(1)), row_sel(2))
    main = (pooled.reshape(N * Ho * Wo, Cout) - mean) * inv    # post-pool BN apply

    # ---- skip: 1x1 conv stride 2 (MXU) + BatchNorm ----
    xs = x_ref[:, :, pl.ds(0, Wo, 2), :]                       # even cols (N, H, Wo, Cin)
    xs = xs.reshape(N, Ho, 2, Wo, Cin)[:, :, 0, :, :]          # even rows (N, Ho, Wo, Cin)
    sk = jnp.dot(xs.reshape(N * Ho * Wo, Cin), skw_ref[...],
                 preferred_element_type=f32)                   # (N*Ho*Wo, Cout)
    cnt_s = N * Ho * Wo
    mean_s = jnp.sum(sk, axis=0, keepdims=True) * (1.0 / cnt_s)
    sk_c = sk - mean_s
    var_s = jnp.sum(sk_c * sk_c, axis=0, keepdims=True) * (1.0 / cnt_s)
    skn = sk_c * jax.lax.rsqrt(var_s + eps)

    # ---- residual add; single lane-dense (Cout, N*Ho*Wo) = (16, 128) store ----
    o_ref[...] = jnp.transpose(main + skn).astype(o_ref.dtype)


# ----------------------------------------------------------------------------
# Wrapper: one pallas_call, no grid, everything resident in VMEM
# ----------------------------------------------------------------------------
def downsampling_block(x_nhwc, dw_w, pw_w, skip_w):
    N, H, W, Cin = x_nhwc.shape
    Cout = pw_w.shape[1]
    Ho, Wo = H // 2, W // 2
    out_t = pl.pallas_call(
        _downsample_block_kernel,
        out_shape=jax.ShapeDtypeStruct((Cout, N * Ho * Wo), jnp.float32),
        scratch_shapes=[
            pltpu.VMEM((N, H + 2, W + 2, Cin), jnp.float32),   # zero-padded input
            pltpu.VMEM((N, H + 2, W + 2, Cout), jnp.float32),  # -inf padded z (pre-BN)
        ],
    )(x_nhwc, dw_w, pw_w, skip_w)
    # undo the kernel's lane-dense channel-major layout (trivial host-side ops)
    return jnp.transpose(out_t.reshape(Cout, N, Ho, Wo), (1, 2, 3, 0))   # NHWC


# ----------------------------------------------------------------------------
# Pure-JAX reference (independent check of the forward semantics)
# ----------------------------------------------------------------------------
def ref_downsampling_block(x_nhwc, dw_w, pw_w, skip_w, eps=1e-5):
    N, H, W, Cin = x_nhwc.shape
    hp = jax.lax.Precision.HIGHEST
    dn = jax.lax.conv_dimension_numbers(x_nhwc.shape, (3, 3, 1, Cin),
                                        ("NHWC", "HWIO", "NHWC"))
    y = jax.lax.conv_general_dilated(
        x_nhwc, dw_w.reshape(3, 3, 1, Cin), window_strides=(1, 1),
        padding=((1, 1), (1, 1)), dimension_numbers=dn,
        feature_group_count=Cin, precision=hp)
    z = jnp.maximum(jnp.einsum("nhwc,cd->nhwd", y, pw_w, precision=hp), 0.0)
    mean = jnp.mean(z, axis=(0, 1, 2), keepdims=True)
    var = jnp.var(z, axis=(0, 1, 2), keepdims=True)
    zn = (z - mean) / jnp.sqrt(var + eps)
    pooled = jax.lax.reduce_window(
        zn, -jnp.inf, jax.lax.max, (1, 3, 3, 1), (1, 2, 2, 1),
        ((0, 0), (1, 1), (1, 1), (0, 0)))
    xs = x_nhwc[:, ::2, ::2, :]
    sk = jnp.einsum("nhwc,cd->nhwd", xs, skip_w, precision=hp)
    ms = jnp.mean(sk, axis=(0, 1, 2), keepdims=True)
    vs = jnp.var(sk, axis=(0, 1, 2), keepdims=True)
    skn = (sk - ms) / jnp.sqrt(vs + eps)
    return pooled + skn


# ----------------------------------------------------------------------------
# Main
# ----------------------------------------------------------------------------
if __name__ == "__main__":
    key = jax.random.PRNGKey(0)
    k1, k2, k3, kx = jax.random.split(key, 4)

    n_channels, depth = 4, 1
    cin = n_channels * 2 ** depth          # 8
    cout = n_channels * 2 ** (depth + 1)   # 16

    dw_w = jax.random.normal(k1, (3, 3, cin), jnp.float32) * 0.1    # depthwise 3x3
    pw_w = jax.random.normal(k2, (cin, cout), jnp.float32) * 0.1    # pointwise 1x1
    skip_w = jax.random.normal(k3, (cin, cout), jnp.float32) * 0.1  # skip 1x1 (stride 2)

    # PyTorch-style NCHW input: image (2, 8, 16, 16)
    x_nchw = jax.random.normal(kx, (2, cin, 16, 16), jnp.float32)
    x_nhwc = jnp.transpose(x_nchw, (0, 2, 3, 1))        # host-side layout op

    fwd = jax.jit(downsampling_block)
    out_nhwc = fwd(x_nhwc, dw_w, pw_w, skip_w)
    jax.block_until_ready(out_nhwc)
    out_nchw = jnp.transpose(out_nhwc, (0, 3, 1, 2))    # back to PyTorch layout

    assert out_nchw.shape == (2, cout, 8, 8), out_nchw.shape
    assert bool(jnp.all(jnp.isfinite(out_nchw)))

    ref_nhwc = ref_downsampling_block(x_nhwc, dw_w, pw_w, skip_w)
    max_err = float(jnp.max(jnp.abs(out_nhwc - ref_nhwc)))
    assert max_err < 1e-3, f"mismatch vs reference: max abs err {max_err}"

    print("KERNEL_OK")
</pallas_src>

<mosaic_0001>
module attributes {stable_mosaic.version = 11 : i64} {
  func.func @_downsample_block_kernel(%arg0: memref<2x16x16x8xf32, #tpu.memory_space<vmem>>, %arg1: memref<3x3x8xf32, #tpu.memory_space<vmem>>, %arg2: memref<8x16xf32, #tpu.memory_space<vmem>>, %arg3: memref<8x16xf32, #tpu.memory_space<vmem>>, %arg4: memref<16x128xf32, #tpu.memory_space<vmem>>, %arg5: memref<2x18x18x8xf32, #tpu.memory_space<vmem>>, %arg6: memref<2x18x18x16xf32, #tpu.memory_space<vmem>>) attributes {dimension_semantics = [], scalar_prefetch = 0 : i64, scratch_operands = 2 : i64, tpu.core_type = #tpu.core_type<tc>} {
    %cst = arith.constant 0.000000e+00 : f32
    %0 = vector.broadcast %cst : f32 to vector<2x1x18x8xf32>
    %cst_0 = arith.constant 0.000000e+00 : f32
    %1 = vector.broadcast %cst_0 : f32 to vector<2x16x1x8xf32>
    %c0 = arith.constant 0 : index
    %c0_1 = arith.constant 0 : index
    %c0_2 = arith.constant 0 : index
    %c0_3 = arith.constant 0 : index
    %2 = vector.load %arg5[%c0, %c0_1, %c0_2, %c0_3] : memref<2x18x18x8xf32, #tpu.memory_space<vmem>>, vector<2x1x18x8xf32>
    tpu.vector_store %arg5[%c0, %c0_1, %c0_2, %c0_3], %0 {strides = array<i32>} : memref<2x18x18x8xf32, #tpu.memory_space<vmem>>, vector<2x1x18x8xf32>,
    %c0_4 = arith.constant 0 : index
    %c17 = arith.constant 17 : index
    %c0_5 = arith.constant 0 : index
    %c0_6 = arith.constant 0 : index
    %3 = vector.load %arg5[%c0_4, %c17, %c0_5, %c0_6] : memref<2x18x18x8xf32, #tpu.memory_space<vmem>>, vector<2x1x18x8xf32>
    tpu.vector_store %arg5[%c0_4, %c17, %c0_5, %c0_6], %0 {strides = array<i32>} : memref<2x18x18x8xf32, #tpu.memory_space<vmem>>, vector<2x1x18x8xf32>,
    %c0_7 = arith.constant 0 : index
    %c1 = arith.constant 1 : index
    %c0_8 = arith.constant 0 : index
    %c0_9 = arith.constant 0 : index
    %4 = vector.load %arg5[%c0_7, %c1, %c0_8, %c0_9] : memref<2x18x18x8xf32, #tpu.memory_space<vmem>>, vector<2x16x1x8xf32>
    tpu.vector_store %arg5[%c0_7, %c1, %c0_8, %c0_9], %1 {strides = array<i32>} : memref<2x18x18x8xf32, #tpu.memory_space<vmem>>, vector<2x16x1x8xf32>,
    %c0_10 = arith.constant 0 : index
    %c1_11 = arith.constant 1 : index
    %c17_12 = arith.constant 17 : index
    %c0_13 = arith.constant 0 : index
    %5 = vector.load %arg5[%c0_10, %c1_11, %c17_12, %c0_13] : memref<2x18x18x8xf32, #tpu.memory_space<vmem>>, vector<2x16x1x8xf32>
    tpu.vector_store %arg5[%c0_10, %c1_11, %c17_12, %c0_13], %1 {strides = array<i32>} : memref<2x18x18x8xf32, #tpu.memory_space<vmem>>, vector<2x16x1x8xf32>,
    %c0_14 = arith.constant 0 : index
    %c0_15 = arith.constant 0 : index
    %c0_16 = arith.constant 0 : index
    %c0_17 = arith.constant 0 : index
    %6 = vector.load %arg0[%c0_14, %c0_15, %c0_16, %c0_17] : memref<2x16x16x8xf32, #tpu.memory_space<vmem>>, vector<2x16x16x8xf32>
    %c0_18 = arith.constant 0 : index
    %c1_19 = arith.constant 1 : index
    %c1_20 = arith.constant 1 : index
    %c0_21 = arith.constant 0 : index
    %7 = vector.load %arg5[%c0_18, %c1_19, %c1_20, %c0_21] : memref<2x18x18x8xf32, #tpu.memory_space<vmem>>, vector<2x16x16x8xf32>
    tpu.vector_store %arg5[%c0_18, %c1_19, %c1_20, %c0_21], %6 {strides = array<i32>} : memref<2x18x18x8xf32, #tpu.memory_space<vmem>>, vector<2x16x16x8xf32>,
    %c0_22 = arith.constant 0 : index
    %c0_23 = arith.constant 0 : index
    %c0_24 = arith.constant 0 : index
    %c0_25 = arith.constant 0 : index
    %8 = vector.load %arg5[%c0_22, %c0_23, %c0_24, %c0_25] : memref<2x18x18x8xf32, #tpu.memory_space<vmem>>, vector<2x16x16x8xf32>
    %c0_26 = arith.constant 0 : index
    %c0_27 = arith.constant 0 : index
    %c0_28 = arith.constant 0 : index
    %9 = vector.load %arg1[%c0_26, %c0_27, %c0_28] : memref<3x3x8xf32, #tpu.memory_space<vmem>>, vector<1x1x8xf32>
    %10 = vector.shape_cast %9 : vector<1x1x8xf32> to vector<8xf32>
    %11 = vector.shape_cast %10 : vector<8xf32> to vector<1x1x1x8xf32>
    %12 = vector.broadcast %11 : vector<1x1x1x8xf32> to vector<2x16x16x8xf32>
    %13 = arith.mulf %8, %12 : vector<2x16x16x8xf32>
    %c0_29 = arith.constant 0 : index
    %c0_30 = arith.constant 0 : index
    %c1_31 = arith.constant 1 : index
    %c0_32 = arith.constant 0 : index
    %14 = vector.load %arg5[%c0_29, %c0_30, %c1_31, %c0_32] : memref<2x18x18x8xf32, #tpu.memory_space<vmem>>, vector<2x16x16x8xf32>
    %c0_33 = arith.constant 0 : index
    %c1_34 = arith.constant 1 : index
    %c0_35 = arith.constant 0 : index
    %15 = vector.load %arg1[%c0_33, %c1_34, %c0_35] : memref<3x3x8xf32, #tpu.memory_space<vmem>>, vector<1x1x8xf32>
    %16 = vector.shape_cast %15 : vector<1x1x8xf32> to vector<8xf32>
    %17 = vector.shape_cast %16 : vector<8xf32> to vector<1x1x1x8xf32>
    %18 = vector.broadcast %17 : vector<1x1x1x8xf32> to vector<2x16x16x8xf32>
    %19 = arith.mulf %14, %18 : vector<2x16x16x8xf32>
    %20 = arith.addf %13, %19 : vector<2x16x16x8xf32>
    %c0_36 = arith.constant 0 : index
    %c0_37 = arith.constant 0 : index
    %c2 = arith.constant 2 : index
    %c0_38 = arith.constant 0 : index
    %21 = vector.load %arg5[%c0_36, %c0_37, %c2, %c0_38] : memref<2x18x18x8xf32, #tpu.memory_space<vmem>>, vector<2x16x16x8xf32>
    %c0_39 = arith.constant 0 : index
    %c2_40 = arith.constant 2 : index
    %c0_41 = arith.constant 0 : index
    %22 = vector.load %arg1[%c0_39, %c2_40, %c0_41] : memref<3x3x8xf32, #tpu.memory_space<vmem>>, vector<1x1x8xf32>
    %23 = vector.shape_cast %22 : vector<1x1x8xf32> to vector<8xf32>
    %24 = vector.shape_cast %23 : vector<8xf32> to vector<1x1x1x8xf32>
    %25 = vector.broadcast %24 : vector<1x1x1x8xf32> to vector<2x16x16x8xf32>
    %26 = arith.mulf %21, %25 : vector<2x16x16x8xf32>
    %27 = arith.addf %20, %26 : vector<2x16x16x8xf32>
    %c0_42 = arith.constant 0 : index
    %c1_43 = arith.constant 1 : index
    %c0_44 = arith.constant 0 : index
    %c0_45 = arith.constant 0 : index
    %28 = vector.load %arg5[%c0_42, %c1_43, %c0_44, %c0_45] : memref<2x18x18x8xf32, #tpu.memory_space<vmem>>, vector<2x16x16x8xf32>
    %c1_46 = arith.constant 1 : index
    %c0_47 = arith.constant 0 : index
    %c0_48 = arith.constant 0 : index
    %29 = vector.load %arg1[%c1_46, %c0_47, %c0_48] : memref<3x3x8xf32, #tpu.memory_space<vmem>>, vector<1x1x8xf32>
    %30 = vector.shape_cast %29 : vector<1x1x8xf32> to vector<8xf32>
    %31 = vector.shape_cast %30 : vector<8xf32> to vector<1x1x1x8xf32>
    %32 = vector.broadcast %31 : vector<1x1x1x8xf32> to vector<2x16x16x8xf32>
    %33 = arith.mulf %28, %32 : vector<2x16x16x8xf32>
    %34 = arith.addf %27, %33 : vector<2x16x16x8xf32>
    %c0_49 = arith.constant 0 : index
    %c1_50 = arith.constant 1 : index
    %c1_51 = arith.constant 1 : index
    %c0_52 = arith.constant 0 : index
    %35 = vector.load %arg5[%c0_49, %c1_50, %c1_51, %c0_52] : memref<2x18x18x8xf32, #tpu.memory_space<vmem>>, vector<2x16x16x8xf32>
    %c1_53 = arith.constant 1 : index
    %c1_54 = arith.constant 1 : index
    %c0_55 = arith.constant 0 : index
    %36 = vector.load %arg1[%c1_53, %c1_54, %c0_55] : memref<3x3x8xf32, #tpu.memory_space<vmem>>, vector<1x1x8xf32>
    %37 = vector.shape_cast %36 : vector<1x1x8xf32> to vector<8xf32>
    %38 = vector.shape_cast %37 : vector<8xf32> to vector<1x1x1x8xf32>
    %39 = vector.broadcast %38 : vector<1x1x1x8xf32> to vector<2x16x16x8xf32>
    %40 = arith.mulf %35, %39 : vector<2x16x16x8xf32>
    %41 = arith.addf %34, %40 : vector<2x16x16x8xf32>
    %c0_56 = arith.constant 0 : index
    %c1_57 = arith.constant 1 : index
    %c2_58 = arith.constant 2 : index
    %c0_59 = arith.constant 0 : index
    %42 = vector.load %arg5[%c0_56, %c1_57, %c2_58, %c0_59] : memref<2x18x18x8xf32, #tpu.memory_space<vmem>>, vector<2x16x16x8xf32>
    %c1_60 = arith.constant 1 : index
    %c2_61 = arith.constant 2 : index
    %c0_62 = arith.constant 0 : index
    %43 = vector.load %arg1[%c1_60, %c2_61, %c0_62] : memref<3x3x8xf32, #tpu.memory_space<vmem>>, vector<1x1x8xf32>
    %44 = vector.shape_cast %43 : vector<1x1x8xf32> to vector<8xf32>
    %45 = vector.shape_cast %44 : vector<8xf32> to vector<1x1x1x8xf32>
    %46 = vector.broadcast %45 : vector<1x1x1x8xf32> to vector<2x16x16x8xf32>
    %47 = arith.mulf %42, %46 : vector<2x16x16x8xf32>
    %48 = arith.addf %41, %47 : vector<2x16x16x8xf32>
    %c0_63 = arith.constant 0 : index
    %c2_64 = arith.constant 2 : index
    %c0_65 = arith.constant 0 : index
    %c0_66 = arith.constant 0 : index
    %49 = vector.load %arg5[%c0_63, %c2_64, %c0_65, %c0_66] : memref<2x18x18x8xf32, #tpu.memory_space<vmem>>, vector<2x16x16x8xf32>
    %c2_67 = arith.constant 2 : index
    %c0_68 = arith.constant 0 : index
    %c0_69 = arith.constant 0 : index
    %50 = vector.load %arg1[%c2_67, %c0_68, %c0_69] : memref<3x3x8xf32, #tpu.memory_space<vmem>>, vector<1x1x8xf32>
    %51 = vector.shape_cast %50 : vector<1x1x8xf32> to vector<8xf32>
    %52 = vector.shape_cast %51 : vector<8xf32> to vector<1x1x1x8xf32>
    %53 = vector.broadcast %52 : vector<1x1x1x8xf32> to vector<2x16x16x8xf32>
    %54 = arith.mulf %49, %53 : vector<2x16x16x8xf32>
    %55 = arith.addf %48, %54 : vector<2x16x16x8xf32>
    %c0_70 = arith.constant 0 : index
    %c2_71 = arith.constant 2 : index
    %c1_72 = arith.constant 1 : index
    %c0_73 = arith.constant 0 : index
    %56 = vector.load %arg5[%c0_70, %c2_71, %c1_72, %c0_73] : memref<2x18x18x8xf32, #tpu.memory_space<vmem>>, vector<2x16x16x8xf32>
    %c2_74 = arith.constant 2 : index
    %c1_75 = arith.constant 1 : index
    %c0_76 = arith.constant 0 : index
    %57 = vector.load %arg1[%c2_74, %c1_75, %c0_76] : memref<3x3x8xf32, #tpu.memory_space<vmem>>, vector<1x1x8xf32>
    %58 = vector.shape_cast %57 : vector<1x1x8xf32> to vector<8xf32>
    %59 = vector.shape_cast %58 : vector<8xf32> to vector<1x1x1x8xf32>
    %60 = vector.broadcast %59 : vector<1x1x1x8xf32> to vector<2x16x16x8xf32>
    %61 = arith.mulf %56, %60 : vector<2x16x16x8xf32>
    %62 = arith.addf %55, %61 : vector<2x16x16x8xf32>
    %c0_77 = arith.constant 0 : index
    %c2_78 = arith.constant 2 : index
    %c2_79 = arith.constant 2 : index
    %c0_80 = arith.constant 0 : index
    %63 = vector.load %arg5[%c0_77, %c2_78, %c2_79, %c0_80] : memref<2x18x18x8xf32, #tpu.memory_space<vmem>>, vector<2x16x16x8xf32>
    %c2_81 = arith.constant 2 : index
    %c2_82 = arith.constant 2 : index
    %c0_83 = arith.constant 0 : index
    %64 = vector.load %arg1[%c2_81, %c2_82, %c0_83] : memref<3x3x8xf32, #tpu.memory_space<vmem>>, vector<1x1x8xf32>
    %65 = vector.shape_cast %64 : vector<1x1x8xf32> to vector<8xf32>
    %66 = vector.shape_cast %65 : vector<8xf32> to vector<1x1x1x8xf32>
    %67 = vector.broadcast %66 : vector<1x1x1x8xf32> to vector<2x16x16x8xf32>
    %68 = arith.mulf %63, %67 : vector<2x16x16x8xf32>
    %69 = arith.addf %62, %68 : vector<2x16x16x8xf32>
    %70 = vector.shape_cast %69 : vector<2x16x16x8xf32> to vector<512x8xf32>
    %c0_84 = arith.constant 0 : index
    %c0_85 = arith.constant 0 : index
    %71 = vector.load %arg2[%c0_84, %c0_85] : memref<8x16xf32, #tpu.memory_space<vmem>>, vector<8x16xf32>
    %cst_86 = arith.constant dense<0.000000e+00> : vector<512x16xf32>
    %72 = tpu.matmul %70, %71, %cst_86 {dimension_numbers = #tpu.dot_dimension_numbers<[1], [0], [0], [1], [0, 0, 1, 1], [], []>} : vector<512x8xf32>, vector<8x16xf32>, vector<512x16xf32> -> vector<512x16xf32>
    %cst_87 = arith.constant 0.000000e+00 : f32
    %73 = vector.broadcast %cst_87 : f32 to vector<512x16xf32>
    %74 = arith.maximumf %72, %73 : vector<512x16xf32>
    %cst_88 = arith.constant dense<0.000000e+00> : vector<16xf32>
    %75 = vector.multi_reduction <add>, %74, %cst_88 [0] : vector<512x16xf32> to vector<16xf32>
    %76 = vector.shape_cast %75 : vector<16xf32> to vector<1x16xf32>
    %cst_89 = arith.constant 0.001953125 : f32
    %77 = vector.broadcast %cst_89 : f32 to vector<1x16xf32>
    %78 = arith.mulf %76, %77 : vector<1x16xf32>
    %79 = vector.broadcast %78 : vector<1x16xf32> to vector<512x16xf32>
    %80 = arith.subf %74, %79 : vector<512x16xf32>
    %81 = arith.mulf %80, %80 : vector<512x16xf32>
    %cst_90 = arith.constant dense<0.000000e+00> : vector<16xf32>
    %82 = vector.multi_reduction <add>, %81, %cst_90 [0] : vector<512x16xf32> to vector<16xf32>
    %83 = vector.shape_cast %82 : vector<16xf32> to vector<1x16xf32>
    %cst_91 = arith.constant 0.001953125 : f32
    %84 = vector.broadcast %cst_91 : f32 to vector<1x16xf32>
    %85 = arith.mulf %83, %84 : vector<1x16xf32>
    %cst_92 = arith.constant 9.99999974E-6 : f32
    %86 = vector.broadcast %cst_92 : f32 to vector<1x16xf32>
    %87 = arith.addf %85, %86 : vector<1x16xf32>
    %88 = math.rsqrt %87 : vector<1x16xf32>
    %cst_93 = arith.constant 0xFF800000 : f32
    %89 = vector.broadcast %cst_93 : f32 to vector<2x1x18x16xf32>
    %cst_94 = arith.constant 0xFF800000 : f32
    %90 = vector.broadcast %cst_94 : f32 to vector<2x16x1x16xf32>
    %c0_95 = arith.constant 0 : index
    %c0_96 = arith.constant 0 : index
    %c0_97 = arith.constant 0 : index
    %c0_98 = arith.constant 0 : index
    %91 = vector.load %arg6[%c0_95, %c0_96, %c0_97, %c0_98] : memref<2x18x18x16xf32, #tpu.memory_space<vmem>>, vector<2x1x18x16xf32>
    tpu.vector_store %arg6[%c0_95, %c0_96, %c0_97, %c0_98], %89 {strides = array<i32>} : memref<2x18x18x16xf32, #tpu.memory_space<vmem>>, vector<2x1x18x16xf32>,
    %c0_99 = arith.constant 0 : index
    %c17_100 = arith.constant 17 : index
    %c0_101 = arith.constant 0 : index
    %c0_102 = arith.constant 0 : index
    %92 = vector.load %arg6[%c0_99, %c17_100, %c0_101, %c0_102] : memref<2x18x18x16xf32, #tpu.memory_space<vmem>>, vector<2x1x18x16xf32>
    tpu.vector_store %arg6[%c0_99, %c17_100, %c0_101, %c0_102], %89 {strides = array<i32>} : memref<2x18x18x16xf32, #tpu.memory_space<vmem>>, vector<2x1x18x16xf32>,
    %c0_103 = arith.constant 0 : index
    %c1_104 = arith.constant 1 : index
    %c0_105 = arith.constant 0 : index
    %c0_106 = arith.constant 0 : index
    %93 = vector.load %arg6[%c0_103, %c1_104, %c0_105, %c0_106] : memref<2x18x18x16xf32, #tpu.memory_space<vmem>>, vector<2x16x1x16xf32>
    tpu.vector_store %arg6[%c0_103, %c1_104, %c0_105, %c0_106], %90 {strides = array<i32>} : memref<2x18x18x16xf32, #tpu.memory_space<vmem>>, vector<2x16x1x16xf32>,
    %c0_107 = arith.constant 0 : index
    %c1_108 = arith.constant 1 : index
    %c17_109 = arith.constant 17 : index
    %c0_110 = arith.constant 0 : index
    %94 = vector.load %arg6[%c0_107, %c1_108, %c17_109, %c0_110] : memref<2x18x18x16xf32, #tpu.memory_space<vmem>>, vector<2x16x1x16xf32>
    tpu.vector_store %arg6[%c0_107, %c1_108, %c17_109, %c0_110], %90 {strides = array<i32>} : memref<2x18x18x16xf32, #tpu.memory_space<vmem>>, vector<2x16x1x16xf32>,
    %95 = vector.shape_cast %74 : vector<512x16xf32> to vector<2x16x16x16xf32>
    %c0_111 = arith.constant 0 : index
    %c1_112 = arith.constant 1 : index
    %c1_113 = arith.constant 1 : index
    %c0_114 = arith.constant 0 : index
    %96 = vector.load %arg6[%c0_111, %c1_112, %c1_113, %c0_114] : memref<2x18x18x16xf32, #tpu.memory_space<vmem>>, vector<2x16x16x16xf32>
    tpu.vector_store %arg6[%c0_111, %c1_112, %c1_113, %c0_114], %95 {strides = array<i32>} : memref<2x18x18x16xf32, #tpu.memory_space<vmem>>, vector<2x16x16x16xf32>,
    %c0_115 = arith.constant 0 : index
    %c0_116 = arith.constant 0 : index
    %c0_117 = arith.constant 0 : index
    %c0_118 = arith.constant 0 : index
    %97 = tpu.strided_load %arg6[%c0_115, %c0_116, %c0_117, %c0_118] {strides = array<i32: 1, 1, 2, 1>} : memref<2x18x18x16xf32, #tpu.memory_space<vmem>>, vector<2x18x8x16xf32>
    %c0_119 = arith.constant 0 : index
    %c0_120 = arith.constant 0 : index
    %c1_121 = arith.constant 1 : index
    %c0_122 = arith.constant 0 : index
    %98 = tpu.strided_load %arg6[%c0_119, %c0_120, %c1_121, %c0_122] {strides = array<i32: 1, 1, 2, 1>} : memref<2x18x18x16xf32, #tpu.memory_space<vmem>>, vector<2x18x8x16xf32>
    %99 = arith.maximumf %97, %98 : vector<2x18x8x16xf32>
    %c0_123 = arith.constant 0 : index
    %c0_124 = arith.constant 0 : index
    %c2_125 = arith.constant 2 : index
    %c0_126 = arith.constant 0 : index
    %100 = tpu.strided_load %arg6[%c0_123, %c0_124, %c2_125, %c0_126] {strides = array<i32: 1, 1, 2, 1>} : memref<2x18x18x16xf32, #tpu.memory_space<vmem>>, vector<2x18x8x16xf32>
    %101 = arith.maximumf %99, %100 : vector<2x18x8x16xf32>
    %102 = vector.extract_strided_slice %101 {offsets = [0, 0, 0, 0], sizes = [2, 16, 8, 16], strides = [1, 1, 1, 1]} : vector<2x18x8x16xf32> to vector<2x16x8x16xf32>
    %103 = vector.shape_cast %102 : vector<2x16x8x16xf32> to vector<2x8x2x8x16xf32>
    %104 = vector.extract_strided_slice %103 {offsets = [0, 0, 0, 0, 0], sizes = [2, 8, 1, 8, 16], strides = [1, 1, 1, 1, 1]} : vector<2x8x2x8x16xf32> to vector<2x8x1x8x16xf32>
    %105 = vector.shape_cast %104 : vector<2x8x1x8x16xf32> to vector<2x8x8x16xf32>
    %106 = vector.extract_strided_slice %101 {offsets = [0, 1, 0, 0], sizes = [2, 16, 8, 16], strides = [1, 1, 1, 1]} : vector<2x18x8x16xf32> to vector<2x16x8x16xf32>
    %107 = vector.shape_cast %106 : vector<2x16x8x16xf32> to vector<2x8x2x8x16xf32>
    %108 = vector.extract_strided_slice %107 {offsets = [0, 0, 0, 0, 0], sizes = [2, 8, 1, 8, 16], strides = [1, 1, 1, 1, 1]} : vector<2x8x2x8x16xf32> to vector<2x8x1x8x16xf32>
    %109 = vector.shape_cast %108 : vector<2x8x1x8x16xf32> to vector<2x8x8x16xf32>
    %110 = arith.maximumf %105, %109 : vector<2x8x8x16xf32>
    %111 = vector.extract_strided_slice %101 {offsets = [0, 2, 0, 0], sizes = [2, 16, 8, 16], strides = [1, 1, 1, 1]} : vector<2x18x8x16xf32> to vector<2x16x8x16xf32>
    %112 = vector.shape_cast %111 : vector<2x16x8x16xf32> to vector<2x8x2x8x16xf32>
    %113 = vector.extract_strided_slice %112 {offsets = [0, 0, 0, 0, 0], sizes = [2, 8, 1, 8, 16], strides = [1, 1, 1, 1, 1]} : vector<2x8x2x8x16xf32> to vector<2x8x1x8x16xf32>
    %114 = vector.shape_cast %113 : vector<2x8x1x8x16xf32> to vector<2x8x8x16xf32>
    %115 = arith.maximumf %110, %114 : vector<2x8x8x16xf32>
    %116 = vector.shape_cast %115 : vector<2x8x8x16xf32> to vector<128x16xf32>
    %117 = vector.broadcast %78 : vector<1x16xf32> to vector<128x16xf32>
    %118 = arith.subf %116, %117 : vector<128x16xf32>
    %119 = vector.broadcast %88 : vector<1x16xf32> to vector<128x16xf32>
    %120 = arith.mulf %118, %119 : vector<128x16xf32>
    %c0_127 = arith.constant 0 : index
    %c0_128 = arith.constant 0 : index
    %c0_129 = arith.constant 0 : index
    %c0_130 = arith.constant 0 : index
    %121 = tpu.strided_load %arg0[%c0_127, %c0_128, %c0_129, %c0_130] {strides = array<i32: 1, 1, 2, 1>} : memref<2x16x16x8xf32, #tpu.memory_space<vmem>>, vector<2x16x8x8xf32>
    %122 = vector.shape_cast %121 : vector<2x16x8x8xf32> to vector<2x8x2x8x8xf32>
    %123 = vector.extract_strided_slice %122 {offsets = [0, 0, 0, 0, 0], sizes = [2, 8, 1, 8, 8], strides = [1, 1, 1, 1, 1]} : vector<2x8x2x8x8xf32> to vector<2x8x1x8x8xf32>
    %124 = vector.shape_cast %123 : vector<2x8x1x8x8xf32> to vector<2x8x8x8xf32>
    %125 = vector.shape_cast %124 : vector<2x8x8x8xf32> to vector<128x8xf32>
    %c0_131 = arith.constant 0 : index
    %c0_132 = arith.constant 0 : index
    %126 = vector.load %arg3[%c0_131, %c0_132] : memref<8x16xf32, #tpu.memory_space<vmem>>, vector<8x16xf32>
    %cst_133 = arith.constant dense<0.000000e+00> : vector<128x16xf32>
    %127 = tpu.matmul %125, %126, %cst_133 {dimension_numbers = #tpu.dot_dimension_numbers<[1], [0], [0], [1], [0, 0, 1, 1], [], []>} : vector<128x8xf32>, vector<8x16xf32>, vector<128x16xf32> -> vector<128x16xf32>
    %cst_134 = arith.constant dense<0.000000e+00> : vector<16xf32>
    %128 = vector.multi_reduction <add>, %127, %cst_134 [0] : vector<128x16xf32> to vector<16xf32>
    %129 = vector.shape_cast %128 : vector<16xf32> to vector<1x16xf32>
    %cst_135 = arith.constant 7.812500e-03 : f32
    %130 = vector.broadcast %cst_135 : f32 to vector<1x16xf32>
    %131 = arith.mulf %129, %130 : vector<1x16xf32>
    %132 = vector.broadcast %131 : vector<1x16xf32> to vector<128x16xf32>
    %133 = arith.subf %127, %132 : vector<128x16xf32>
    %134 = arith.mulf %133, %133 : vector<128x16xf32>
    %cst_136 = arith.constant dense<0.000000e+00> : vector<16xf32>
    %135 = vector.multi_reduction <add>, %134, %cst_136 [0] : vector<128x16xf32> to vector<16xf32>
    %136 = vector.shape_cast %135 : vector<16xf32> to vector<1x16xf32>
    %cst_137 = arith.constant 7.812500e-03 : f32
    %137 = vector.broadcast %cst_137 : f32 to vector<1x16xf32>
    %138 = arith.mulf %136, %137 : vector<1x16xf32>
    %cst_138 = arith.constant 9.99999974E-6 : f32
    %139 = vector.broadcast %cst_138 : f32 to vector<1x16xf32>
    %140 = arith.addf %138, %139 : vector<1x16xf32>
    %141 = math.rsqrt %140 : vector<1x16xf32>
    %142 = vector.broadcast %141 : vector<1x16xf32> to vector<128x16xf32>
    %143 = arith.mulf %133, %142 : vector<128x16xf32>
    %144 = arith.addf %120, %143 : vector<128x16xf32>
    %145 = tpu.transpose %144, [1, 0] : vector<128x16xf32> -> vector<16x128xf32>
    %c0_139 = arith.constant 0 : index
    %c0_140 = arith.constant 0 : index
    %146 = vector.load %arg4[%c0_139, %c0_140] : memref<16x128xf32, #tpu.memory_space<vmem>>, vector<16x128xf32>
    tpu.vector_store %arg4[%c0_139, %c0_140], %145 {strides = array<i32>} : memref<16x128xf32, #tpu.memory_space<vmem>>, vector<16x128xf32>,
    return
  }
}

</mosaic_0001>

<llo_original>
// kernel: downsampling_block.1
$region0: #{downsampling_block.1}
  #allocation0 [shape = 'u32[]', space=smem, size = 0x4, offset = 0x4, fixed_abs, tag = 'smem constant byte address 0x4 - core index']
  #allocation1 [shape = 'u32[144,128]{1,0:T(1,128)}', space=vmem, size = 0x12000, scoped, tag = 'internal scratch']
  #allocation2 [shape = 'f32[2,18,18,8]{3,2,1,0:T(8,128)}', space=vmem, size = 0x6c000, scoped, tag = 'scratch operand']
  #allocation3 [shape = 'f32[2,18,18,16]{3,2,1,0:T(8,128)}', space=vmem, size = 0x6c000, scoped, tag = 'scratch operand']
  %s0 = inlined_call_operand.vmem [shape: f32[2,16,16,8], index: 0, kind: input, shape index: {}]
  %s1 = inlined_call_operand.vmem [shape: f32[3,3,8], index: 1, kind: input, shape index: {}]
  %s2 = inlined_call_operand.vmem [shape: f32[8,16], index: 2, kind: input, shape index: {}]
  %s3 = inlined_call_operand.vmem [shape: f32[8,16], index: 3, kind: input, shape index: {}]
  %s4 = inlined_call_operand.vmem [shape: f32[16,128], index: 4, kind: output, shape index: {}]
  %s5 = sld [smem:[#allocation0]]
  $region26: #{downsampling_block.1} parent=0
    _
  %s7 = ssub.s32 1, %s5
  %s8 = scalar_select 0, %s7, %s5
  // Predicated region
  $region2: #{downsampling_block.1} parent=0 // pred_check
    _
  $region3: #{downsampling_block.1} parent=0 // pred_check_branch
    %10 = sbr.rel (0) target = $region5
  $region4: #{downsampling_block.1} parent=0 // pred_region
    _
  $region5: #{downsampling_block.1} parent=0 // pred_fallthru
    _
  // Predicated region
  $region6: #{downsampling_block.1} parent=0 // pred_check
    _
  $region7: #{downsampling_block.1} parent=0 // pred_check_branch
    %12 = sbr.rel (0) target = $region9
  $region8: #{downsampling_block.1} parent=0 // pred_region
    _
  $region9: #{downsampling_block.1} parent=0 // pred_fallthru
    _
  // Predicated region
  $region10: #{downsampling_block.1} parent=0 // pred_check
    _
  $region11: #{downsampling_block.1} parent=0 // pred_check_branch
    %14 = sbr.rel (0) target = $region13
  $region12: #{downsampling_block.1} parent=0 // pred_region
    _
  $region13: #{downsampling_block.1} parent=0 // pred_fallthru
    _
  // Predicated region
  $region14: #{downsampling_block.1} parent=0 // pred_check
    _
  $region15: #{downsampling_block.1} parent=0 // pred_check_branch
    %16 = sbr.rel (0) target = $region17
  $region16: #{downsampling_block.1} parent=0 // pred_region
    _
  $region17: #{downsampling_block.1} parent=0 // pred_fallthru
    _
  %vm17 = vcmask 64512
  %18 = vst.msk [vmem:[#allocation2] sm:$0xff] %vm17, 0.0
  %19 = vst.msk [vmem:[#allocation2 + $0x8] sm:$0xff] %vm17, 0.0
  %vm20 = vcmask 58368
  %21 = vst.msk [vmem:[#allocation2 + $0x10] sm:$0x3] %vm20, 0.0
  %22 = vst.msk [vmem:[#allocation2 + $0x1b0] sm:$0xff] %vm17, 0.0
  %23 = vst.msk [vmem:[#allocation2 + $0x1b8] sm:$0xff] %vm17, 0.0
  %24 = vst.msk [vmem:[#allocation2 + $0x1c0] sm:$0x3] %vm20, 0.0
  %s25 = scalar_lea.vmem [#allocation2], 408
  %26 = vst.msk [vmem:[%s25] sm:$0xff] %vm17, 0.0
  %27 = vst.msk [vmem:[%s25 + $0x8] sm:$0xff] %vm17, 0.0
  %28 = vst.msk [vmem:[%s25 + $0x10] sm:$0x3] %vm20, 0.0
  %29 = vst.msk [vmem:[%s25 + $0x1b0] sm:$0xff] %vm17, 0.0
  %30 = vst.msk [vmem:[%s25 + $0x1b8] sm:$0xff] %vm17, 0.0
  %31 = vst.msk [vmem:[%s25 + $0x1c0] sm:$0x3] %vm20, 0.0
  %s32 = scalar_lea.vmem [#allocation2], 24
  %vm33 = vcmask 57344
  %34 = vst.msk [vmem:[%s32] sm:$0x1] %vm33, 0.0
  %35 = vst.msk [vmem:[%s32 + $0x18] sm:$0x1] %vm33, 0.0
  %36 = vst.msk [vmem:[%s32 + $0x30] sm:$0x1] %vm33, 0.0
  %37 = vst.msk [vmem:[%s32 + $0x48] sm:$0x1] %vm33, 0.0
  %38 = vst.msk [vmem:[%s32 + $0x60] sm:$0x1] %vm33, 0.0
  %39 = vst.msk [vmem:[%s32 + $0x78] sm:$0x1] %vm33, 0.0
  %40 = vst.msk [vmem:[%s32 + $0x90] sm:$0x1] %vm33, 0.0
  %41 = vst.msk [vmem:[%s32 + $0xa8] sm:$0x1] %vm33, 0.0
  %42 = vst.msk [vmem:[%s32 + $0xc0] sm:$0x1] %vm33, 0.0
  %43 = vst.msk [vmem:[%s32 + $0xd8] sm:$0x1] %vm33, 0.0
  %44 = vst.msk [vmem:[%s32 + $0xf0] sm:$0x1] %vm33, 0.0
  %45 = vst.msk [vmem:[%s32 + $0x108] sm:$0x1] %vm33, 0.0
  %46 = vst.msk [vmem:[%s32 + $0x120] sm:$0x1] %vm33, 0.0
  %47 = vst.msk [vmem:[%s32 + $0x138] sm:$0x1] %vm33, 0.0
  %48 = vst.msk [vmem:[%s32 + $0x150] sm:$0x1] %vm33, 0.0
  %49 = vst.msk [vmem:[%s32 + $0x168] sm:$0x1] %vm33, 0.0
  %50 = vst.msk [vmem:[%s32 + $0x1b0] sm:$0x1] %vm33, 0.0
  %51 = vst.msk [vmem:[%s32 + $0x1c8] sm:$0x1] %vm33, 0.0
  %52 = vst.msk [vmem:[%s32 + $0x1e0] sm:$0x1] %vm33, 0.0
  %53 = vst.msk [vmem:[%s32 + $0x1f8] sm:$0x1] %vm33, 0.0
  %54 = vst.msk [vmem:[%s32 + $0x210] sm:$0x1] %vm33, 0.0
  %55 = vst.msk [vmem:[%s32 + $0x228] sm:$0x1] %vm33, 0.0
  %56 = vst.msk [vmem:[%s32 + $0x240] sm:$0x1] %vm33, 0.0
  %57 = vst.msk [vmem:[%s32 + $0x258] sm:$0x1] %vm33, 0.0
  %58 = vst.msk [vmem:[%s32 + $0x270] sm:$0x1] %vm33, 0.0
  %59 = vst.msk [vmem:[%s32 + $0x288] sm:$0x1] %vm33, 0.0
  %60 = vst.msk [vmem:[%s32 + $0x2a0] sm:$0x1] %vm33, 0.0
  %61 = vst.msk [vmem:[%s32 + $0x2b8] sm:$0x1] %vm33, 0.0
  %62 = vst.msk [vmem:[%s32 + $0x2d0] sm:$0x1] %vm33, 0.0
  %63 = vst.msk [vmem:[%s32 + $0x2e8] sm:$0x1] %vm33, 0.0
  %64 = vst.msk [vmem:[%s32 + $0x300] sm:$0x1] %vm33, 0.0
  %65 = vst.msk [vmem:[%s32 + $0x318] sm:$0x1] %vm33, 0.0
  %66 = vst.msk [vmem:[%s32 + $0x11] sm:$0x1] %vm33, 0.0
  %67 = vst.msk [vmem:[%s32 + $0x29] sm:$0x1] %vm33, 0.0
  %68 = vst.msk [vmem:[%s32 + $0x41] sm:$0x1] %vm33, 0.0
  %69 = vst.msk [vmem:[%s32 + $0x59] sm:$0x1] %vm33, 0.0
  %70 = vst.msk [vmem:[%s32 + $0x71] sm:$0x1] %vm33, 0.0
  %71 = vst.msk [vmem:[%s32 + $0x89] sm:$0x1] %vm33, 0.0
  %72 = vst.msk [vmem:[%s32 + $0xa1] sm:$0x1] %vm33, 0.0
  %73 = vst.msk [vmem:[%s32 + $0xb9] sm:$0x1] %vm33, 0.0
  %74 = vst.msk [vmem:[%s32 + $0xd1] sm:$0x1] %vm33, 0.0
  %75 = vst.msk [vmem:[%s32 + $0xe9] sm:$0x1] %vm33, 0.0
  %76 = vst.msk [vmem:[%s32 + $0x101] sm:$0x1] %vm33, 0.0
  %77 = vst.msk [vmem:[%s32 + $0x119] sm:$0x1] %vm33, 0.0
  %78 = vst.msk [vmem:[%s32 + $0x131] sm:$0x1] %vm33, 0.0
  %79 = vst.msk [vmem:[%s32 + $0x149] sm:$0x1] %vm33, 0.0
  %80 = vst.msk [vmem:[%s32 + $0x161] sm:$0x1] %vm33, 0.0
  %81 = vst.msk [vmem:[%s32 + $0x179] sm:$0x1] %vm33, 0.0
  %82 = vst.msk [vmem:[%s32 + $0x1c1] sm:$0x1] %vm33, 0.0
  %83 = vst.msk [vmem:[%s32 + $0x1d9] sm:$0x1] %vm33, 0.0
  %84 = vst.msk [vmem:[%s32 + $0x1f1] sm:$0x1] %vm33, 0.0
  %85 = vst.msk [vmem:[%s32 + $0x209] sm:$0x1] %vm33, 0.0
  %86 = vst.msk [vmem:[%s32 + $0x221] sm:$0x1] %vm33, 0.0
  %87 = vst.msk [vmem:[%s32 + $0x239] sm:$0x1] %vm33, 0.0
  %88 = vst.msk [vmem:[%s32 + $0x251] sm:$0x1] %vm33, 0.0
  %89 = vst.msk [vmem:[%s32 + $0x269] sm:$0x1] %vm33, 0.0
  %90 = vst.msk [vmem:[%s32 + $0x281] sm:$0x1] %vm33, 0.0
  %91 = vst.msk [vmem:[%s32 + $0x299] sm:$0x1] %vm33, 0.0
  %92 = vst.msk [vmem:[%s32 + $0x2b1] sm:$0x1] %vm33, 0.0
  %93 = vst.msk [vmem:[%s32 + $0x2c9] sm:$0x1] %vm33, 0.0
  %94 = vst.msk [vmem:[%s32 + $0x2e1] sm:$0x1] %vm33, 0.0
  %95 = vst.msk [vmem:[%s32 + $0x2f9] sm:$0x1] %vm33, 0.0
  %96 = vst.msk [vmem:[%s32 + $0x311] sm:$0x1] %vm33, 0.0
  %97 = vst.msk [vmem:[%s32 + $0x329] sm:$0x1] %vm33, 0.0
  %v98 = vld [vmem:[%s0] sm:$0xff]
  %v99 = vld [vmem:[%s0 + $0x8] sm:$0xff]
  %v100 = vld [vmem:[%s0 + $0x10] sm:$0xff]
  %v101 = vld [vmem:[%s0 + $0x18] sm:$0xff]
  %v102 = vld [vmem:[%s0 + $0x20] sm:$0xff]
  %v103 = vld [vmem:[%s0 + $0x28] sm:$0xff]
  %v104 = vld [vmem:[%s0 + $0x30] sm:$0xff]
  %v105 = vld [vmem:[%s0 + $0x38] sm:$0xff]
  %v106 = vld [vmem:[%s0 + $0x40] sm:$0xff]
  %v107 = vld [vmem:[%s0 + $0x48] sm:$0xff]
  %v108 = vld [vmem:[%s0 + $0x50] sm:$0xff]
  %v109 = vld [vmem:[%s0 + $0x58] sm:$0xff]
  %v110 = vld [vmem:[%s0 + $0x60] sm:$0xff]
  %v111 = vld [vmem:[%s0 + $0x68] sm:$0xff]
  %v112 = vld [vmem:[%s0 + $0x70] sm:$0xff]
  %v113 = vld [vmem:[%s0 + $0x78] sm:$0xff]
  %v114 = vld [vmem:[%s0 + $0x80] sm:$0xff]
  %v115 = vld [vmem:[%s0 + $0x88] sm:$0xff]
  %v116 = vld [vmem:[%s0 + $0x90] sm:$0xff]
  %v117 = vld [vmem:[%s0 + $0x98] sm:$0xff]
  %v118 = vld [vmem:[%s0 + $0xa0] sm:$0xff]
  %v119 = vld [vmem:[%s0 + $0xa8] sm:$0xff]
  %v120 = vld [vmem:[%s0 + $0xb0] sm:$0xff]
  %v121 = vld [vmem:[%s0 + $0xb8] sm:$0xff]
  %v122 = vld [vmem:[%s0 + $0xc0] sm:$0xff]
  %v123 = vld [vmem:[%s0 + $0xc8] sm:$0xff]
  %v124 = vld [vmem:[%s0 + $0xd0] sm:$0xff]
  %v125 = vld [vmem:[%s0 + $0xd8] sm:$0xff]
  %v126 = vld [vmem:[%s0 + $0xe0] sm:$0xff]
  %v127 = vld [vmem:[%s0 + $0xe8] sm:$0xff]
  %v128 = vld [vmem:[%s0 + $0xf0] sm:$0xff]
  %v129 = vld [vmem:[%s0 + $0xf8] sm:$0xff]
  %v130 = vld [vmem:[%s0 + $0x100] sm:$0xff]
  %v131 = vld [vmem:[%s0 + $0x108] sm:$0xff]
  %v132 = vld [vmem:[%s0 + $0x110] sm:$0xff]
  %v133 = vld [vmem:[%s0 + $0x118] sm:$0xff]
  %v134 = vld [vmem:[%s0 + $0x120] sm:$0xff]
  %v135 = vld [vmem:[%s0 + $0x128] sm:$0xff]
  %v136 = vld [vmem:[%s0 + $0x130] sm:$0xff]
  %v137 = vld [vmem:[%s0 + $0x138] sm:$0xff]
  %v138 = vld [vmem:[%s0 + $0x140] sm:$0xff]
  %v139 = vld [vmem:[%s0 + $0x148] sm:$0xff]
  %v140 = vld [vmem:[%s0 + $0x150] sm:$0xff]
  %v141 = vld [vmem:[%s0 + $0x158] sm:$0xff]
  %v142 = vld [vmem:[%s0 + $0x160] sm:$0xff]
  %v143 = vld [vmem:[%s0 + $0x168] sm:$0xff]
  %v144 = vld [vmem:[%s0 + $0x170] sm:$0xff]
  %v145 = vld [vmem:[%s0 + $0x178] sm:$0xff]
  %v146 = vld [vmem:[%s0 + $0x180] sm:$0xff]
  %v147 = vld [vmem:[%s0 + $0x188] sm:$0xff]
  %v148 = vld [vmem:[%s0 + $0x190] sm:$0xff]
  %v149 = vld [vmem:[%s0 + $0x198] sm:$0xff]
  %v150 = vld [vmem:[%s0 + $0x1a0] sm:$0xff]
  %v151 = vld [vmem:[%s0 + $0x1a8] sm:$0xff]
  %v152 = vld [vmem:[%s0 + $0x1b0] sm:$0xff]
  %v153 = vld [vmem:[%s0 + $0x1b8] sm:$0xff]
  %v154 = vld [vmem:[%s0 + $0x1c0] sm:$0xff]
  %v155 = vld [vmem:[%s0 + $0x1c8] sm:$0xff]
  %v156 = vld [vmem:[%s0 + $0x1d0] sm:$0xff]
  %v157 = vld [vmem:[%s0 + $0x1d8] sm:$0xff]
  %v158 = vld [vmem:[%s0 + $0x1e0] sm:$0xff]
  %v159 = vld [vmem:[%s0 + $0x1e8] sm:$0xff]
  %v160 = vld [vmem:[%s0 + $0x1f0] sm:$0xff]
  %v161 = vld [vmem:[%s0 + $0x1f8] sm:$0xff]
  %162 = vst.msk [vmem:[%s32 + $0x1] sm:$0xff] %vm17, %v98
  %163 = vst.msk [vmem:[%s32 + $0x9] sm:$0xff] %vm17, %v99
  %164 = vst.msk [vmem:[%s32 + $0x19] sm:$0xff] %vm17, %v100
  %165 = vst.msk [vmem:[%s32 + $0x21] sm:$0xff] %vm17, %v101
  %166 = vst.msk [vmem:[%s32 + $0x31] sm:$0xff] %vm17, %v102
  %167 = vst.msk [vmem:[%s32 + $0x39] sm:$0xff] %vm17, %v103
  %168 = vst.msk [vmem:[%s32 + $0x49] sm:$0xff] %vm17, %v104
  %169 = vst.msk [vmem:[%s32 + $0x51] sm:$0xff] %vm17, %v105
  %170 = vst.msk [vmem:[%s32 + $0x61] sm:$0xff] %vm17, %v106
  %171 = vst.msk [vmem:[%s32 + $0x69] sm:$0xff] %vm17, %v107
  %172 = vst.msk [vmem:[%s32 + $0x79] sm:$0xff] %vm17, %v108
  %173 = vst.msk [vmem:[%s32 + $0x81] sm:$0xff] %vm17, %v109
  %174 = vst.msk [vmem:[%s32 + $0x91] sm:$0xff] %vm17, %v110
  %175 = vst.msk [vmem:[%s32 + $0x99] sm:$0xff] %vm17, %v111
  %176 = vst.msk [vmem:[%s32 + $0xa9] sm:$0xff] %vm17, %v112
  %177 = vst.msk [vmem:[%s32 + $0xb1] sm:$0xff] %vm17, %v113
  %178 = vst.msk [vmem:[%s32 + $0xc1] sm:$0xff] %vm17, %v114
  %179 = vst.msk [vmem:[%s32 + $0xc9] sm:$0xff] %vm17, %v115
  %180 = vst.msk [vmem:[%s32 + $0xd9] sm:$0xff] %vm17, %v116
  %181 = vst.msk [vmem:[%s32 + $0xe1] sm:$0xff] %vm17, %v117
  %182 = vst.msk [vmem:[%s32 + $0xf1] sm:$0xff] %vm17, %v118
  %183 = vst.msk [vmem:[%s32 + $0xf9] sm:$0xff] %vm17, %v119
  %184 = vst.msk [vmem:[%s32 + $0x109] sm:$0xff] %vm17, %v120
  %185 = vst.msk [vmem:[%s32 + $0x111] sm:$0xff] %vm17, %v121
  %186 = vst.msk [vmem:[%s32 + $0x121] sm:$0xff] %vm17, %v122
  %187 = vst.msk [vmem:[%s32 + $0x129] sm:$0xff] %vm17, %v123
  %188 = vst.msk [vmem:[%s32 + $0x139] sm:$0xff] %vm17, %v124
  %189 = vst.msk [vmem:[%s32 + $0x141] sm:$0xff] %vm17, %v125
  %190 = vst.msk [vmem:[%s32 + $0x151] sm:$0xff] %vm17, %v126
  %191 = vst.msk [vmem:[%s32 + $0x159] sm:$0xff] %vm17, %v127
  %192 = vst.msk [vmem:[%s32 + $0x169] sm:$0xff] %vm17, %v128
  %193 = vst.msk [vmem:[%s32 + $0x171] sm:$0xff] %vm17, %v129
  %194 = vst.msk [vmem:[%s32 + $0x1b1] sm:$0xff] %vm17, %v130
  %195 = vst.msk [vmem:[%s32 + $0x1b9] sm:$0xff] %vm17, %v131
  %196 = vst.msk [vmem:[%s32 + $0x1c9] sm:$0xff] %vm17, %v132
  %197 = vst.msk [vmem:[%s32 + $0x1d1] sm:$0xff] %vm17, %v133
  %198 = vst.msk [vmem:[%s32 + $0x1e1] sm:$0xff] %vm17, %v134
  %199 = vst.msk [vmem:[%s32 + $0x1e9] sm:$0xff] %vm17, %v135
  %200 = vst.msk [vmem:[%s32 + $0x1f9] sm:$0xff] %vm17, %v136
  %201 = vst.msk [vmem:[%s32 + $0x201] sm:$0xff] %vm17, %v137
  %202 = vst.msk [vmem:[%s32 + $0x211] sm:$0xff] %vm17, %v138
  %203 = vst.msk [vmem:[%s32 + $0x219] sm:$0xff] %vm17, %v139
  %204 = vst.msk [vmem:[%s32 + $0x229] sm:$0xff] %vm17, %v140
  %205 = vst.msk [vmem:[%s32 + $0x231] sm:$0xff] %vm17, %v141
  %206 = vst.msk [vmem:[%s32 + $0x241] sm:$0xff] %vm17, %v142
  %207 = vst.msk [vmem:[%s32 + $0x249] sm:$0xff] %vm17, %v143
  %208 = vst.msk [vmem:[%s32 + $0x259] sm:$0xff] %vm17, %v144
  %209 = vst.msk [vmem:[%s32 + $0x261] sm:$0xff] %vm17, %v145
  %210 = vst.msk [vmem:[%s32 + $0x271] sm:$0xff] %vm17, %v146
  %211 = vst.msk [vmem:[%s32 + $0x279] sm:$0xff] %vm17, %v147
  %212 = vst.msk [vmem:[%s32 + $0x289] sm:$0xff] %vm17, %v148
  %213 = vst.msk [vmem:[%s32 + $0x291] sm:$0xff] %vm17, %v149
  %214 = vst.msk [vmem:[%s32 + $0x2a1] sm:$0xff] %vm17, %v150
  %215 = vst.msk [vmem:[%s32 + $0x2a9] sm:$0xff] %vm17, %v151
  %216 = vst.msk [vmem:[%s32 + $0x2b9] sm:$0xff] %vm17, %v152
  %217 = vst.msk [vmem:[%s32 + $0x2c1] sm:$0xff] %vm17, %v153
  %218 = vst.msk [vmem:[%s32 + $0x2d1] sm:$0xff] %vm17, %v154
  %219 = vst.msk [vmem:[%s32 + $0x2d9] sm:$0xff] %vm17, %v155
  %220 = vst.msk [vmem:[%s32 + $0x2e9] sm:$0xff] %vm17, %v156
  %221 = vst.msk [vmem:[%s32 + $0x2f1] sm:$0xff] %vm17, %v157
  %222 = vst.msk [vmem:[%s32 + $0x301] sm:$0xff] %vm17, %v158
  %223 = vst.msk [vmem:[%s32 + $0x309] sm:$0xff] %vm17, %v159
  %224 = vst.msk [vmem:[%s32 + $0x319] sm:$0xff] %vm17, %v160
  %225 = vst.msk [vmem:[%s32 + $0x321] sm:$0xff] %vm17, %v161
  %v226 = vld [vmem:[#allocation2] sm:$0xff]
  %v227 = vld [vmem:[#allocation2 + $0x8] sm:$0xff]
  %v228 = vld [vmem:[#allocation2 + $0x18] sm:$0xff]
  %v229 = vld [vmem:[#allocation2 + $0x20] sm:$0xff]
  %v230 = vld [vmem:[#allocation2 + $0x30] sm:$0xff]
  %v231 = vld [vmem:[#allocation2 + $0x38] sm:$0xff]
  %v232 = vld [vmem:[#allocation2 + $0x48] sm:$0xff]
  %v233 = vld [vmem:[#allocation2 + $0x50] sm:$0xff]
  %v234 = vld [vmem:[#allocation2 + $0x60] sm:$0xff]
  %v235 = vld [vmem:[#allocation2 + $0x68] sm:$0xff]
  %v236 = vld [vmem:[#allocation2 + $0x78] sm:$0xff]
  %v237 = vld [vmem:[#allocation2 + $0x80] sm:$0xff]
  %v238 = vld [vmem:[#allocation2 + $0x90] sm:$0xff]
  %v239 = vld [vmem:[#allocation2 + $0x98] sm:$0xff]
  %v240 = vld [vmem:[#allocation2 + $0xa8] sm:$0xff]
  %v241 = vld [vmem:[#allocation2 + $0xb0] sm:$0xff]
  %v242 = vld [vmem:[#allocation2 + $0xc0] sm:$0xff]
  %v243 = vld [vmem:[#allocation2 + $0xc8] sm:$0xff]
  %v244 = vld [vmem:[#allocation2 + $0xd8] sm:$0xff]
  %v245 = vld [vmem:[#allocation2 + $0xe0] sm:$0xff]
  %v246 = vld [vmem:[#allocation2 + $0xf0] sm:$0xff]
  %v247 = vld [vmem:[#allocation2 + $0xf8] sm:$0xff]
  %v248 = vld [vmem:[#allocation2 + $0x108] sm:$0xff]
  %v249 = vld [vmem:[#allocation2 + $0x110] sm:$0xff]
  %v250 = vld [vmem:[#allocation2 + $0x120] sm:$0xff]
  %v251 = vld [vmem:[#allocation2 + $0x128] sm:$0xff]
  %v252 = vld [vmem:[#allocation2 + $0x138] sm:$0xff]
  %v253 = vld [vmem:[#allocation2 + $0x140] sm:$0xff]
  %v254 = vld [vmem:[#allocation2 + $0x150] sm:$0xff]
  %v255 = vld [vmem:[#allocation2 + $0x158] sm:$0xff]
  %v256 = vld [vmem:[#allocation2 + $0x168] sm:$0xff]
  %v257 = vld [vmem:[#allocation2 + $0x170] sm:$0xff]
  %v258 = vld [vmem:[#allocation2 + $0x1b0] sm:$0xff]
  %v259 = vld [vmem:[#allocation2 + $0x1b8] sm:$0xff]
  %v260 = vld [vmem:[#allocation2 + $0x1c8] sm:$0xff]
  %v261 = vld [vmem:[#allocation2 + $0x1d0] sm:$0xff]
  %v262 = vld [vmem:[#allocation2 + $0x1e0] sm:$0xff]
  %v263 = vld [vmem:[#allocation2 + $0x1e8] sm:$0xff]
  %v264 = vld [vmem:[#allocation2 + $0x1f8] sm:$0xff]
  %v265 = vld [vmem:[#allocation2 + $0x200] sm:$0xff]
  %v266 = vld [vmem:[#allocation2 + $0x210] sm:$0xff]
  %v267 = vld [vmem:[#allocation2 + $0x218] sm:$0xff]
  %v268 = vld [vmem:[#allocation2 + $0x228] sm:$0xff]
  %v269 = vld [vmem:[#allocation2 + $0x230] sm:$0xff]
  %v270 = vld [vmem:[#allocation2 + $0x240] sm:$0xff]
  %v271 = vld [vmem:[#allocation2 + $0x248] sm:$0xff]
  %v272 = vld [vmem:[#allocation2 + $0x258] sm:$0xff]
  %v273 = vld [vmem:[#allocation2 + $0x260] sm:$0xff]
  %v274 = vld [vmem:[#allocation2 + $0x270] sm:$0xff]
  %v275 = vld [vmem:[#allocation2 + $0x278] sm:$0xff]
  %v276 = vld [vmem:[#allocation2 + $0x288] sm:$0xff]
  %v277 = vld [vmem:[#allocation2 + $0x290] sm:$0xff]
  %v278 = vld [vmem:[#allocation2 + $0x2a0] sm:$0xff]
  %v279 = vld [vmem:[#allocation2 + $0x2a8] sm:$0xff]
  %v280 = vld [vmem:[#allocation2 + $0x2b8] sm:$0xff]
  %v281 = vld [vmem:[#allocation2 + $0x2c0] sm:$0xff]
  %v282 = vld [vmem:[#allocation2 + $0x2d0] sm:$0xff]
  %v283 = vld [vmem:[#allocation2 + $0x2d8] sm:$0xff]
  %v284 = vld [vmem:[#allocation2 + $0x2e8] sm:$0xff]
  %v285 = vld [vmem:[#allocation2 + $0x2f0] sm:$0xff]
  %v286 = vld [vmem:[#allocation2 + $0x300] sm:$0xff]
  %v287 = vld [vmem:[#allocation2 + $0x308] sm:$0xff]
  %v288 = vld [vmem:[#allocation2 + $0x318] sm:$0xff]
  %v289 = vld [vmem:[#allocation2 + $0x320] sm:$0xff]
  %v290 = vld [vmem:[%s1] sm:$0x1]
  %v291 = vlaneseq
  %v292 = vshrl.u32 %v291, 7
  %v293 = vsub.s32 0, %v292
  %v294 = vrot.slane %v290, %v293
  %v295 = vmul.f32 %v226, %v294
  %v296 = vmul.f32 %v227, %v294
  %v297 = vmul.f32 %v228, %v294
  %v298 = vmul.f32 %v229, %v294
  %v299 = vmul.f32 %v230, %v294
  %v300 = vmul.f32 %v231, %v294
  %v301 = vmul.f32 %v232, %v294
  %v302 = vmul.f32 %v233, %v294
  %v303 = vmul.f32 %v234, %v294
  %v304 = vmul.f32 %v235, %v294
  %v305 = vmul.f32 %v236, %v294
  %v306 = vmul.f32 %v237, %v294
  %v307 = vmul.f32 %v238, %v294
  %v308 = vmul.f32 %v239, %v294
  %v309 = vmul.f32 %v240, %v294
  %v310 = vmul.f32 %v241, %v294
  %v311 = vmul.f32 %v242, %v294
  %v312 = vmul.f32 %v243, %v294
  %v313 = vmul.f32 %v244, %v294
  %v314 = vmul.f32 %v245, %v294
  %v315 = vmul.f32 %v246, %v294
  %v316 = vmul.f32 %v247, %v294
  %v317 = vmul.f32 %v248, %v294
  %v318 = vmul.f32 %v249, %v294
  %v319 = vmul.f32 %v250, %v294
  %v320 = vmul.f32 %v251, %v294
  %v321 = vmul.f32 %v252, %v294
  %v322 = vmul.f32 %v253, %v294
  %v323 = vmul.f32 %v254, %v294
  %v324 = vmul.f32 %v255, %v294
  %v325 = vmul.f32 %v256, %v294
  %v326 = vmul.f32 %v257, %v294
  %v327 = vmul.f32 %v258, %v294
  %v328 = vmul.f32 %v259, %v294
  %v329 = vmul.f32 %v260, %v294
  %v330 = vmul.f32 %v261, %v294
  %v331 = vmul.f32 %v262, %v294
  %v332 = vmul.f32 %v263, %v294
  %v333 = vmul.f32 %v264, %v294
  %v334 = vmul.f32 %v265, %v294
  %v335 = vmul.f32 %v266, %v294
  %v336 = vmul.f32 %v267, %v294
  %v337 = vmul.f32 %v268, %v294
  %v338 = vmul.f32 %v269, %v294
  %v339 = vmul.f32 %v270, %v294
  %v340 = vmul.f32 %v271, %v294
  %v341 = vmul.f32 %v272, %v294
  %v342 = vmul.f32 %v273, %v294
  %v343 = vmul.f32 %v274, %v294
  %v344 = vmul.f32 %v275, %v294
  %v345 = vmul.f32 %v276, %v294
  %v346 = vmul.f32 %v277, %v294
  %v347 = vmul.f32 %v278, %v294
  %v348 = vmul.f32 %v279, %v294
  %v349 = vmul.f32 %v280, %v294
  %v350 = vmul.f32 %v281, %v294
  %v351 = vmul.f32 %v282, %v294
  %v352 = vmul.f32 %v283, %v294
  %v353 = vmul.f32 %v284, %v294
  %v354 = vmul.f32 %v285, %v294
  %v355 = vmul.f32 %v286, %v294
  %v356 = vmul.f32 %v287, %v294
  %v357 = vmul.f32 %v288, %v294
  %v358 = vmul.f32 %v289, %v294
  %v359 = vld [vmem:[#allocation2 + $0x1] sm:$0xff]
  %v360 = vld [vmem:[#allocation2 + $0x9] sm:$0xff]
  %v361 = vld [vmem:[#allocation2 + $0x19] sm:$0xff]
  %v362 = vld [vmem:[#allocation2 + $0x21] sm:$0xff]
  %v363 = vld [vmem:[#allocation2 + $0x31] sm:$0xff]
  %v364 = vld [vmem:[#allocation2 + $0x39] sm:$0xff]
  %v365 = vld [vmem:[#allocation2 + $0x49] sm:$0xff]
  %v366 = vld [vmem:[#allocation2 + $0x51] sm:$0xff]
  %v367 = vld [vmem:[#allocation2 + $0x61] sm:$0xff]
  %v368 = vld [vmem:[#allocation2 + $0x69] sm:$0xff]
  %v369 = vld [vmem:[#allocation2 + $0x79] sm:$0xff]
  %v370 = vld [vmem:[#allocation2 + $0x81] sm:$0xff]
  %v371 = vld [vmem:[#allocation2 + $0x91] sm:$0xff]
  %v372 = vld [vmem:[#allocation2 + $0x99] sm:$0xff]
  %v373 = vld [vmem:[#allocation2 + $0xa9] sm:$0xff]
  %v374 = vld [vmem:[#allocation2 + $0xb1] sm:$0xff]
  %v375 = vld [vmem:[#allocation2 + $0xc1] sm:$0xff]
  %v376 = vld [vmem:[#allocation2 + $0xc9] sm:$0xff]
  %v377 = vld [vmem:[#allocation2 + $0xd9] sm:$0xff]
  %v378 = vld [vmem:[#allocation2 + $0xe1] sm:$0xff]
  %v379 = vld [vmem:[#allocation2 + $0xf1] sm:$0xff]
  %v380 = vld [vmem:[#allocation2 + $0xf9] sm:$0xff]
  %v381 = vld [vmem:[#allocation2 + $0x109] sm:$0xff]
  %v382 = vld [vmem:[#allocation2 + $0x111] sm:$0xff]
  %v383 = vld [vmem:[#allocation2 + $0x121] sm:$0xff]
  %v384 = vld [vmem:[#allocation2 + $0x129] sm:$0xff]
  %v385 = vld [vmem:[#allocation2 + $0x139] sm:$0xff]
  %v386 = vld [vmem:[#allocation2 + $0x141] sm:$0xff]
  %v387 = vld [vmem:[#allocation2 + $0x151] sm:$0xff]
  %v388 = vld [vmem:[#allocation2 + $0x159] sm:$0xff]
  %v389 = vld [vmem:[#allocation2 + $0x169] sm:$0xff]
  %v390 = vld [vmem:[#allocation2 + $0x171] sm:$0xff]
  %v391 = vld [vmem:[#allocation2 + $0x1b1] sm:$0xff]
  %v392 = vld [vmem:[#allocation2 + $0x1b9] sm:$0xff]
  %v393 = vld [vmem:[#allocation2 + $0x1c9] sm:$0xff]
  %v394 = vld [vmem:[#allocation2 + $0x1d1] sm:$0xff]
  %v395 = vld [vmem:[#allocation2 + $0x1e1] sm:$0xff]
  %v396 = vld [vmem:[#allocation2 + $0x1e9] sm:$0xff]
  %v397 = vld [vmem:[#allocation2 + $0x1f9] sm:$0xff]
  %v398 = vld [vmem:[#allocation2 + $0x201] sm:$0xff]
  %v399 = vld [vmem:[#allocation2 + $0x211] sm:$0xff]
  %v400 = vld [vmem:[#allocation2 + $0x219] sm:$0xff]
  %v401 = vld [vmem:[#allocation2 + $0x229] sm:$0xff]
  %v402 = vld [vmem:[#allocation2 + $0x231] sm:$0xff]
  %v403 = vld [vmem:[#allocation2 + $0x241] sm:$0xff]
  %v404 = vld [vmem:[#allocation2 + $0x249] sm:$0xff]
  %v405 = vld [vmem:[#allocation2 + $0x259] sm:$0xff]
  %v406 = vld [vmem:[#allocation2 + $0x261] sm:$0xff]
  %v407 = vld [vmem:[#allocation2 + $0x271] sm:$0xff]
  %v408 = vld [vmem:[#allocation2 + $0x279] sm:$0xff]
  %v409 = vld [vmem:[#allocation2 + $0x289] sm:$0xff]
  %v410 = vld [vmem:[#allocation2 + $0x291] sm:$0xff]
  %v411 = vld [vmem:[#allocation2 + $0x2a1] sm:$0xff]
  %v412 = vld [vmem:[#allocation2 + $0x2a9] sm:$0xff]
  %v413 = vld [vmem:[#allocation2 + $0x2b9] sm:$0xff]
  %v414 = vld [vmem:[#allocation2 + $0x2c1] sm:$0xff]
  %v415 = vld [vmem:[#allocation2 + $0x2d1] sm:$0xff]
  %v416 = vld [vmem:[#allocation2 + $0x2d9] sm:$0xff]
  %v417 = vld [vmem:[#allocation2 + $0x2e9] sm:$0xff]
  %v418 = vld [vmem:[#allocation2 + $0x2f1] sm:$0xff]
  %v419 = vld [vmem:[#allocation2 + $0x301] sm:$0xff]
  %v420 = vld [vmem:[#allocation2 + $0x309] sm:$0xff]
  %v421 = vld [vmem:[#allocation2 + $0x319] sm:$0xff]
  %v422 = vld [vmem:[#allocation2 + $0x321] sm:$0xff]
  %v423 = vld [vmem:[%s1 + $0x1] sm:$0x1]
  %v424 = vlaneseq
  %v425 = vshrl.u32 %v424, 7
  %v426 = vsub.s32 0, %v425
  %v427 = vrot.slane %v423, %v426
  %v428 = vmul.f32 %v359, %v427
  %v429 = vmul.f32 %v360, %v427
  %v430 = vmul.f32 %v361, %v427
  %v431 = vmul.f32 %v362, %v427
  %v432 = vmul.f32 %v363, %v427
  %v433 = vmul.f32 %v364, %v427
  %v434 = vmul.f32 %v365, %v427
  %v435 = vmul.f32 %v366, %v427
  %v436 = vmul.f32 %v367, %v427
  %v437 = vmul.f32 %v368, %v427
  %v438 = vmul.f32 %v369, %v427
  %v439 = vmul.f32 %v370, %v427
  %v440 = vmul.f32 %v371, %v427
  %v441 = vmul.f32 %v372, %v427
  %v442 = vmul.f32 %v373, %v427
  %v443 = vmul.f32 %v374, %v427
  %v444 = vmul.f32 %v375, %v427
  %v445 = vmul.f32 %v376, %v427
  %v446 = vmul.f32 %v377, %v427
  %v447 = vmul.f32 %v378, %v427
  %v448 = vmul.f32 %v379, %v427
  %v449 = vmul.f32 %v380, %v427
  %v450 = vmul.f32 %v381, %v427
  %v451 = vmul.f32 %v382, %v427
  %v452 = vmul.f32 %v383, %v427
  %v453 = vmul.f32 %v384, %v427
  %v454 = vmul.f32 %v385, %v427
  %v455 = vmul.f32 %v386, %v427
  %v456 = vmul.f32 %v387, %v427
  %v457 = vmul.f32 %v388, %v427
  %v458 = vmul.f32 %v389, %v427
  %v459 = vmul.f32 %v390, %v427
  %v460 = vmul.f32 %v391, %v427
  %v461 = vmul.f32 %v392, %v427
  %v462 = vmul.f32 %v393, %v427
  %v463 = vmul.f32 %v394, %v427
  %v464 = vmul.f32 %v395, %v427
  %v465 = vmul.f32 %v396, %v427
  %v466 = vmul.f32 %v397, %v427
  %v467 = vmul.f32 %v398, %v427
  %v468 = vmul.f32 %v399, %v427
  %v469 = vmul.f32 %v400, %v427
  %v470 = vmul.f32 %v401, %v427
  %v471 = vmul.f32 %v402, %v427
  %v472 = vmul.f32 %v403, %v427
  %v473 = vmul.f32 %v404, %v427
  %v474 = vmul.f32 %v405, %v427
  %v475 = vmul.f32 %v406, %v427
  %v476 = vmul.f32 %v407, %v427
  %v477 = vmul.f32 %v408, %v427
  %v478 = vmul.f32 %v409, %v427
  %v479 = vmul.f32 %v410, %v427
  %v480 = vmul.f32 %v411, %v427
  %v481 = vmul.f32 %v412, %v427
  %v482 = vmul.f32 %v413, %v427
  %v483 = vmul.f32 %v414, %v427
  %v484 = vmul.f32 %v415, %v427
  %v485 = vmul.f32 %v416, %v427
  %v486 = vmul.f32 %v417, %v427
  %v487 = vmul.f32 %v418, %v427
  %v488 = vmul.f32 %v419, %v427
  %v489 = vmul.f32 %v420, %v427
  %v490 = vmul.f32 %v421, %v427
  %v491 = vmul.f32 %v422, %v427
  %v492 = vadd.f32 %v295, %v428
  %v493 = vadd.f32 %v296, %v429
  %v494 = vadd.f32 %v297, %v430
  %v495 = vadd.f32 %v298, %v431
  %v496 = vadd.f32 %v299, %v432
  %v497 = vadd.f32 %v300, %v433
  %v498 = vadd.f32 %v301, %v434
  %v499 = vadd.f32 %v302, %v435
  %v500 = vadd.f32 %v303, %v436
  %v501 = vadd.f32 %v304, %v437
  %v502 = vadd.f32 %v305, %v438
  %v503 = vadd.f32 %v306, %v439
  %v504 = vadd.f32 %v307, %v440
  %v505 = vadd.f32 %v308, %v441
  %v506 = vadd.f32 %v309, %v442
  %v507 = vadd.f32 %v310, %v443
  %v508 = vadd.f32 %v311, %v444
  %v509 = vadd.f32 %v312, %v445
  %v510 = vadd.f32 %v313, %v446
  %v511 = vadd.f32 %v314, %v447
  %v512 = vadd.f32 %v315, %v448
  %v513 = vadd.f32 %v316, %v449
  %v514 = vadd.f32 %v317, %v450
  %v515 = vadd.f32 %v318, %v451
  %v516 = vadd.f32 %v319, %v452
  %v517 = vadd.f32 %v320, %v453
  %v518 = vadd.f32 %v321, %v454
  %v519 = vadd.f32 %v322, %v455
  %v520 = vadd.f32 %v323, %v456
  %v521 = vadd.f32 %v324, %v457
  %v522 = vadd.f32 %v325, %v458
  %v523 = vadd.f32 %v326, %v459
  %v524 = vadd.f32 %v327, %v460
  %v525 = vadd.f32 %v328, %v461
  %v526 = vadd.f32 %v329, %v462
  %v527 = vadd.f32 %v330, %v463
  %v528 = vadd.f32 %v331, %v464
  %v529 = vadd.f32 %v332, %v465
  %v530 = vadd.f32 %v333, %v466
  %v531 = vadd.f32 %v334, %v467
  %v532 = vadd.f32 %v335, %v468
  %v533 = vadd.f32 %v336, %v469
  %v534 = vadd.f32 %v337, %v470
  %v535 = vadd.f32 %v338, %v471
  %v536 = vadd.f32 %v339, %v472
  %v537 = vadd.f32 %v340, %v473
  %v538 = vadd.f32 %v341, %v474
  %v539 = vadd.f32 %v342, %v475
  %v540 = vadd.f32 %v343, %v476
  %v541 = vadd.f32 %v344, %v477
  %v542 = vadd.f32 %v345, %v478
  %v543 = vadd.f32 %v346, %v479
  %v544 = vadd.f32 %v347, %v480
  %v545 = vadd.f32 %v348, %v481
  %v546 = vadd.f32 %v349, %v482
  %v547 = vadd.f32 %v350, %v483
  %v548 = vadd.f32 %v351, %v484
  %v549 = vadd.f32 %v352, %v485
  %v550 = vadd.f32 %v353, %v486
  %v551 = vadd.f32 %v354, %v487
  %v552 = vadd.f32 %v355, %v488
  %v553 = vadd.f32 %v356, %v489
  %v554 = vadd.f32 %v357, %v490
  %v555 = vadd.f32 %v358, %v491
  %v556 = vld [vmem:[#allocation2 + $0x2] sm:$0xff]
  %v557 = vld [vmem:[#allocation2 + $0xa] sm:$0xff]
  %v558 = vld [vmem:[#allocation2 + $0x1a] sm:$0xff]
  %v559 = vld [vmem:[#allocation2 + $0x22] sm:$0xff]
  %v560 = vld [vmem:[#allocation2 + $0x32] sm:$0xff]
  %v561 = vld [vmem:[#allocation2 + $0x3a] sm:$0xff]
  %v562 = vld [vmem:[#allocation2 + $0x4a] sm:$0xff]
  %v563 = vld [vmem:[#allocation2 + $0x52] sm:$0xff]
  %v564 = vld [vmem:[#allocation2 + $0x62] sm:$0xff]
  %v565 = vld [vmem:[#allocation2 + $0x6a] sm:$0xff]
  %v566 = vld [vmem:[#allocation2 + $0x7a] sm:$0xff]
  %v567 = vld [vmem:[#allocation2 + $0x82] sm:$0xff]
  %v568 = vld [vmem:[#allocation2 + $0x92] sm:$0xff]
  %v569 = vld [vmem:[#allocation2 + $0x9a] sm:$0xff]
  %v570 = vld [vmem:[#allocation2 + $0xaa] sm:$0xff]
  %v571 = vld [vmem:[#allocation2 + $0xb2] sm:$0xff]
  %v572 = vld [vmem:[#allocation2 + $0xc2] sm:$0xff]
  %v573 = vld [vmem:[#allocation2 + $0xca] sm:$0xff]
  %v574 = vld [vmem:[#allocation2 + $0xda] sm:$0xff]
  %v575 = vld [vmem:[#allocation2 + $0xe2] sm:$0xff]
  %v576 = vld [vmem:[#allocation2 + $0xf2] sm:$0xff]
  %v577 = vld [vmem:[#allocation2 + $0xfa] sm:$0xff]
  %v578 = vld [vmem:[#allocation2 + $0x10a] sm:$0xff]
  %v579 = vld [vmem:[#allocation2 + $0x112] sm:$0xff]
  %v580 = vld [vmem:[#allocation2 + $0x122] sm:$0xff]
  %v581 = vld [vmem:[#allocation2 + $0x12a] sm:$0xff]
  %v582 = vld [vmem:[#allocation2 + $0x13a] sm:$0xff]
  %v583 = vld [vmem:[#allocation2 + $0x142] sm:$0xff]
  %v584 = vld [vmem:[#allocation2 + $0x152] sm:$0xff]
  %v585 = vld [vmem:[#allocation2 + $0x15a] sm:$0xff]
  %v586 = vld [vmem:[#allocation2 + $0x16a] sm:$0xff]
  %v587 = vld [vmem:[#allocation2 + $0x172] sm:$0xff]
  %v588 = vld [vmem:[#allocation2 + $0x1b2] sm:$0xff]
  %v589 = vld [vmem:[#allocation2 + $0x1ba] sm:$0xff]
  %v590 = vld [vmem:[#allocation2 + $0x1ca] sm:$0xff]
  %v591 = vld [vmem:[#allocation2 + $0x1d2] sm:$0xff]
  %v592 = vld [vmem:[#allocation2 + $0x1e2] sm:$0xff]
  %v593 = vld [vmem:[#allocation2 + $0x1ea] sm:$0xff]
  %v594 = vld [vmem:[#allocation2 + $0x1fa] sm:$0xff]
  %v595 = vld [vmem:[#allocation2 + $0x202] sm:$0xff]
  %v596 = vld [vmem:[#allocation2 + $0x212] sm:$0xff]
  %v597 = vld [vmem:[#allocation2 + $0x21a] sm:$0xff]
  %v598 = vld [vmem:[#allocation2 + $0x22a] sm:$0xff]
  %v599 = vld [vmem:[#allocation2 + $0x232] sm:$0xff]
  %v600 = vld [vmem:[#allocation2 + $0x242] sm:$0xff]
  %v601 = vld [vmem:[#allocation2 + $0x24a] sm:$0xff]
  %v602 = vld [vmem:[#allocation2 + $0x25a] sm:$0xff]
  %v603 = vld [vmem:[#allocation2 + $0x262] sm:$0xff]
  %v604 = vld [vmem:[#allocation2 + $0x272] sm:$0xff]
  %v605 = vld [vmem:[#allocation2 + $0x27a] sm:$0xff]
  %v606 = vld [vmem:[#allocation2 + $0x28a] sm:$0xff]
  %v607 = vld [vmem:[#allocation2 + $0x292] sm:$0xff]
  %v608 = vld [vmem:[#allocation2 + $0x2a2] sm:$0xff]
  %v609 = vld [vmem:[#allocation2 + $0x2aa] sm:$0xff]
  %v610 = vld [vmem:[#allocation2 + $0x2ba] sm:$0xff]
  %v611 = vld [vmem:[#allocation2 + $0x2c2] sm:$0xff]
  %v612 = vld [vmem:[#allocation2 + $0x2d2] sm:$0xff]
  %v613 = vld [vmem:[#allocation2 + $0x2da] sm:$0xff]
  %v614 = vld [vmem:[#allocation2 + $0x2ea] sm:$0xff]
  %v615 = vld [vmem:[#allocation2 + $0x2f2] sm:$0xff]
  %v616 = vld [vmem:[#allocation2 + $0x302] sm:$0xff]
  %v617 = vld [vmem:[#allocation2 + $0x30a] sm:$0xff]
  %v618 = vld [vmem:[#allocation2 + $0x31a] sm:$0xff]
  %v619 = vld [vmem:[#allocation2 + $0x322] sm:$0xff]
  %v620 = vld [vmem:[%s1 + $0x2] sm:$0x1]
  %v621 = vlaneseq
  %v622 = vshrl.u32 %v621, 7
  %v623 = vsub.s32 0, %v622
  %v624 = vrot.slane %v620, %v623
  %v625 = vmul.f32 %v556, %v624
  %v626 = vmul.f32 %v557, %v624
  %v627 = vmul.f32 %v558, %v624
  %v628 = vmul.f32 %v559, %v624
  %v629 = vmul.f32 %v560, %v624
  %v630 = vmul.f32 %v561, %v624
  %v631 = vmul.f32 %v562, %v624
  %v632 = vmul.f32 %v563, %v624
  %v633 = vmul.f32 %v564, %v624
  %v634 = vmul.f32 %v565, %v624
  %v635 = vmul.f32 %v566, %v624
  %v636 = vmul.f32 %v567, %v624
  %v637 = vmul.f32 %v568, %v624
  %v638 = vmul.f32 %v569, %v624
  %v639 = vmul.f32 %v570, %v624
  %v640 = vmul.f32 %v571, %v624
  %v641 = vmul.f32 %v572, %v624
  %v642 = vmul.f32 %v573, %v624
  %v643 = vmul.f32 %v574, %v624
  %v644 = vmul.f32 %v575, %v624
  %v645 = vmul.f32 %v576, %v624
  %v646 = vmul.f32 %v577, %v624
  %v647 = vmul.f32 %v578, %v624
  %v648 = vmul.f32 %v579, %v624
  %v649 = vmul.f32 %v580, %v624
  %v650 = vmul.f32 %v581, %v624
  %v651 = vmul.f32 %v582, %v624
  %v652 = vmul.f32 %v583, %v624
  %v653 = vmul.f32 %v584, %v624
  %v654 = vmul.f32 %v585, %v624
  %v655 = vmul.f32 %v586, %v624
  %v656 = vmul.f32 %v587, %v624
  %v657 = vmul.f32 %v588, %v624
  %v658 = vmul.f32 %v589, %v624
  %v659 = vmul.f32 %v590, %v624
  %v660 = vmul.f32 %v591, %v624
  %v661 = vmul.f32 %v592, %v624
  %v662 = vmul.f32 %v593, %v624
  %v663 = vmul.f32 %v594, %v624
  %v664 = vmul.f32 %v595, %v624
  %v665 = vmul.f32 %v596, %v624
  %v666 = vmul.f32 %v597, %v624
  %v667 = vmul.f32 %v598, %v624
  %v668 = vmul.f32 %v599, %v624
  %v669 = vmul.f32 %v600, %v624
  %v670 = vmul.f32 %v601, %v624
  %v671 = vmul.f32 %v602, %v624
  %v672 = vmul.f32 %v603, %v624
  %v673 = vmul.f32 %v604, %v624
  %v674 = vmul.f32 %v605, %v624
  %v675 = vmul.f32 %v606, %v624
  %v676 = vmul.f32 %v607, %v624
  %v677 = vmul.f32 %v608, %v624
  %v678 = vmul.f32 %v609, %v624
  %v679 = vmul.f32 %v610, %v624
  %v680 = vmul.f32 %v611, %v624
  %v681 = vmul.f32 %v612, %v624
  %v682 = vmul.f32 %v613, %v624
  %v683 = vmul.f32 %v614, %v624
  %v684 = vmul.f32 %v615, %v624
  %v685 = vmul.f32 %v616, %v624
  %v686 = vmul.f32 %v617, %v624
  %v687 = vmul.f32 %v618, %v624
  %v688 = vmul.f32 %v619, %v624
  %v689 = vadd.f32 %v492, %v625
  %v690 = vadd.f32 %v493, %v626
  %v691 = vadd.f32 %v494, %v627
  %v692 = vadd.f32 %v495, %v628
  %v693 = vadd.f32 %v496, %v629
  %v694 = vadd.f32 %v497, %v630
  %v695 = vadd.f32 %v498, %v631
  %v696 = vadd.f32 %v499, %v632
  %v697 = vadd.f32 %v500, %v633
  %v698 = vadd.f32 %v501, %v634
  %v699 = vadd.f32 %v502, %v635
  %v700 = vadd.f32 %v503, %v636
  %v701 = vadd.f32 %v504, %v637
  %v702 = vadd.f32 %v505, %v638
  %v703 = vadd.f32 %v506, %v639
  %v704 = vadd.f32 %v507, %v640
  %v705 = vadd.f32 %v508, %v641
  %v706 = vadd.f32 %v509, %v642
  %v707 = vadd.f32 %v510, %v643
  %v708 = vadd.f32 %v511, %v644
  %v709 = vadd.f32 %v512, %v645
  %v710 = vadd.f32 %v513, %v646
  %v711 = vadd.f32 %v514, %v647
  %v712 = vadd.f32 %v515, %v648
  %v713 = vadd.f32 %v516, %v649
  %v714 = vadd.f32 %v517, %v650
  %v715 = vadd.f32 %v518, %v651
  %v716 = vadd.f32 %v519, %v652
  %v717 = vadd.f32 %v520, %v653
  %v718 = vadd.f32 %v521, %v654
  %v719 = vadd.f32 %v522, %v655
  %v720 = vadd.f32 %v523, %v656
  %v721 = vadd.f32 %v524, %v657
  %v722 = vadd.f32 %v525, %v658
  %v723 = vadd.f32 %v526, %v659
  %v724 = vadd.f32 %v527, %v660
  %v725 = vadd.f32 %v528, %v661
  %v726 = vadd.f32 %v529, %v662
  %v727 = vadd.f32 %v530, %v663
  %v728 = vadd.f32 %v531, %v664
  %v729 = vadd.f32 %v532, %v665
  %v730 = vadd.f32 %v533, %v666
  %v731 = vadd.f32 %v534, %v667
  %v732 = vadd.f32 %v535, %v668
  %v733 = vadd.f32 %v536, %v669
  %v734 = vadd.f32 %v537, %v670
  %v735 = vadd.f32 %v538, %v671
  %v736 = vadd.f32 %v539, %v672
  %v737 = vadd.f32 %v540, %v673
  %v738 = vadd.f32 %v541, %v674
  %v739 = vadd.f32 %v542, %v675
  %v740 = vadd.f32 %v543, %v676
  %v741 = vadd.f32 %v544, %v677
  %v742 = vadd.f32 %v545, %v678
  %v743 = vadd.f32 %v546, %v679
  %v744 = vadd.f32 %v547, %v680
  %v745 = vadd.f32 %v548, %v681
  %v746 = vadd.f32 %v549, %v682
  %v747 = vadd.f32 %v550, %v683
  %v748 = vadd.f32 %v551, %v684
  %v749 = vadd.f32 %v552, %v685
  %v750 = vadd.f32 %v553, %v686
  %v751 = vadd.f32 %v554, %v687
  %v752 = vadd.f32 %v555, %v688
  %v753 = vld [vmem:[%s32] sm:$0xff]
  %v754 = vld [vmem:[%s32 + $0x8] sm:$0xff]
  %v755 = vld [vmem:[%s32 + $0x18] sm:$0xff]
  %v756 = vld [vmem:[%s32 + $0x20] sm:$0xff]
  %v757 = vld [vmem:[%s32 + $0x30] sm:$0xff]
  %v758 = vld [vmem:[%s32 + $0x38] sm:$0xff]
  %v759 = vld [vmem:[%s32 + $0x48] sm:$0xff]
  %v760 = vld [vmem:[%s32 + $0x50] sm:$0xff]
  %v761 = vld [vmem:[%s32 + $0x60] sm:$0xff]
  %v762 = vld [vmem:[%s32 + $0x68] sm:$0xff]
  %v763 = vld [vmem:[%s32 + $0x78] sm:$0xff]
  %v764 = vld [vmem:[%s32 + $0x80] sm:$0xff]
  %v765 = vld [vmem:[%s32 + $0x90] sm:$0xff]
  %v766 = vld [vmem:[%s32 + $0x98] sm:$0xff]
  %v767 = vld [vmem:[%s32 + $0xa8] sm:$0xff]
  %v768 = vld [vmem:[%s32 + $0xb0] sm:$0xff]
  %v769 = vld [vmem:[%s32 + $0xc0] sm:$0xff]
  %v770 = vld [vmem:[%s32 + $0xc8] sm:$0xff]
  %v771 = vld [vmem:[%s32 + $0xd8] sm:$0xff]
  %v772 = vld [vmem:[%s32 + $0xe0] sm:$0xff]
  %v773 = vld [vmem:[%s32 + $0xf0] sm:$0xff]
  %v774 = vld [vmem:[%s32 + $0xf8] sm:$0xff]
  %v775 = vld [vmem:[%s32 + $0x108] sm:$0xff]
  %v776 = vld [vmem:[%s32 + $0x110] sm:$0xff]
  %v777 = vld [vmem:[%s32 + $0x120] sm:$0xff]
  %v778 = vld [vmem:[%s32 + $0x128] sm:$0xff]
  %v779 = vld [vmem:[%s32 + $0x138] sm:$0xff]
  %v780 = vld [vmem:[%s32 + $0x140] sm:$0xff]
  %v781 = vld [vmem:[%s32 + $0x150] sm:$0xff]
  %v782 = vld [vmem:[%s32 + $0x158] sm:$0xff]
  %v783 = vld [vmem:[%s32 + $0x168] sm:$0xff]
  %v784 = vld [vmem:[%s32 + $0x170] sm:$0xff]
  %v785 = vld [vmem:[%s32 + $0x1b0] sm:$0xff]
  %v786 = vld [vmem:[%s32 + $0x1b8] sm:$0xff]
  %v787 = vld [vmem:[%s32 + $0x1c8] sm:$0xff]
  %v788 = vld [vmem:[%s32 + $0x1d0] sm:$0xff]
  %v789 = vld [vmem:[%s32 + $0x1e0] sm:$0xff]
  %v790 = vld [vmem:[%s32 + $0x1e8] sm:$0xff]
  %v791 = vld [vmem:[%s32 + $0x1f8] sm:$0xff]
  %v792 = vld [vmem:[%s32 + $0x200] sm:$0xff]
  %v793 = vld [vmem:[%s32 + $0x210] sm:$0xff]
  %v794 = vld [vmem:[%s32 + $0x218] sm:$0xff]
  %v795 = vld [vmem:[%s32 + $0x228] sm:$0xff]
  %v796 = vld [vmem:[%s32 + $0x230] sm:$0xff]
  %v797 = vld [vmem:[%s32 + $0x240] sm:$0xff]
  %v798 = vld [vmem:[%s32 + $0x248] sm:$0xff]
  %v799 = vld [vmem:[%s32 + $0x258] sm:$0xff]
  %v800 = vld [vmem:[%s32 + $0x260] sm:$0xff]
  %v801 = vld [vmem:[%s32 + $0x270] sm:$0xff]
  %v802 = vld [vmem:[%s32 + $0x278] sm:$0xff]
  %v803 = vld [vmem:[%s32 + $0x288] sm:$0xff]
  %v804 = vld [vmem:[%s32 + $0x290] sm:$0xff]
  %v805 = vld [vmem:[%s32 + $0x2a0] sm:$0xff]
  %v806 = vld [vmem:[%s32 + $0x2a8] sm:$0xff]
  %v807 = vld [vmem:[%s32 + $0x2b8] sm:$0xff]
  %v808 = vld [vmem:[%s32 + $0x2c0] sm:$0xff]
  %v809 = vld [vmem:[%s32 + $0x2d0] sm:$0xff]
  %v810 = vld [vmem:[%s32 + $0x2d8] sm:$0xff]
  %v811 = vld [vmem:[%s32 + $0x2e8] sm:$0xff]
  %v812 = vld [vmem:[%s32 + $0x2f0] sm:$0xff]
  %v813 = vld [vmem:[%s32 + $0x300] sm:$0xff]
  %v814 = vld [vmem:[%s32 + $0x308] sm:$0xff]
  %v815 = vld [vmem:[%s32 + $0x318] sm:$0xff]
  %v816 = vld [vmem:[%s32 + $0x320] sm:$0xff]
  %s817 = scalar_lea.vmem %s1, 4
  %v818 = vld [vmem:[%s817] sm:$0x1]
  %v819 = vlaneseq
  %v820 = vshrl.u32 %v819, 7
  %v821 = vsub.s32 0, %v820
  %v822 = vrot.slane %v818, %v821
  %v823 = vmul.f32 %v753, %v822
  %v824 = vmul.f32 %v754, %v822
  %v825 = vmul.f32 %v755, %v822
  %v826 = vmul.f32 %v756, %v822
  %v827 = vmul.f32 %v757, %v822
  %v828 = vmul.f32 %v758, %v822
  %v829 = vmul.f32 %v759, %v822
  %v830 = vmul.f32 %v760, %v822
  %v831 = vmul.f32 %v761, %v822
  %v832 = vmul.f32 %v762, %v822
  %v833 = vmul.f32 %v763, %v822
  %v834 = vmul.f32 %v764, %v822
  %v835 = vmul.f32 %v765, %v822
  %v836 = vmul.f32 %v766, %v822
  %v837 = vmul.f32 %v767, %v822
  %v838 = vmul.f32 %v768, %v822
  %v839 = vmul.f32 %v769, %v822
  %v840 = vmul.f32 %v770, %v822
  %v841 = vmul.f32 %v771, %v822
  %v842 = vmul.f32 %v772, %v822
  %v843 = vmul.f32 %v773, %v822
  %v844 = vmul.f32 %v774, %v822
  %v845 = vmul.f32 %v775, %v822
  %v846 = vmul.f32 %v776, %v822
  %v847 = vmul.f32 %v777, %v822
  %v848 = vmul.f32 %v778, %v822
  %v849 = vmul.f32 %v779, %v822
  %v850 = vmul.f32 %v780, %v822
  %v851 = vmul.f32 %v781, %v822
  %v852 = vmul.f32 %v782, %v822
  %v853 = vmul.f32 %v783, %v822
  %v854 = vmul.f32 %v784, %v822
  %v855 = vmul.f32 %v785, %v822
  %v856 = vmul.f32 %v786, %v822
  %v857 = vmul.f32 %v787, %v822
  %v858 = vmul.f32 %v788, %v822
  %v859 = vmul.f32 %v789, %v822
  %v860 = vmul.f32 %v790, %v822
  %v861 = vmul.f32 %v791, %v822
  %v862 = vmul.f32 %v792, %v822
  %v863 = vmul.f32 %v793, %v822
  %v864 = vmul.f32 %v794, %v822
  %v865 = vmul.f32 %v795, %v822
  %v866 = vmul.f32 %v796, %v822
  %v867 = vmul.f32 %v797, %v822
  %v868 = vmul.f32 %v798, %v822
  %v869 = vmul.f32 %v799, %v822
  %v870 = vmul.f32 %v800, %v822
  %v871 = vmul.f32 %v801, %v822
  %v872 = vmul.f32 %v802, %v822
  %v873 = vmul.f32 %v803, %v822
  %v874 = vmul.f32 %v804, %v822
  %v875 = vmul.f32 %v805, %v822
  %v876 = vmul.f32 %v806, %v822
  %v877 = vmul.f32 %v807, %v822
  %v878 = vmul.f32 %v808, %v822
  %v879 = vmul.f32 %v809, %v822
  %v880 = vmul.f32 %v810, %v822
  %v881 = vmul.f32 %v811, %v822
  %v882 = vmul.f32 %v812, %v822
  %v883 = vmul.f32 %v813, %v822
  %v884 = vmul.f32 %v814, %v822
  %v885 = vmul.f32 %v815, %v822
  %v886 = vmul.f32 %v816, %v822
  %v887 = vadd.f32 %v689, %v823
  %v888 = vadd.f32 %v690, %v824
  %v889 = vadd.f32 %v691, %v825
  %v890 = vadd.f32 %v692, %v826
  %v891 = vadd.f32 %v693, %v827
  %v892 = vadd.f32 %v694, %v828
  %v893 = vadd.f32 %v695, %v829
  %v894 = vadd.f32 %v696, %v830
  %v895 = vadd.f32 %v697, %v831
  %v896 = vadd.f32 %v698, %v832
  %v897 = vadd.f32 %v699, %v833
  %v898 = vadd.f32 %v700, %v834
  %v899 = vadd.f32 %v701, %v835
  %v900 = vadd.f32 %v702, %v836
  %v901 = vadd.f32 %v703, %v837
  %v902 = vadd.f32 %v704, %v838
  %v903 = vadd.f32 %v705, %v839
  %v904 = vadd.f32 %v706, %v840
  %v905 = vadd.f32 %v707, %v841
  %v906 = vadd.f32 %v708, %v842
  %v907 = vadd.f32 %v709, %v843
  %v908 = vadd.f32 %v710, %v844
  %v909 = vadd.f32 %v711, %v845
  %v910 = vadd.f32 %v712, %v846
  %v911 = vadd.f32 %v713, %v847
  %v912 = vadd.f32 %v714, %v848
  %v913 = vadd.f32 %v715, %v849
  %v914 = vadd.f32 %v716, %v850
  %v915 = vadd.f32 %v717, %v851
  %v916 = vadd.f32 %v718, %v852
  %v917 = vadd.f32 %v719, %v853
  %v918 = vadd.f32 %v720, %v854
  %v919 = vadd.f32 %v721, %v855
  %v920 = vadd.f32 %v722, %v856
  %v921 = vadd.f32 %v723, %v857
  %v922 = vadd.f32 %v724, %v858
  %v923 = vadd.f32 %v725, %v859
  %v924 = vadd.f32 %v726, %v860
  %v925 = vadd.f32 %v727, %v861
  %v926 = vadd.f32 %v728, %v862
  %v927 = vadd.f32 %v729, %v863
  %v928 = vadd.f32 %v730, %v864
  %v929 = vadd.f32 %v731, %v865
  %v930 = vadd.f32 %v732, %v866
  %v931 = vadd.f32 %v733, %v867
  %v932 = vadd.f32 %v734, %v868
  %v933 = vadd.f32 %v735, %v869
  %v934 = vadd.f32 %v736, %v870
  %v935 = vadd.f32 %v737, %v871
  %v936 = vadd.f32 %v738, %v872
  %v937 = vadd.f32 %v739, %v873
  %v938 = vadd.f32 %v740, %v874
  %v939 = vadd.f32 %v741, %v875
  %v940 = vadd.f32 %v742, %v876
  %v941 = vadd.f32 %v743, %v877
  %v942 = vadd.f32 %v744, %v878
  %v943 = vadd.f32 %v745, %v879
  %v944 = vadd.f32 %v746, %v880
  %v945 = vadd.f32 %v747, %v881
  %v946 = vadd.f32 %v748, %v882
  %v947 = vadd.f32 %v749, %v883
  %v948 = vadd.f32 %v750, %v884
  %v949 = vadd.f32 %v751, %v885
  %v950 = vadd.f32 %v752, %v886
  %v951 = vld [vmem:[%s32 + $0x1] sm:$0xff]
  %v952 = vld [vmem:[%s32 + $0x9] sm:$0xff]
  %v953 = vld [vmem:[%s32 + $0x19] sm:$0xff]
  %v954 = vld [vmem:[%s32 + $0x21] sm:$0xff]
  %v955 = vld [vmem:[%s32 + $0x31] sm:$0xff]
  %v956 = vld [vmem:[%s32 + $0x39] sm:$0xff]
  %v957 = vld [vmem:[%s32 + $0x49] sm:$0xff]
  %v958 = vld [vmem:[%s32 + $0x51] sm:$0xff]
  %v959 = vld [vmem:[%s32 + $0x61] sm:$0xff]
  %v960 = vld [vmem:[%s32 + $0x69] sm:$0xff]
  %v961 = vld [vmem:[%s32 + $0x79] sm:$0xff]
  %v962 = vld [vmem:[%s32 + $0x81] sm:$0xff]
  %v963 = vld [vmem:[%s32 + $0x91] sm:$0xff]
  %v964 = vld [vmem:[%s32 + $0x99] sm:$0xff]
  %v965 = vld [vmem:[%s32 + $0xa9] sm:$0xff]
  %v966 = vld [vmem:[%s32 + $0xb1] sm:$0xff]
  %v967 = vld [vmem:[%s32 + $0xc1] sm:$0xff]
  %v968 = vld [vmem:[%s32 + $0xc9] sm:$0xff]
  %v969 = vld [vmem:[%s32 + $0xd9] sm:$0xff]
  %v970 = vld [vmem:[%s32 + $0xe1] sm:$0xff]
  %v971 = vld [vmem:[%s32 + $0xf1] sm:$0xff]
  %v972 = vld [vmem:[%s32 + $0xf9] sm:$0xff]
  %v973 = vld [vmem:[%s32 + $0x109] sm:$0xff]
  %v974 = vld [vmem:[%s32 + $0x111] sm:$0xff]
  %v975 = vld [vmem:[%s32 + $0x121] sm:$0xff]
  %v976 = vld [vmem:[%s32 + $0x129] sm:$0xff]
  %v977 = vld [vmem:[%s32 + $0x139] sm:$0xff]
  %v978 = vld [vmem:[%s32 + $0x141] sm:$0xff]
  %v979 = vld [vmem:[%s32 + $0x151] sm:$0xff]
  %v980 = vld [vmem:[%s32 + $0x159] sm:$0xff]
  %v981 = vld [vmem:[%s32 + $0x169] sm:$0xff]
  %v982 = vld [vmem:[%s32 + $0x171] sm:$0xff]
  %v983 = vld [vmem:[%s32 + $0x1b1] sm:$0xff]
  %v984 = vld [vmem:[%s32 + $0x1b9] sm:$0xff]
  %v985 = vld [vmem:[%s32 + $0x1c9] sm:$0xff]
  %v986 = vld [vmem:[%s32 + $0x1d1] sm:$0xff]
  %v987 = vld [vmem:[%s32 + $0x1e1] sm:$0xff]
  %v988 = vld [vmem:[%s32 + $0x1e9] sm:$0xff]
  %v989 = vld [vmem:[%s32 + $0x1f9] sm:$0xff]
  %v990 = vld [vmem:[%s32 + $0x201] sm:$0xff]
  %v991 = vld [vmem:[%s32 + $0x211] sm:$0xff]
  %v992 = vld [vmem:[%s32 + $0x219] sm:$0xff]
  %v993 = vld [vmem:[%s32 + $0x229] sm:$0xff]
  %v994 = vld [vmem:[%s32 + $0x231] sm:$0xff]
  %v995 = vld [vmem:[%s32 + $0x241] sm:$0xff]
  %v996 = vld [vmem:[%s32 + $0x249] sm:$0xff]
  %v997 = vld [vmem:[%s32 + $0x259] sm:$0xff]
  %v998 = vld [vmem:[%s32 + $0x261] sm:$0xff]
  %v999 = vld [vmem:[%s32 + $0x271] sm:$0xff]
  %v1000 = vld [vmem:[%s32 + $0x279] sm:$0xff]
  %v1001 = vld [vmem:[%s32 + $0x289] sm:$0xff]
  %v1002 = vld [vmem:[%s32 + $0x291] sm:$0xff]
  %v1003 = vld [vmem:[%s32 + $0x2a1] sm:$0xff]
  %v1004 = vld [vmem:[%s32 + $0x2a9] sm:$0xff]
  %v1005 = vld [vmem:[%s32 + $0x2b9] sm:$0xff]
  %v1006 = vld [vmem:[%s32 + $0x2c1] sm:$0xff]
  %v1007 = vld [vmem:[%s32 + $0x2d1] sm:$0xff]
  %v1008 = vld [vmem:[%s32 + $0x2d9] sm:$0xff]
  %v1009 = vld [vmem:[%s32 + $0x2e9] sm:$0xff]
  %v1010 = vld [vmem:[%s32 + $0x2f1] sm:$0xff]
  %v1011 = vld [vmem:[%s32 + $0x301] sm:$0xff]
  %v1012 = vld [vmem:[%s32 + $0x309] sm:$0xff]
  %v1013 = vld [vmem:[%s32 + $0x319] sm:$0xff]
  %v1014 = vld [vmem:[%s32 + $0x321] sm:$0xff]
  %v1015 = vld [vmem:[%s817 + $0x1] sm:$0x1]
  %v1016 = vlaneseq
  %v1017 = vshrl.u32 %v1016, 7
  %v1018 = vsub.s32 0, %v1017
  %v1019 = vrot.slane %v1015, %v1018
  %v1020 = vmul.f32 %v951, %v1019
  %v1021 = vmul.f32 %v952, %v1019
  %v1022 = vmul.f32 %v953, %v1019
  %v1023 = vmul.f32 %v954, %v1019
  %v1024 = vmul.f32 %v955, %v1019
  %v1025 = vmul.f32 %v956, %v1019
  %v1026 = vmul.f32 %v957, %v1019
  %v1027 = vmul.f32 %v958, %v1019
  %v1028 = vmul.f32 %v959, %v1019
  %v1029 = vmul.f32 %v960, %v1019
  %v1030 = vmul.f32 %v961, %v1019
  %v1031 = vmul.f32 %v962, %v1019
  %v1032 = vmul.f32 %v963, %v1019
  %v1033 = vmul.f32 %v964, %v1019
  %v1034 = vmul.f32 %v965, %v1019
  %v1035 = vmul.f32 %v966, %v1019
  %v1036 = vmul.f32 %v967, %v1019
  %v1037 = vmul.f32 %v968, %v1019
  %v1038 = vmul.f32 %v969, %v1019
  %v1039 = vmul.f32 %v970, %v1019
  %v1040 = vmul.f32 %v971, %v1019
  %v1041 = vmul.f32 %v972, %v1019
  %v1042 = vmul.f32 %v973, %v1019
  %v1043 = vmul.f32 %v974, %v1019
  %v1044 = vmul.f32 %v975, %v1019
  %v1045 = vmul.f32 %v976, %v1019
  %v1046 = vmul.f32 %v977, %v1019
  %v1047 = vmul.f32 %v978, %v1019
  %v1048 = vmul.f32 %v979, %v1019
  %v1049 = vmul.f32 %v980, %v1019
  %v1050 = vmul.f32 %v981, %v1019
  %v1051 = vmul.f32 %v982, %v1019
  %v1052 = vmul.f32 %v983, %v1019
  %v1053 = vmul.f32 %v984, %v1019
  %v1054 = vmul.f32 %v985, %v1019
  %v1055 = vmul.f32 %v986, %v1019
  %v1056 = vmul.f32 %v987, %v1019
  %v1057 = vmul.f32 %v988, %v1019
  %v1058 = vmul.f32 %v989, %v1019
  %v1059 = vmul.f32 %v990, %v1019
  %v1060 = vmul.f32 %v991, %v1019
  %v1061 = vmul.f32 %v992, %v1019
  %v1062 = vmul.f32 %v993, %v1019
  %v1063 = vmul.f32 %v994, %v1019
  %v1064 = vmul.f32 %v995, %v1019
  %v1065 = vmul.f32 %v996, %v1019
  %v1066 = vmul.f32 %v997, %v1019
  %v1067 = vmul.f32 %v998, %v1019
  %v1068 = vmul.f32 %v999, %v1019
  %v1069 = vmul.f32 %v1000, %v1019
  %v1070 = vmul.f32 %v1001, %v1019
  %v1071 = vmul.f32 %v1002, %v1019
  %v1072 = vmul.f32 %v1003, %v1019
  %v1073 = vmul.f32 %v1004, %v1019
  %v1074 = vmul.f32 %v1005, %v1019
  %v1075 = vmul.f32 %v1006, %v1019
  %v1076 = vmul.f32 %v1007, %v1019
  %v1077 = vmul.f32 %v1008, %v1019
  %v1078 = vmul.f32 %v1009, %v1019
  %v1079 = vmul.f32 %v1010, %v1019
  %v1080 = vmul.f32 %v1011, %v1019
  %v1081 = vmul.f32 %v1012, %v1019
  %v1082 = vmul.f32 %v1013, %v1019
  %v1083 = vmul.f32 %v1014, %v1019
  %v1084 = vadd.f32 %v887, %v1020
  %v1085 = vadd.f32 %v888, %v1021
  %v1086 = vadd.f32 %v889, %v1022
  %v1087 = vadd.f32 %v890, %v1023
  %v1088 = vadd.f32 %v891, %v1024
  %v1089 = vadd.f32 %v892, %v1025
  %v1090 = vadd.f32 %v893, %v1026
  %v1091 = vadd.f32 %v894, %v1027
  %v1092 = vadd.f32 %v895, %v1028
  %v1093 = vadd.f32 %v896, %v1029
  %v1094 = vadd.f32 %v897, %v1030
  %v1095 = vadd.f32 %v898, %v1031
  %v1096 = vadd.f32 %v899, %v1032
  %v1097 = vadd.f32 %v900, %v1033
  %v1098 = vadd.f32 %v901, %v1034
  %v1099 = vadd.f32 %v902, %v1035
  %v1100 = vadd.f32 %v903, %v1036
  %v1101 = vadd.f32 %v904, %v1037
  %v1102 = vadd.f32 %v905, %v1038
  %v1103 = vadd.f32 %v906, %v1039
  %v1104 = vadd.f32 %v907, %v1040
  %v1105 = vadd.f32 %v908, %v1041
  %v1106 = vadd.f32 %v909, %v1042
  %v1107 = vadd.f32 %v910, %v1043
  %v1108 = vadd.f32 %v911, %v1044
  %v1109 = vadd.f32 %v912, %v1045
  %v1110 = vadd.f32 %v913, %v1046
  %v1111 = vadd.f32 %v914, %v1047
  %v1112 = vadd.f32 %v915, %v1048
  %v1113 = vadd.f32 %v916, %v1049
  %v1114 = vadd.f32 %v917, %v1050
  %v1115 = vadd.f32 %v918, %v1051
  %v1116 = vadd.f32 %v919, %v1052
  %v1117 = vadd.f32 %v920, %v1053
  %v1118 = vadd.f32 %v921, %v1054
  %v1119 = vadd.f32 %v922, %v1055
  %v1120 = vadd.f32 %v923, %v1056
  %v1121 = vadd.f32 %v924, %v1057
  %v1122 = vadd.f32 %v925, %v1058
  %v1123 = vadd.f32 %v926, %v1059
  %v1124 = vadd.f32 %v927, %v1060
  %v1125 = vadd.f32 %v928, %v1061
  %v1126 = vadd.f32 %v929, %v1062
  %v1127 = vadd.f32 %v930, %v1063
  %v1128 = vadd.f32 %v931, %v1064
  %v1129 = vadd.f32 %v932, %v1065
  %v1130 = vadd.f32 %v933, %v1066
  %v1131 = vadd.f32 %v934, %v1067
  %v1132 = vadd.f32 %v935, %v1068
  %v1133 = vadd.f32 %v936, %v1069
  %v1134 = vadd.f32 %v937, %v1070
  %v1135 = vadd.f32 %v938, %v1071
  %v1136 = vadd.f32 %v939, %v1072
  %v1137 = vadd.f32 %v940, %v1073
  %v1138 = vadd.f32 %v941, %v1074
  %v1139 = vadd.f32 %v942, %v1075
  %v1140 = vadd.f32 %v943, %v1076
  %v1141 = vadd.f32 %v944, %v1077
  %v1142 = vadd.f32 %v945, %v1078
  %v1143 = vadd.f32 %v946, %v1079
  %v1144 = vadd.f32 %v947, %v1080
  %v1145 = vadd.f32 %v948, %v1081
  %v1146 = vadd.f32 %v949, %v1082
  %v1147 = vadd.f32 %v950, %v1083
  %v1148 = vld [vmem:[%s32 + $0x2] sm:$0xff]
  %v1149 = vld [vmem:[%s32 + $0xa] sm:$0xff]
  %v1150 = vld [vmem:[%s32 + $0x1a] sm:$0xff]
  %v1151 = vld [vmem:[%s32 + $0x22] sm:$0xff]
  %v1152 = vld [vmem:[%s32 + $0x32] sm:$0xff]
  %v1153 = vld [vmem:[%s32 + $0x3a] sm:$0xff]
  %v1154 = vld [vmem:[%s32 + $0x4a] sm:$0xff]
  %v1155 = vld [vmem:[%s32 + $0x52] sm:$0xff]
  %v1156 = vld [vmem:[%s32 + $0x62] sm:$0xff]
  %v1157 = vld [vmem:[%s32 + $0x6a] sm:$0xff]
  %v1158 = vld [vmem:[%s32 + $0x7a] sm:$0xff]
  %v1159 = vld [vmem:[%s32 + $0x82] sm:$0xff]
  %v1160 = vld [vmem:[%s32 + $0x92] sm:$0xff]
  %v1161 = vld [vmem:[%s32 + $0x9a] sm:$0xff]
  %v1162 = vld [vmem:[%s32 + $0xaa] sm:$0xff]
  %v1163 = vld [vmem:[%s32 + $0xb2] sm:$0xff]
  %v1164 = vld [vmem:[%s32 + $0xc2] sm:$0xff]
  %v1165 = vld [vmem:[%s32 + $0xca] sm:$0xff]
  %v1166 = vld [vmem:[%s32 + $0xda] sm:$0xff]
  %v1167 = vld [vmem:[%s32 + $0xe2] sm:$0xff]
  %v1168 = vld [vmem:[%s32 + $0xf2] sm:$0xff]
  %v1169 = vld [vmem:[%s32 + $0xfa] sm:$0xff]
  %v1170 = vld [vmem:[%s32 + $0x10a] sm:$0xff]
  %v1171 = vld [vmem:[%s32 + $0x112] sm:$0xff]
  %v1172 = vld [vmem:[%s32 + $0x122] sm:$0xff]
  %v1173 = vld [vmem:[%s32 + $0x12a] sm:$0xff]
  %v1174 = vld [vmem:[%s32 + $0x13a] sm:$0xff]
  %v1175 = vld [vmem:[%s32 + $0x142] sm:$0xff]
  %v1176 = vld [vmem:[%s32 + $0x152] sm:$0xff]
  %v1177 = vld [vmem:[%s32 + $0x15a] sm:$0xff]
  %v1178 = vld [vmem:[%s32 + $0x16a] sm:$0xff]
  %v1179 = vld [vmem:[%s32 + $0x172] sm:$0xff]
  %v1180 = vld [vmem:[%s32 + $0x1b2] sm:$0xff]
  %v1181 = vld [vmem:[%s32 + $0x1ba] sm:$0xff]
  %v1182 = vld [vmem:[%s32 + $0x1ca] sm:$0xff]
  %v1183 = vld [vmem:[%s32 + $0x1d2] sm:$0xff]
  %v1184 = vld [vmem:[%s32 + $0x1e2] sm:$0xff]
  %v1185 = vld [vmem:[%s32 + $0x1ea] sm:$0xff]
  %v1186 = vld [vmem:[%s32 + $0x1fa] sm:$0xff]
  %v1187 = vld [vmem:[%s32 + $0x202] sm:$0xff]
  %v1188 = vld [vmem:[%s32 + $0x212] sm:$0xff]
  %v1189 = vld [vmem:[%s32 + $0x21a] sm:$0xff]
  %v1190 = vld [vmem:[%s32 + $0x22a] sm:$0xff]
  %v1191 = vld [vmem:[%s32 + $0x232] sm:$0xff]
  %v1192 = vld [vmem:[%s32 + $0x242] sm:$0xff]
  %v1193 = vld [vmem:[%s32 + $0x24a] sm:$0xff]
  %v1194 = vld [vmem:[%s32 + $0x25a] sm:$0xff]
  %v1195 = vld [vmem:[%s32 + $0x262] sm:$0xff]
  %v1196 = vld [vmem:[%s32 + $0x272] sm:$0xff]
  %v1197 = vld [vmem:[%s32 + $0x27a] sm:$0xff]
  %v1198 = vld [vmem:[%s32 + $0x28a] sm:$0xff]
  %v1199 = vld [vmem:[%s32 + $0x292] sm:$0xff]
  %v1200 = vld [vmem:[%s32 + $0x2a2] sm:$0xff]
  %v1201 = vld [vmem:[%s32 + $0x2aa] sm:$0xff]
  %v1202 = vld [vmem:[%s32 + $0x2ba] sm:$0xff]
  %v1203 = vld [vmem:[%s32 + $0x2c2] sm:$0xff]
  %v1204 = vld [vmem:[%s32 + $0x2d2] sm:$0xff]
  %v1205 = vld [vmem:[%s32 + $0x2da] sm:$0xff]
  %v1206 = vld [vmem:[%s32 + $0x2ea] sm:$0xff]
  %v1207 = vld [vmem:[%s32 + $0x2f2] sm:$0xff]
  %v1208 = vld [vmem:[%s32 + $0x302] sm:$0xff]
  %v1209 = vld [vmem:[%s32 + $0x30a] sm:$0xff]
  %v1210 = vld [vmem:[%s32 + $0x31a] sm:$0xff]
  %v1211 = vld [vmem:[%s32 + $0x322] sm:$0xff]
  %v1212 = vld [vmem:[%s817 + $0x2] sm:$0x1]
  %v1213 = vlaneseq
  %v1214 = vshrl.u32 %v1213, 7
  %v1215 = vsub.s32 0, %v1214
  %v1216 = vrot.slane %v1212, %v1215
  %v1217 = vmul.f32 %v1148, %v1216
  %v1218 = vmul.f32 %v1149, %v1216
  %v1219 = vmul.f32 %v1150, %v1216
  %v1220 = vmul.f32 %v1151, %v1216
  %v1221 = vmul.f32 %v1152, %v1216
  %v1222 = vmul.f32 %v1153, %v1216
  %v1223 = vmul.f32 %v1154, %v1216
  %v1224 = vmul.f32 %v1155, %v1216
  %v1225 = vmul.f32 %v1156, %v1216
  %v1226 = vmul.f32 %v1157, %v1216
  %v1227 = vmul.f32 %v1158, %v1216
  %v1228 = vmul.f32 %v1159, %v1216
  %v1229 = vmul.f32 %v1160, %v1216
  %v1230 = vmul.f32 %v1161, %v1216
  %v1231 = vmul.f32 %v1162, %v1216
  %v1232 = vmul.f32 %v1163, %v1216
  %v1233 = vmul.f32 %v1164, %v1216
  %v1234 = vmul.f32 %v1165, %v1216
  %v1235 = vmul.f32 %v1166, %v1216
  %v1236 = vmul.f32 %v1167, %v1216
  %v1237 = vmul.f32 %v1168, %v1216
  %v1238 = vmul.f32 %v1169, %v1216
  %v1239 = vmul.f32 %v1170, %v1216
  %v1240 = vmul.f32 %v1171, %v1216
  %v1241 = vmul.f32 %v1172, %v1216
  %v1242 = vmul.f32 %v1173, %v1216
  %v1243 = vmul.f32 %v1174, %v1216
  %v1244 = vmul.f32 %v1175, %v1216
  %v1245 = vmul.f32 %v1176, %v1216
  %v1246 = vmul.f32 %v1177, %v1216
  %v1247 = vmul.f32 %v1178, %v1216
  %v1248 = vmul.f32 %v1179, %v1216
  %v1249 = vmul.f32 %v1180, %v1216
  %v1250 = vmul.f32 %v1181, %v1216
  %v1251 = vmul.f32 %v1182, %v1216
  %v1252 = vmul.f32 %v1183, %v1216
  %v1253 = vmul.f32 %v1184, %v1216
  %v1254 = vmul.f32 %v1185, %v1216
  %v1255 = vmul.f32 %v1186, %v1216
  %v1256 = vmul.f32 %v1187, %v1216
  %v1257 = vmul.f32 %v1188, %v1216
  %v1258 = vmul.f32 %v1189, %v1216
  %v1259 = vmul.f32 %v1190, %v1216
  %v1260 = vmul.f32 %v1191, %v1216
  %v1261 = vmul.f32 %v1192, %v1216
  %v1262 = vmul.f32 %v1193, %v1216
  %v1263 = vmul.f32 %v1194, %v1216
  %v1264 = vmul.f32 %v1195, %v1216
  %v1265 = vmul.f32 %v1196, %v1216
  %v1266 = vmul.f32 %v1197, %v1216
  %v1267 = vmul.f32 %v1198, %v1216
  %v1268 = vmul.f32 %v1199, %v1216
  %v1269 = vmul.f32 %v1200, %v1216
  %v1270 = vmul.f32 %v1201, %v1216
  %v1271 = vmul.f32 %v1202, %v1216
  %v1272 = vmul.f32 %v1203, %v1216
  %v1273 = vmul.f32 %v1204, %v1216
  %v1274 = vmul.f32 %v1205, %v1216
  %v1275 = vmul.f32 %v1206, %v1216
  %v1276 = vmul.f32 %v1207, %v1216
  %v1277 = vmul.f32 %v1208, %v1216
  %v1278 = vmul.f32 %v1209, %v1216
  %v1279 = vmul.f32 %v1210, %v1216
  %v1280 = vmul.f32 %v1211, %v1216
  %v1281 = vadd.f32 %v1084, %v1217
  %v1282 = vadd.f32 %v1085, %v1218
  %v1283 = vadd.f32 %v1086, %v1219
  %v1284 = vadd.f32 %v1087, %v1220
  %v1285 = vadd.f32 %v1088, %v1221
  %v1286 = vadd.f32 %v1089, %v1222
  %v1287 = vadd.f32 %v1090, %v1223
  %v1288 = vadd.f32 %v1091, %v1224
  %v1289 = vadd.f32 %v1092, %v1225
  %v1290 = vadd.f32 %v1093, %v1226
  %v1291 = vadd.f32 %v1094, %v1227
  %v1292 = vadd.f32 %v1095, %v1228
  %v1293 = vadd.f32 %v1096, %v1229
  %v1294 = vadd.f32 %v1097, %v1230
  %v1295 = vadd.f32 %v1098, %v1231
  %v1296 = vadd.f32 %v1099, %v1232
  %v1297 = vadd.f32 %v1100, %v1233
  %v1298 = vadd.f32 %v1101, %v1234
  %v1299 = vadd.f32 %v1102, %v1235
  %v1300 = vadd.f32 %v1103, %v1236
  %v1301 = vadd.f32 %v1104, %v1237
  %v1302 = vadd.f32 %v1105, %v1238
  %v1303 = vadd.f32 %v1106, %v1239
  %v1304 = vadd.f32 %v1107, %v1240
  %v1305 = vadd.f32 %v1108, %v1241
  %v1306 = vadd.f32 %v1109, %v1242
  %v1307 = vadd.f32 %v1110, %v1243
  %v1308 = vadd.f32 %v1111, %v1244
  %v1309 = vadd.f32 %v1112, %v1245
  %v1310 = vadd.f32 %v1113, %v1246
  %v1311 = vadd.f32 %v1114, %v1247
  %v1312 = vadd.f32 %v1115, %v1248
  %v1313 = vadd.f32 %v1116, %v1249
  %v1314 = vadd.f32 %v1117, %v1250
  %v1315 = vadd.f32 %v1118, %v1251
  %v1316 = vadd.f32 %v1119, %v1252
  %v1317 = vadd.f32 %v1120, %v1253
  %v1318 = vadd.f32 %v1121, %v1254
  %v1319 = vadd.f32 %v1122, %v1255
  %v1320 = vadd.f32 %v1123, %v1256
  %v1321 = vadd.f32 %v1124, %v1257
  %v1322 = vadd.f32 %v1125, %v1258
  %v1323 = vadd.f32 %v1126, %v1259
  %v1324 = vadd.f32 %v1127, %v1260
  %v1325 = vadd.f32 %v1128, %v1261
  %v1326 = vadd.f32 %v1129, %v1262
  %v1327 = vadd.f32 %v1130, %v1263
  %v1328 = vadd.f32 %v1131, %v1264
  %v1329 = vadd.f32 %v1132, %v1265
  %v1330 = vadd.f32 %v1133, %v1266
  %v1331 = vadd.f32 %v1134, %v1267
  %v1332 = vadd.f32 %v1135, %v1268
  %v1333 = vadd.f32 %v1136, %v1269
  %v1334 = vadd.f32 %v1137, %v1270
  %v1335 = vadd.f32 %v1138, %v1271
  %v1336 = vadd.f32 %v1139, %v1272
  %v1337 = vadd.f32 %v1140, %v1273
  %v1338 = vadd.f32 %v1141, %v1274
  %v1339 = vadd.f32 %v1142, %v1275
  %v1340 = vadd.f32 %v1143, %v1276
  %v1341 = vadd.f32 %v1144, %v1277
  %v1342 = vadd.f32 %v1145, %v1278
  %v1343 = vadd.f32 %v1146, %v1279
  %v1344 = vadd.f32 %v1147, %v1280
  %s1345 = scalar_lea.vmem [#allocation2], 48
  %v1346 = vld [vmem:[%s1345] sm:$0xff]
  %v1347 = vld [vmem:[%s1345 + $0x8] sm:$0xff]
  %v1348 = vld [vmem:[%s1345 + $0x18] sm:$0xff]
  %v1349 = vld [vmem:[%s1345 + $0x20] sm:$0xff]
  %v1350 = vld [vmem:[%s1345 + $0x30] sm:$0xff]
  %v1351 = vld [vmem:[%s1345 + $0x38] sm:$0xff]
  %v1352 = vld [vmem:[%s1345 + $0x48] sm:$0xff]
  %v1353 = vld [vmem:[%s1345 + $0x50] sm:$0xff]
  %v1354 = vld [vmem:[%s1345 + $0x60] sm:$0xff]
  %v1355 = vld [vmem:[%s1345 + $0x68] sm:$0xff]
  %v1356 = vld [vmem:[%s1345 + $0x78] sm:$0xff]
  %v1357 = vld [vmem:[%s1345 + $0x80] sm:$0xff]
  %v1358 = vld [vmem:[%s1345 + $0x90] sm:$0xff]
  %v1359 = vld [vmem:[%s1345 + $0x98] sm:$0xff]
  %v1360 = vld [vmem:[%s1345 + $0xa8] sm:$0xff]
  %v1361 = vld [vmem:[%s1345 + $0xb0] sm:$0xff]
  %v1362 = vld [vmem:[%s1345 + $0xc0] sm:$0xff]
  %v1363 = vld [vmem:[%s1345 + $0xc8] sm:$0xff]
  %v1364 = vld [vmem:[%s1345 + $0xd8] sm:$0xff]
  %v1365 = vld [vmem:[%s1345 + $0xe0] sm:$0xff]
  %v1366 = vld [vmem:[%s1345 + $0xf0] sm:$0xff]
  %v1367 = vld [vmem:[%s1345 + $0xf8] sm:$0xff]
  %v1368 = vld [vmem:[%s1345 + $0x108] sm:$0xff]
  %v1369 = vld [vmem:[%s1345 + $0x110] sm:$0xff]
  %v1370 = vld [vmem:[%s1345 + $0x120] sm:$0xff]
  %v1371 = vld [vmem:[%s1345 + $0x128] sm:$0xff]
  %v1372 = vld [vmem:[%s1345 + $0x138] sm:$0xff]
  %v1373 = vld [vmem:[%s1345 + $0x140] sm:$0xff]
  %v1374 = vld [vmem:[%s1345 + $0x150] sm:$0xff]
  %v1375 = vld [vmem:[%s1345 + $0x158] sm:$0xff]
  %v1376 = vld [vmem:[%s1345 + $0x168] sm:$0xff]
  %v1377 = vld [vmem:[%s1345 + $0x170] sm:$0xff]
  %v1378 = vld [vmem:[%s1345 + $0x1b0] sm:$0xff]
  %v1379 = vld [vmem:[%s1345 + $0x1b8] sm:$0xff]
  %v1380 = vld [vmem:[%s1345 + $0x1c8] sm:$0xff]
  %v1381 = vld [vmem:[%s1345 + $0x1d0] sm:$0xff]
  %v1382 = vld [vmem:[%s1345 + $0x1e0] sm:$0xff]
  %v1383 = vld [vmem:[%s1345 + $0x1e8] sm:$0xff]
  %v1384 = vld [vmem:[%s1345 + $0x1f8] sm:$0xff]
  %v1385 = vld [vmem:[%s1345 + $0x200] sm:$0xff]
  %v1386 = vld [vmem:[%s1345 + $0x210] sm:$0xff]
  %v1387 = vld [vmem:[%s1345 + $0x218] sm:$0xff]
  %v1388 = vld [vmem:[%s1345 + $0x228] sm:$0xff]
  %v1389 = vld [vmem:[%s1345 + $0x230] sm:$0xff]
  %v1390 = vld [vmem:[%s1345 + $0x240] sm:$0xff]
  %v1391 = vld [vmem:[%s1345 + $0x248] sm:$0xff]
  %v1392 = vld [vmem:[%s1345 + $0x258] sm:$0xff]
  %v1393 = vld [vmem:[%s1345 + $0x260] sm:$0xff]
  %v1394 = vld [vmem:[%s1345 + $0x270] sm:$0xff]
  %v1395 = vld [vmem:[%s1345 + $0x278] sm:$0xff]
  %v1396 = vld [vmem:[%s1345 + $0x288] sm:$0xff]
  %v1397 = vld [vmem:[%s1345 + $0x290] sm:$0xff]
  %v1398 = vld [vmem:[%s1345 + $0x2a0] sm:$0xff]
  %v1399 = vld [vmem:[%s1345 + $0x2a8] sm:$0xff]
  %v1400 = vld [vmem:[%s1345 + $0x2b8] sm:$0xff]
  %v1401 = vld [vmem:[%s1345 + $0x2c0] sm:$0xff]
  %v1402 = vld [vmem:[%s1345 + $0x2d0] sm:$0xff]
  %v1403 = vld [vmem:[%s1345 + $0x2d8] sm:$0xff]
  %v1404 = vld [vmem:[%s1345 + $0x2e8] sm:$0xff]
  %v1405 = vld [vmem:[%s1345 + $0x2f0] sm:$0xff]
  %v1406 = vld [vmem:[%s1345 + $0x300] sm:$0xff]
  %v1407 = vld [vmem:[%s1345 + $0x308] sm:$0xff]
  %v1408 = vld [vmem:[%s1345 + $0x318] sm:$0xff]
  %v1409 = vld [vmem:[%s1345 + $0x320] sm:$0xff]
  %s1410 = scalar_lea.vmem %s1, 8
  %v1411 = vld [vmem:[%s1410] sm:$0x1]
  %v1412 = vlaneseq
  %v1413 = vshrl.u32 %v1412, 7
  %v1414 = vsub.s32 0, %v1413
  %v1415 = vrot.slane %v1411, %v1414
  %v1416 = vmul.f32 %v1346, %v1415
  %v1417 = vmul.f32 %v1347, %v1415
  %v1418 = vmul.f32 %v1348, %v1415
  %v1419 = vmul.f32 %v1349, %v1415
  %v1420 = vmul.f32 %v1350, %v1415
  %v1421 = vmul.f32 %v1351, %v1415
  %v1422 = vmul.f32 %v1352, %v1415
  %v1423 = vmul.f32 %v1353, %v1415
  %v1424 = vmul.f32 %v1354, %v1415
  %v1425 = vmul.f32 %v1355, %v1415
  %v1426 = vmul.f32 %v1356, %v1415
  %v1427 = vmul.f32 %v1357, %v1415
  %v1428 = vmul.f32 %v1358, %v1415
  %v1429 = vmul.f32 %v1359, %v1415
  %v1430 = vmul.f32 %v1360, %v1415
  %v1431 = vmul.f32 %v1361, %v1415
  %v1432 = vmul.f32 %v1362, %v1415
  %v1433 = vmul.f32 %v1363, %v1415
  %v1434 = vmul.f32 %v1364, %v1415
  %v1435 = vmul.f32 %v1365, %v1415
  %v1436 = vmul.f32 %v1366, %v1415
  %v1437 = vmul.f32 %v1367, %v1415
  %v1438 = vmul.f32 %v1368, %v1415
  %v1439 = vmul.f32 %v1369, %v1415
  %v1440 = vmul.f32 %v1370, %v1415
  %v1441 = vmul.f32 %v1371, %v1415
  %v1442 = vmul.f32 %v1372, %v1415
  %v1443 = vmul.f32 %v1373, %v1415
  %v1444 = vmul.f32 %v1374, %v1415
  %v1445 = vmul.f32 %v1375, %v1415
  %v1446 = vmul.f32 %v1376, %v1415
  %v1447 = vmul.f32 %v1377, %v1415
  %v1448 = vmul.f32 %v1378, %v1415
  %v1449 = vmul.f32 %v1379, %v1415
  %v1450 = vmul.f32 %v1380, %v1415
  %v1451 = vmul.f32 %v1381, %v1415
  %v1452 = vmul.f32 %v1382, %v1415
  %v1453 = vmul.f32 %v1383, %v1415
  %v1454 = vmul.f32 %v1384, %v1415
  %v1455 = vmul.f32 %v1385, %v1415
  %v1456 = vmul.f32 %v1386, %v1415
  %v1457 = vmul.f32 %v1387, %v1415
  %v1458 = vmul.f32 %v1388, %v1415
  %v1459 = vmul.f32 %v1389, %v1415
  %v1460 = vmul.f32 %v1390, %v1415
  %v1461 = vmul.f32 %v1391, %v1415
  %v1462 = vmul.f32 %v1392, %v1415
  %v1463 = vmul.f32 %v1393, %v1415
  %v1464 = vmul.f32 %v1394, %v1415
  %v1465 = vmul.f32 %v1395, %v1415
  %v1466 = vmul.f32 %v1396, %v1415
  %v1467 = vmul.f32 %v1397, %v1415
  %v1468 = vmul.f32 %v1398, %v1415
  %v1469 = vmul.f32 %v1399, %v1415
  %v1470 = vmul.f32 %v1400, %v1415
  %v1471 = vmul.f32 %v1401, %v1415
  %v1472 = vmul.f32 %v1402, %v1415
  %v1473 = vmul.f32 %v1403, %v1415
  %v1474 = vmul.f32 %v1404, %v1415
  %v1475 = vmul.f32 %v1405, %v1415
  %v1476 = vmul.f32 %v1406, %v1415
  %v1477 = vmul.f32 %v1407, %v1415
  %v1478 = vmul.f32 %v1408, %v1415
  %v1479 = vmul.f32 %v1409, %v1415
  %v1480 = vadd.f32 %v1281, %v1416
  %v1481 = vadd.f32 %v1282, %v1417
  %v1482 = vadd.f32 %v1283, %v1418
  %v1483 = vadd.f32 %v1284, %v1419
  %v1484 = vadd.f32 %v1285, %v1420
  %v1485 = vadd.f32 %v1286, %v1421
  %v1486 = vadd.f32 %v1287, %v1422
  %v1487 = vadd.f32 %v1288, %v1423
  %v1488 = vadd.f32 %v1289, %v1424
  %v1489 = vadd.f32 %v1290, %v1425
  %v1490 = vadd.f32 %v1291, %v1426
  %v1491 = vadd.f32 %v1292, %v1427
  %v1492 = vadd.f32 %v1293, %v1428
  %v1493 = vadd.f32 %v1294, %v1429
  %v1494 = vadd.f32 %v1295, %v1430
  %v1495 = vadd.f32 %v1296, %v1431
  %v1496 = vadd.f32 %v1297, %v1432
  %v1497 = vadd.f32 %v1298, %v1433
  %v1498 = vadd.f32 %v1299, %v1434
  %v1499 = vadd.f32 %v1300, %v1435
  %v1500 = vadd.f32 %v1301, %v1436
  %v1501 = vadd.f32 %v1302, %v1437
  %v1502 = vadd.f32 %v1303, %v1438
  %v1503 = vadd.f32 %v1304, %v1439
  %v1504 = vadd.f32 %v1305, %v1440
  %v1505 = vadd.f32 %v1306, %v1441
  %v1506 = vadd.f32 %v1307, %v1442
  %v1507 = vadd.f32 %v1308, %v1443
  %v1508 = vadd.f32 %v1309, %v1444
  %v1509 = vadd.f32 %v1310, %v1445
  %v1510 = vadd.f32 %v1311, %v1446
  %v1511 = vadd.f32 %v1312, %v1447
  %v1512 = vadd.f32 %v1313, %v1448
  %v1513 = vadd.f32 %v1314, %v1449
  %v1514 = vadd.f32 %v1315, %v1450
  %v1515 = vadd.f32 %v1316, %v1451
  %v1516 = vadd.f32 %v1317, %v1452
  %v1517 = vadd.f32 %v1318, %v1453
  %v1518 = vadd.f32 %v1319, %v1454
  %v1519 = vadd.f32 %v1320, %v1455
  %v1520 = vadd.f32 %v1321, %v1456
  %v1521 = vadd.f32 %v1322, %v1457
  %v1522 = vadd.f32 %v1323, %v1458
  %v1523 = vadd.f32 %v1324, %v1459
  %v1524 = vadd.f32 %v1325, %v1460
  %v1525 = vadd.f32 %v1326, %v1461
  %v1526 = vadd.f32 %v1327, %v1462
  %v1527 = vadd.f32 %v1328, %v1463
  %v1528 = vadd.f32 %v1329, %v1464
  %v1529 = vadd.f32 %v1330, %v1465
  %v1530 = vadd.f32 %v1331, %v1466
  %v1531 = vadd.f32 %v1332, %v1467
  %v1532 = vadd.f32 %v1333, %v1468
  %v1533 = vadd.f32 %v1334, %v1469
  %v1534 = vadd.f32 %v1335, %v1470
  %v1535 = vadd.f32 %v1336, %v1471
  %v1536 = vadd.f32 %v1337, %v1472
  %v1537 = vadd.f32 %v1338, %v1473
  %v1538 = vadd.f32 %v1339, %v1474
  %v1539 = vadd.f32 %v1340, %v1475
  %v1540 = vadd.f32 %v1341, %v1476
  %v1541 = vadd.f32 %v1342, %v1477
  %v1542 = vadd.f32 %v1343, %v1478
  %v1543 = vadd.f32 %v1344, %v1479
  %v1544 = vld [vmem:[%s1345 + $0x1] sm:$0xff]
  %v1545 = vld [vmem:[%s1345 + $0x9] sm:$0xff]
  %v1546 = vld [vmem:[%s1345 + $0x19] sm:$0xff]
  %v1547 = vld [vmem:[%s1345 + $0x21] sm:$0xff]
  %v1548 = vld [vmem:[%s1345 + $0x31] sm:$0xff]
  %v1549 = vld [vmem:[%s1345 + $0x39] sm:$0xff]
  %v1550 = vld [vmem:[%s1345 + $0x49] sm:$0xff]
  %v1551 = vld [vmem:[%s1345 + $0x51] sm:$0xff]
  %v1552 = vld [vmem:[%s1345 + $0x61] sm:$0xff]
  %v1553 = vld [vmem:[%s1345 + $0x69] sm:$0xff]
  %v1554 = vld [vmem:[%s1345 + $0x79] sm:$0xff]
  %v1555 = vld [vmem:[%s1345 + $0x81] sm:$0xff]
  %v1556 = vld [vmem:[%s1345 + $0x91] sm:$0xff]
  %v1557 = vld [vmem:[%s1345 + $0x99] sm:$0xff]
  %v1558 = vld [vmem:[%s1345 + $0xa9] sm:$0xff]
  %v1559 = vld [vmem:[%s1345 + $0xb1] sm:$0xff]
  %v1560 = vld [vmem:[%s1345 + $0xc1] sm:$0xff]
  %v1561 = vld [vmem:[%s1345 + $0xc9] sm:$0xff]
  %v1562 = vld [vmem:[%s1345 + $0xd9] sm:$0xff]
  %v1563 = vld [vmem:[%s1345 + $0xe1] sm:$0xff]
  %v1564 = vld [vmem:[%s1345 + $0xf1] sm:$0xff]
  %v1565 = vld [vmem:[%s1345 + $0xf9] sm:$0xff]
  %v1566 = vld [vmem:[%s1345 + $0x109] sm:$0xff]
  %v1567 = vld [vmem:[%s1345 + $0x111] sm:$0xff]
  %v1568 = vld [vmem:[%s1345 + $0x121] sm:$0xff]
  %v1569 = vld [vmem:[%s1345 + $0x129] sm:$0xff]
  %v1570 = vld [vmem:[%s1345 + $0x139] sm:$0xff]
  %v1571 = vld [vmem:[%s1345 + $0x141] sm:$0xff]
  %v1572 = vld [vmem:[%s1345 + $0x151] sm:$0xff]
  %v1573 = vld [vmem:[%s1345 + $0x159] sm:$0xff]
  %v1574 = vld [vmem:[%s1345 + $0x169] sm:$0xff]
  %v1575 = vld [vmem:[%s1345 + $0x171] sm:$0xff]
  %v1576 = vld [vmem:[%s1345 + $0x1b1] sm:$0xff]
  %v1577 = vld [vmem:[%s1345 + $0x1b9] sm:$0xff]
  %v1578 = vld [vmem:[%s1345 + $0x1c9] sm:$0xff]
  %v1579 = vld [vmem:[%s1345 + $0x1d1] sm:$0xff]
  %v1580 = vld [vmem:[%s1345 + $0x1e1] sm:$0xff]
  %v1581 = vld [vmem:[%s1345 + $0x1e9] sm:$0xff]
  %v1582 = vld [vmem:[%s1345 + $0x1f9] sm:$0xff]
  %v1583 = vld [vmem:[%s1345 + $0x201] sm:$0xff]
  %v1584 = vld [vmem:[%s1345 + $0x211] sm:$0xff]
  %v1585 = vld [vmem:[%s1345 + $0x219] sm:$0xff]
  %v1586 = vld [vmem:[%s1345 + $0x229] sm:$0xff]
  %v1587 = vld [vmem:[%s1345 + $0x231] sm:$0xff]
  %v1588 = vld [vmem:[%s1345 + $0x241] sm:$0xff]
  %v1589 = vld [vmem:[%s1345 + $0x249] sm:$0xff]
  %v1590 = vld [vmem:[%s1345 + $0x259] sm:$0xff]
  %v1591 = vld [vmem:[%s1345 + $0x261] sm:$0xff]
  %v1592 = vld [vmem:[%s1345 + $0x271] sm:$0xff]
  %v1593 = vld [vmem:[%s1345 + $0x279] sm:$0xff]
  %v1594 = vld [vmem:[%s1345 + $0x289] sm:$0xff]
  %v1595 = vld [vmem:[%s1345 + $0x291] sm:$0xff]
  %v1596 = vld [vmem:[%s1345 + $0x2a1] sm:$0xff]
  %v1597 = vld [vmem:[%s1345 + $0x2a9] sm:$0xff]
  %v1598 = vld [vmem:[%s1345 + $0x2b9] sm:$0xff]
  %v1599 = vld [vmem:[%s1345 + $0x2c1] sm:$0xff]
  %v1600 = vld [vmem:[%s1345 + $0x2d1] sm:$0xff]
  %v1601 = vld [vmem:[%s1345 + $0x2d9] sm:$0xff]
  %v1602 = vld [vmem:[%s1345 + $0x2e9] sm:$0xff]
  %v1603 = vld [vmem:[%s1345 + $0x2f1] sm:$0xff]
  %v1604 = vld [vmem:[%s1345 + $0x301] sm:$0xff]
  %v1605 = vld [vmem:[%s1345 + $0x309] sm:$0xff]
  %v1606 = vld [vmem:[%s1345 + $0x319] sm:$0xff]
  %v1607 = vld [vmem:[%s1345 + $0x321] sm:$0xff]
  %v1608 = vld [vmem:[%s1410 + $0x1] sm:$0x1]
  %v1609 = vlaneseq
  %v1610 = vshrl.u32 %v1609, 7
  %v1611 = vsub.s32 0, %v1610
  %v1612 = vrot.slane %v1608, %v1611
  %v1613 = vmul.f32 %v1544, %v1612
  %v1614 = vmul.f32 %v1545, %v1612
  %v1615 = vmul.f32 %v1546, %v1612
  %v1616 = vmul.f32 %v1547, %v1612
  %v1617 = vmul.f32 %v1548, %v1612
  %v1618 = vmul.f32 %v1549, %v1612
  %v1619 = vmul.f32 %v1550, %v1612
  %v1620 = vmul.f32 %v1551, %v1612
  %v1621 = vmul.f32 %v1552, %v1612
  %v1622 = vmul.f32 %v1553, %v1612
  %v1623 = vmul.f32 %v1554, %v1612
  %v1624 = vmul.f32 %v1555, %v1612
  %v1625 = vmul.f32 %v1556, %v1612
  %v1626 = vmul.f32 %v1557, %v1612
  %v1627 = vmul.f32 %v1558, %v1612
  %v1628 = vmul.f32 %v1559, %v1612
  %v1629 = vmul.f32 %v1560, %v1612
  %v1630 = vmul.f32 %v1561, %v1612
  %v1631 = vmul.f32 %v1562, %v1612
  %v1632 = vmul.f32 %v1563, %v1612
  %v1633 = vmul.f32 %v1564, %v1612
  %v1634 = vmul.f32 %v1565, %v1612
  %v1635 = vmul.f32 %v1566, %v1612
  %v1636 = vmul.f32 %v1567, %v1612
  %v1637 = vmul.f32 %v1568, %v1612
  %v1638 = vmul.f32 %v1569, %v1612
  %v1639 = vmul.f32 %v1570, %v1612
  %v1640 = vmul.f32 %v1571, %v1612
  %v1641 = vmul.f32 %v1572, %v1612
  %v1642 = vmul.f32 %v1573, %v1612
  %v1643 = vmul.f32 %v1574, %v1612
  %v1644 = vmul.f32 %v1575, %v1612
  %v1645 = vmul.f32 %v1576, %v1612
  %v1646 = vmul.f32 %v1577, %v1612
  %v1647 = vmul.f32 %v1578, %v1612
  %v1648 = vmul.f32 %v1579, %v1612
  %v1649 = vmul.f32 %v1580, %v1612
  %v1650 = vmul.f32 %v1581, %v1612
  %v1651 = vmul.f32 %v1582, %v1612
  %v1652 = vmul.f32 %v1583, %v1612
  %v1653 = vmul.f32 %v1584, %v1612
  %v1654 = vmul.f32 %v1585, %v1612
  %v1655 = vmul.f32 %v1586, %v1612
  %v1656 = vmul.f32 %v1587, %v1612
  %v1657 = vmul.f32 %v1588, %v1612
  %v1658 = vmul.f32 %v1589, %v1612
  %v1659 = vmul.f32 %v1590, %v1612
  %v1660 = vmul.f32 %v1591, %v1612
  %v1661 = vmul.f32 %v1592, %v1612
  %v1662 = vmul.f32 %v1593, %v1612
  %v1663 = vmul.f32 %v1594, %v1612
  %v1664 = vmul.f32 %v1595, %v1612
  %v1665 = vmul.f32 %v1596, %v1612
  %v1666 = vmul.f32 %v1597, %v1612
  %v1667 = vmul.f32 %v1598, %v1612
  %v1668 = vmul.f32 %v1599, %v1612
  %v1669 = vmul.f32 %v1600, %v1612
  %v1670 = vmul.f32 %v1601, %v1612
  %v1671 = vmul.f32 %v1602, %v1612
  %v1672 = vmul.f32 %v1603, %v1612
  %v1673 = vmul.f32 %v1604, %v1612
  %v1674 = vmul.f32 %v1605, %v1612
  %v1675 = vmul.f32 %v1606, %v1612
  %v1676 = vmul.f32 %v1607, %v1612
  %v1677 = vadd.f32 %v1480, %v1613
  %v1678 = vadd.f32 %v1481, %v1614
  %v1679 = vadd.f32 %v1482, %v1615
  %v1680 = vadd.f32 %v1483, %v1616
  %v1681 = vadd.f32 %v1484, %v1617
  %v1682 = vadd.f32 %v1485, %v1618
  %v1683 = vadd.f32 %v1486, %v1619
  %v1684 = vadd.f32 %v1487, %v1620
  %v1685 = vadd.f32 %v1488, %v1621
  %v1686 = vadd.f32 %v1489, %v1622
  %v1687 = vadd.f32 %v1490, %v1623
  %v1688 = vadd.f32 %v1491, %v1624
  %v1689 = vadd.f32 %v1492, %v1625
  %v1690 = vadd.f32 %v1493, %v1626
  %v1691 = vadd.f32 %v1494, %v1627
  %v1692 = vadd.f32 %v1495, %v1628
  %v1693 = vadd.f32 %v1496, %v1629
  %v1694 = vadd.f32 %v1497, %v1630
  %v1695 = vadd.f32 %v1498, %v1631
  %v1696 = vadd.f32 %v1499, %v1632
  %v1697 = vadd.f32 %v1500, %v1633
  %v1698 = vadd.f32 %v1501, %v1634
  %v1699 = vadd.f32 %v1502, %v1635
  %v1700 = vadd.f32 %v1503, %v1636
  %v1701 = vadd.f32 %v1504, %v1637
  %v1702 = vadd.f32 %v1505, %v1638
  %v1703 = vadd.f32 %v1506, %v1639
  %v1704 = vadd.f32 %v1507, %v1640
  %v1705 = vadd.f32 %v1508, %v1641
  %v1706 = vadd.f32 %v1509, %v1642
  %v1707 = vadd.f32 %v1510, %v1643
  %v1708 = vadd.f32 %v1511, %v1644
  %v1709 = vadd.f32 %v1512, %v1645
  %v1710 = vadd.f32 %v1513, %v1646
  %v1711 = vadd.f32 %v1514, %v1647
  %v1712 = vadd.f32 %v1515, %v1648
  %v1713 = vadd.f32 %v1516, %v1649
  %v1714 = vadd.f32 %v1517, %v1650
  %v1715 = vadd.f32 %v1518, %v1651
  %v1716 = vadd.f32 %v1519, %v1652
  %v1717 = vadd.f32 %v1520, %v1653
  %v1718 = vadd.f32 %v1521, %v1654
  %v1719 = vadd.f32 %v1522, %v1655
  %v1720 = vadd.f32 %v1523, %v1656
  %v1721 = vadd.f32 %v1524, %v1657
  %v1722 = vadd.f32 %v1525, %v1658
  %v1723 = vadd.f32 %v1526, %v1659
  %v1724 = vadd.f32 %v1527, %v1660
  %v1725 = vadd.f32 %v1528, %v1661
  %v1726 = vadd.f32 %v1529, %v1662
  %v1727 = vadd.f32 %v1530, %v1663
  %v1728 = vadd.f32 %v1531, %v1664
  %v1729 = vadd.f32 %v1532, %v1665
  %v1730 = vadd.f32 %v1533, %v1666
  %v1731 = vadd.f32 %v1534, %v1667
  %v1732 = vadd.f32 %v1535, %v1668
  %v1733 = vadd.f32 %v1536, %v1669
  %v1734 = vadd.f32 %v1537, %v1670
  %v1735 = vadd.f32 %v1538, %v1671
  %v1736 = vadd.f32 %v1539, %v1672
  %v1737 = vadd.f32 %v1540, %v1673
  %v1738 = vadd.f32 %v1541, %v1674
  %v1739 = vadd.f32 %v1542, %v1675
  %v1740 = vadd.f32 %v1543, %v1676
  %v1741 = vld [vmem:[%s1345 + $0x2] sm:$0xff]
  %v1742 = vld [vmem:[%s1345 + $0xa] sm:$0xff]
  %v1743 = vld [vmem:[%s1345 + $0x1a] sm:$0xff]
  %v1744 = vld [vmem:[%s1345 + $0x22] sm:$0xff]
  %v1745 = vld [vmem:[%s1345 + $0x32] sm:$0xff]
  %v1746 = vld [vmem:[%s1345 + $0x3a] sm:$0xff]
  %v1747 = vld [vmem:[%s1345 + $0x4a] sm:$0xff]
  %v1748 = vld [vmem:[%s1345 + $0x52] sm:$0xff]
  %v1749 = vld [vmem:[%s1345 + $0x62] sm:$0xff]
  %v1750 = vld [vmem:[%s1345 + $0x6a] sm:$0xff]
  %v1751 = vld [vmem:[%s1345 + $0x7a] sm:$0xff]
  %v1752 = vld [vmem:[%s1345 + $0x82] sm:$0xff]
  %v1753 = vld [vmem:[%s1345 + $0x92] sm:$0xff]
  %v1754 = vld [vmem:[%s1345 + $0x9a] sm:$0xff]
  %v1755 = vld [vmem:[%s1345 + $0xaa] sm:$0xff]
  %v1756 = vld [vmem:[%s1345 + $0xb2] sm:$0xff]
  %v1757 = vld [vmem:[%s1345 + $0xc2] sm:$0xff]
  %v1758 = vld [vmem:[%s1345 + $0xca] sm:$0xff]
  %v1759 = vld [vmem:[%s1345 + $0xda] sm:$0xff]
  %v1760 = vld [vmem:[%s1345 + $0xe2] sm:$0xff]
  %v1761 = vld [vmem:[%s1345 + $0xf2] sm:$0xff]
  %v1762 = vld [vmem:[%s1345 + $0xfa] sm:$0xff]
  %v1763 = vld [vmem:[%s1345 + $0x10a] sm:$0xff]
  %v1764 = vld [vmem:[%s1345 + $0x112] sm:$0xff]
  %v1765 = vld [vmem:[%s1345 + $0x122] sm:$0xff]
  %v1766 = vld [vmem:[%s1345 + $0x12a] sm:$0xff]
  %v1767 = vld [vmem:[%s1345 + $0x13a] sm:$0xff]
  %v1768 = vld [vmem:[%s1345 + $0x142] sm:$0xff]
  %v1769 = vld [vmem:[%s1345 + $0x152] sm:$0xff]
  %v1770 = vld [vmem:[%s1345 + $0x15a] sm:$0xff]
  %v1771 = vld [vmem:[%s1345 + $0x16a] sm:$0xff]
  %v1772 = vld [vmem:[%s1345 + $0x172] sm:$0xff]
  %v1773 = vld [vmem:[%s1345 + $0x1b2] sm:$0xff]
  %v1774 = vld [vmem:[%s1345 + $0x1ba] sm:$0xff]
  %v1775 = vld [vmem:[%s1345 + $0x1ca] sm:$0xff]
  %v1776 = vld [vmem:[%s1345 + $0x1d2] sm:$0xff]
  %v1777 = vld [vmem:[%s1345 + $0x1e2] sm:$0xff]
  %v1778 = vld [vmem:[%s1345 + $0x1ea] sm:$0xff]
  %v1779 = vld [vmem:[%s1345 + $0x1fa] sm:$0xff]
  %v1780 = vld [vmem:[%s1345 + $0x202] sm:$0xff]
  %v1781 = vld [vmem:[%s1345 + $0x212] sm:$0xff]
  %v1782 = vld [vmem:[%s1345 + $0x21a] sm:$0xff]
  %v1783 = vld [vmem:[%s1345 + $0x22a] sm:$0xff]
  %v1784 = vld [vmem:[%s1345 + $0x232] sm:$0xff]
  %v1785 = vld [vmem:[%s1345 + $0x242] sm:$0xff]
  %v1786 = vld [vmem:[%s1345 + $0x24a] sm:$0xff]
  %v1787 = vld [vmem:[%s1345 + $0x25a] sm:$0xff]
  %v1788 = vld [vmem:[%s1345 + $0x262] sm:$0xff]
  %v1789 = vld [vmem:[%s1345 + $0x272] sm:$0xff]
  %v1790 = vld [vmem:[%s1345 + $0x27a] sm:$0xff]
  %v1791 = vld [vmem:[%s1345 + $0x28a] sm:$0xff]
  %v1792 = vld [vmem:[%s1345 + $0x292] sm:$0xff]
  %v1793 = vld [vmem:[%s1345 + $0x2a2] sm:$0xff]
  %v1794 = vld [vmem:[%s1345 + $0x2aa] sm:$0xff]
  %v1795 = vld [vmem:[%s1345 + $0x2ba] sm:$0xff]
  %v1796 = vld [vmem:[%s1345 + $0x2c2] sm:$0xff]
  %v1797 = vld [vmem:[%s1345 + $0x2d2] sm:$0xff]
  %v1798 = vld [vmem:[%s1345 + $0x2da] sm:$0xff]
  %v1799 = vld [vmem:[%s1345 + $0x2ea] sm:$0xff]
  %v1800 = vld [vmem:[%s1345 + $0x2f2] sm:$0xff]
  %v1801 = vld [vmem:[%s1345 + $0x302] sm:$0xff]
  %v1802 = vld [vmem:[%s1345 + $0x30a] sm:$0xff]
  %v1803 = vld [vmem:[%s1345 + $0x31a] sm:$0xff]
  %v1804 = vld [vmem:[%s1345 + $0x322] sm:$0xff]
  %v1805 = vld [vmem:[%s1410 + $0x2] sm:$0x1]
  %v1806 = vlaneseq
  %v1807 = vshrl.u32 %v1806, 7
  %v1808 = vsub.s32 0, %v1807
  %v1809 = vrot.slane %v1805, %v1808
  %v1810 = vmul.f32 %v1741, %v1809
  %v1811 = vmul.f32 %v1742, %v1809
  %v1812 = vmul.f32 %v1743, %v1809
  %v1813 = vmul.f32 %v1744, %v1809
  %v1814 = vmul.f32 %v1745, %v1809
  %v1815 = vmul.f32 %v1746, %v1809
  %v1816 = vmul.f32 %v1747, %v1809
  %v1817 = vmul.f32 %v1748, %v1809
  %v1818 = vmul.f32 %v1749, %v1809
  %v1819 = vmul.f32 %v1750, %v1809
  %v1820 = vmul.f32 %v1751, %v1809
  %v1821 = vmul.f32 %v1752, %v1809
  %v1822 = vmul.f32 %v1753, %v1809
  %v1823 = vmul.f32 %v1754, %v1809
  %v1824 = vmul.f32 %v1755, %v1809
  %v1825 = vmul.f32 %v1756, %v1809
  %v1826 = vmul.f32 %v1757, %v1809
  %v1827 = vmul.f32 %v1758, %v1809
  %v1828 = vmul.f32 %v1759, %v1809
  %v1829 = vmul.f32 %v1760, %v1809
  %v1830 = vmul.f32 %v1761, %v1809
  %v1831 = vmul.f32 %v1762, %v1809
  %v1832 = vmul.f32 %v1763, %v1809
  %v1833 = vmul.f32 %v1764, %v1809
  %v1834 = vmul.f32 %v1765, %v1809
  %v1835 = vmul.f32 %v1766, %v1809
  %v1836 = vmul.f32 %v1767, %v1809
  %v1837 = vmul.f32 %v1768, %v1809
  %v1838 = vmul.f32 %v1769, %v1809
  %v1839 = vmul.f32 %v1770, %v1809
  %v1840 = vmul.f32 %v1771, %v1809
  %v1841 = vmul.f32 %v1772, %v1809
  %v1842 = vmul.f32 %v1773, %v1809
  %v1843 = vmul.f32 %v1774, %v1809
  %v1844 = vmul.f32 %v1775, %v1809
  %v1845 = vmul.f32 %v1776, %v1809
  %v1846 = vmul.f32 %v1777, %v1809
  %v1847 = vmul.f32 %v1778, %v1809
  %v1848 = vmul.f32 %v1779, %v1809
  %v1849 = vmul.f32 %v1780, %v1809
  %v1850 = vmul.f32 %v1781, %v1809
  %v1851 = vmul.f32 %v1782, %v1809
  %v1852 = vmul.f32 %v1783, %v1809
  %v1853 = vmul.f32 %v1784, %v1809
  %v1854 = vmul.f32 %v1785, %v1809
  %v1855 = vmul.f32 %v1786, %v1809
  %v1856 = vmul.f32 %v1787, %v1809
  %v1857 = vmul.f32 %v1788, %v1809
  %v1858 = vmul.f32 %v1789, %v1809
  %v1859 = vmul.f32 %v1790, %v1809
  %v1860 = vmul.f32 %v1791, %v1809
  %v1861 = vmul.f32 %v1792, %v1809
  %v1862 = vmul.f32 %v1793, %v1809
  %v1863 = vmul.f32 %v1794, %v1809
  %v1864 = vmul.f32 %v1795, %v1809
  %v1865 = vmul.f32 %v1796, %v1809
  %v1866 = vmul.f32 %v1797, %v1809
  %v1867 = vmul.f32 %v1798, %v1809
  %v1868 = vmul.f32 %v1799, %v1809
  %v1869 = vmul.f32 %v1800, %v1809
  %v1870 = vmul.f32 %v1801, %v1809
  %v1871 = vmul.f32 %v1802, %v1809
  %v1872 = vmul.f32 %v1803, %v1809
  %v1873 = vmul.f32 %v1804, %v1809
  %v1874 = vadd.f32 %v1677, %v1810
  %v1875 = vadd.f32 %v1678, %v1811
  %v1876 = vadd.f32 %v1679, %v1812
  %v1877 = vadd.f32 %v1680, %v1813
  %v1878 = vadd.f32 %v1681, %v1814
  %v1879 = vadd.f32 %v1682, %v1815
  %v1880 = vadd.f32 %v1683, %v1816
  %v1881 = vadd.f32 %v1684, %v1817
  %v1882 = vadd.f32 %v1685, %v1818
  %v1883 = vadd.f32 %v1686, %v1819
  %v1884 = vadd.f32 %v1687, %v1820
  %v1885 = vadd.f32 %v1688, %v1821
  %v1886 = vadd.f32 %v1689, %v1822
  %v1887 = vadd.f32 %v1690, %v1823
  %v1888 = vadd.f32 %v1691, %v1824
  %v1889 = vadd.f32 %v1692, %v1825
  %v1890 = vadd.f32 %v1693, %v1826
  %v1891 = vadd.f32 %v1694, %v1827
  %v1892 = vadd.f32 %v1695, %v1828
  %v1893 = vadd.f32 %v1696, %v1829
  %v1894 = vadd.f32 %v1697, %v1830
  %v1895 = vadd.f32 %v1698, %v1831
  %v1896 = vadd.f32 %v1699, %v1832
  %v1897 = vadd.f32 %v1700, %v1833
  %v1898 = vadd.f32 %v1701, %v1834
  %v1899 = vadd.f32 %v1702, %v1835
  %v1900 = vadd.f32 %v1703, %v1836
  %v1901 = vadd.f32 %v1704, %v1837
  %v1902 = vadd.f32 %v1705, %v1838
  %v1903 = vadd.f32 %v1706, %v1839
  %v1904 = vadd.f32 %v1707, %v1840
  %v1905 = vadd.f32 %v1708, %v1841
  %v1906 = vadd.f32 %v1709, %v1842
  %v1907 = vadd.f32 %v1710, %v1843
  %v1908 = vadd.f32 %v1711, %v1844
  %v1909 = vadd.f32 %v1712, %v1845
  %v1910 = vadd.f32 %v1713, %v1846
  %v1911 = vadd.f32 %v1714, %v1847
  %v1912 = vadd.f32 %v1715, %v1848
  %v1913 = vadd.f32 %v1716, %v1849
  %v1914 = vadd.f32 %v1717, %v1850
  %v1915 = vadd.f32 %v1718, %v1851
  %v1916 = vadd.f32 %v1719, %v1852
  %v1917 = vadd.f32 %v1720, %v1853
  %v1918 = vadd.f32 %v1721, %v1854
  %v1919 = vadd.f32 %v1722, %v1855
  %v1920 = vadd.f32 %v1723, %v1856
  %v1921 = vadd.f32 %v1724, %v1857
  %v1922 = vadd.f32 %v1725, %v1858
  %v1923 = vadd.f32 %v1726, %v1859
  %v1924 = vadd.f32 %v1727, %v1860
  %v1925 = vadd.f32 %v1728, %v1861
  %v1926 = vadd.f32 %v1729, %v1862
  %v1927 = vadd.f32 %v1730, %v1863
  %v1928 = vadd.f32 %v1731, %v1864
  %v1929 = vadd.f32 %v1732, %v1865
  %v1930 = vadd.f32 %v1733, %v1866
  %v1931 = vadd.f32 %v1734, %v1867
  %v1932 = vadd.f32 %v1735, %v1868
  %v1933 = vadd.f32 %v1736, %v1869
  %v1934 = vadd.f32 %v1737, %v1870
  %v1935 = vadd.f32 %v1738, %v1871
  %v1936 = vadd.f32 %v1739, %v1872
  %v1937 = vadd.f32 %v1740, %v1873
  %v1938 = vld [vmem:[%s2] sm:$0xff]
  %v1940 = vsel %vm17, %v1874, 0
  %v1943 = vsel %vm17, %v1875, 0
  %v1946 = vsel %vm17, %v1876, 0
  %v1949 = vsel %vm17, %v1877, 0
  %v1952 = vsel %vm17, %v1878, 0
  %v1955 = vsel %vm17, %v1879, 0
  %v1958 = vsel %vm17, %v1880, 0
  %v1961 = vsel %vm17, %v1881, 0
  %v1964 = vsel %vm17, %v1882, 0
  %v1967 = vsel %vm17, %v1883, 0
  %v1970 = vsel %vm17, %v1884, 0
  %v1973 = vsel %vm17, %v1885, 0
  %v1976 = vsel %vm17, %v1886, 0
  %v1979 = vsel %vm17, %v1887, 0
  %v1982 = vsel %vm17, %v1888, 0
  %v1985 = vsel %vm17, %v1889, 0
  %v1988 = vsel %vm17, %v1890, 0
  %v1991 = vsel %vm17, %v1891, 0
  %v1994 = vsel %vm17, %v1892, 0
  %v1997 = vsel %vm17, %v1893, 0
  %v2000 = vsel %vm17, %v1894, 0
  %v2003 = vsel %vm17, %v1895, 0
  %v2006 = vsel %vm17, %v1896, 0
  %v2009 = vsel %vm17, %v1897, 0
  %v2012 = vsel %vm17, %v1898, 0
  %v2015 = vsel %vm17, %v1899, 0
  %v2018 = vsel %vm17, %v1900, 0
  %v2021 = vsel %vm17, %v1901, 0
  %v2024 = vsel %vm17, %v1902, 0
  %v2027 = vsel %vm17, %v1903, 0
  %v2030 = vsel %vm17, %v1904, 0
  %v2033 = vsel %vm17, %v1905, 0
  %v2036 = vsel %vm17, %v1906, 0
  %v2039 = vsel %vm17, %v1907, 0
  %v2042 = vsel %vm17, %v1908, 0
  %v2045 = vsel %vm17, %v1909, 0
  %v2048 = vsel %vm17, %v1910, 0
  %v2051 = vsel %vm17, %v1911, 0
  %v2054 = vsel %vm17, %v1912, 0
  %v2057 = vsel %vm17, %v1913, 0
  %v2060 = vsel %vm17, %v1914, 0
  %v2063 = vsel %vm17, %v1915, 0
  %v2066 = vsel %vm17, %v1916, 0
  %v2069 = vsel %vm17, %v1917, 0
  %v2072 = vsel %vm17, %v1918, 0
  %v2075 = vsel %vm17, %v1919, 0
  %v2078 = vsel %vm17, %v1920, 0
  %v2081 = vsel %vm17, %v1921, 0
  %v2084 = vsel %vm17, %v1922, 0
  %v2087 = vsel %vm17, %v1923, 0
  %v2090 = vsel %vm17, %v1924, 0
  %v2093 = vsel %vm17, %v1925, 0
  %v2096 = vsel %vm17, %v1926, 0
  %v2099 = vsel %vm17, %v1927, 0
  %v2102 = vsel %vm17, %v1928, 0
  %v2105 = vsel %vm17, %v1929, 0
  %v2108 = vsel %vm17, %v1930, 0
  %v2111 = vsel %vm17, %v1931, 0
  %v2114 = vsel %vm17, %v1932, 0
  %v2117 = vsel %vm17, %v1933, 0
  %v2120 = vsel %vm17, %v1934, 0
  %v2123 = vsel %vm17, %v1935, 0
  %v2126 = vsel %vm17, %v1936, 0
  %v2129 = vsel %vm17, %v1937, 0
  %2131 = vmatprep.subr.mxu0 0.0
  %2132 = vmatpush1.msra.mxu0 0.0
  %2133 = vmatprep.subr.mxu0 0.0
  %2134 = vmatpush1.msra.mxu0 0.0
  %2135 = vmatprep.subr.mxu0 0.0
  %2136 = vmatpush1.msra.mxu0 0.0
  %2137 = vmatprep.subr.mxu0 0.0
  %2138 = vmatpush1.msra.mxu0 0.0
  %2139 = vmatprep.subr.mxu0 0.0
  %2140 = vmatpush1.msra.mxu0 0.0
  %2141 = vmatprep.subr.mxu0 0.0
  %2142 = vmatpush1.msra.mxu0 0.0
  %2143 = vmatprep.subr.mxu0 0.0
  %2144 = vmatpush1.msra.mxu0 0.0
  %2145 = vmatprep.subr.mxu0 0.0
  %2146 = vmatpush1.msra.mxu0 0.0
  %2147 = vmatprep.subr.mxu0 0.0
  %2148 = vmatpush1.msra.mxu0 0.0
  %2149 = vmatprep.subr.mxu0 0.0
  %2150 = vmatpush1.msra.mxu0 0.0
  %2151 = vmatprep.subr.mxu0 0.0
  %2152 = vmatpush1.msra.mxu0 0.0
  %2153 = vmatprep.subr.mxu0 0.0
  %2154 = vmatpush1.msra.mxu0 0.0
  %2155 = vmatprep.subr.mxu0 0.0
  %2156 = vmatpush1.msra.mxu0 0.0
  %2157 = vmatprep.subr.mxu0 0.0
  %2158 = vmatpush1.msra.mxu0 0.0
  %2159 = vmatprep.subr.mxu0 0.0
  %2160 = vmatpush1.msra.mxu0 0.0
  %2161 = vmatprep.subr.mxu0 0.0
  %2162 = vmatpush1.msra.mxu0 %v1938
  %2163 = vmatprep.subr.mxu0 0.0
  %2164 = vmatpush2.msra.mxu0 0.0
  %2165 = vmatprep.subr.mxu0 0.0
  %2166 = vmatpush2.msra.mxu0 0.0
  %2167 = vmatprep.subr.mxu0 0.0
  %2168 = vmatpush2.msra.mxu0 0.0
  %2169 = vmatprep.subr.mxu0 0.0
  %2170 = vmatpush2.msra.mxu0 0.0
  %2171 = vmatprep.subr.mxu0 0.0
  %2172 = vmatpush2.msra.mxu0 0.0
  %2173 = vmatprep.subr.mxu0 0.0
  %2174 = vmatpush2.msra.mxu0 0.0
  %2175 = vmatprep.subr.mxu0 0.0
  %2176 = vmatpush2.msra.mxu0 0.0
  %2177 = vmatprep.subr.mxu0 0.0
  %2178 = vmatpush2.msra.mxu0 0.0
  %2179 = vmatprep.subr.mxu0 0.0
  %2180 = vmatpush2.msra.mxu0 0.0
  %2181 = vmatprep.subr.mxu0 0.0
  %2182 = vmatpush2.msra.mxu0 0.0
  %2183 = vmatprep.subr.mxu0 0.0
  %2184 = vmatpush2.msra.mxu0 0.0
  %2185 = vmatprep.subr.mxu0 0.0
  %2186 = vmatpush2.msra.mxu0 0.0
  %2187 = vmatprep.subr.mxu0 0.0
  %2188 = vmatpush2.msra.mxu0 0.0
  %2189 = vmatprep.subr.mxu0 0.0
  %2190 = vmatpush2.msra.mxu0 0.0
  %2191 = vmatprep.subr.mxu0 0.0
  %2192 = vmatpush2.msra.mxu0 0.0
  %2193 = vmatprep.subr.mxu0 0.0
  %2194 = vmatpush2.msra.mxu0 0.0
  %2195 = vmatprep.mubr.f32.mxu0 0.0
  %2196 = vmatmul.mubr.f32.gmra.mxu0 %v1940
  %v2197 = vpop.f32.mrf.mxu0
  %v2198 = vadd.f32 0.0, %v2197
  %v2199 = vpop.f32.mrf.mxu0
  %2200 = vmatprep.mubr.f32.mxu0 0.0
  %2201 = vmatmul.mubr.f32.gmra.mxu0 %v1943
  %v2202 = vpop.f32.mrf.mxu0
  %v2203 = vadd.f32 0.0, %v2202
  %v2204 = vpop.f32.mrf.mxu0
  %2205 = vmatprep.mubr.f32.mxu0 0.0
  %2206 = vmatmul.mubr.f32.gmra.mxu0 %v1946
  %v2207 = vpop.f32.mrf.mxu0
  %v2208 = vadd.f32 0.0, %v2207
  %v2209 = vpop.f32.mrf.mxu0
  %2210 = vmatprep.mubr.f32.mxu0 0.0
  %2211 = vmatmul.mubr.f32.gmra.mxu0 %v1949
  %v2212 = vpop.f32.mrf.mxu0
  %v2213 = vadd.f32 0.0, %v2212
  %v2214 = vpop.f32.mrf.mxu0
  %2215 = vmatprep.mubr.f32.mxu0 0.0
  %2216 = vmatmul.mubr.f32.gmra.mxu0 %v1952
  %v2217 = vpop.f32.mrf.mxu0
  %v2218 = vadd.f32 0.0, %v2217
  %v2219 = vpop.f32.mrf.mxu0
  %2220 = vmatprep.mubr.f32.mxu0 0.0
  %2221 = vmatmul.mubr.f32.gmra.mxu0 %v1955
  %v2222 = vpop.f32.mrf.mxu0
  %v2223 = vadd.f32 0.0, %v2222
  %v2224 = vpop.f32.mrf.mxu0
  %2225 = vmatprep.mubr.f32.mxu0 0.0
  %2226 = vmatmul.mubr.f32.gmra.mxu0 %v1958
  %v2227 = vpop.f32.mrf.mxu0
  %v2228 = vadd.f32 0.0, %v2227
  %v2229 = vpop.f32.mrf.mxu0
  %2230 = vmatprep.mubr.f32.mxu0 0.0
  %2231 = vmatmul.mubr.f32.gmra.mxu0 %v1961
  %v2232 = vpop.f32.mrf.mxu0
  %v2233 = vadd.f32 0.0, %v2232
  %v2234 = vpop.f32.mrf.mxu0
  %2235 = vmatprep.mubr.f32.mxu0 0.0
  %2236 = vmatmul.mubr.f32.gmra.mxu0 %v1964
  %v2237 = vpop.f32.mrf.mxu0
  %v2238 = vadd.f32 0.0, %v2237
  %v2239 = vpop.f32.mrf.mxu0
  %2240 = vmatprep.mubr.f32.mxu0 0.0
  %2241 = vmatmul.mubr.f32.gmra.mxu0 %v1967
  %v2242 = vpop.f32.mrf.mxu0
  %v2243 = vadd.f32 0.0, %v2242
  %v2244 = vpop.f32.mrf.mxu0
  %2245 = vmatprep.mubr.f32.mxu0 0.0
  %2246 = vmatmul.mubr.f32.gmra.mxu0 %v1970
  %v2247 = vpop.f32.mrf.mxu0
  %v2248 = vadd.f32 0.0, %v2247
  %v2249 = vpop.f32.mrf.mxu0
  %2250 = vmatprep.mubr.f32.mxu0 0.0
  %2251 = vmatmul.mubr.f32.gmra.mxu0 %v1973
  %v2252 = vpop.f32.mrf.mxu0
  %v2253 = vadd.f32 0.0, %v2252
  %v2254 = vpop.f32.mrf.mxu0
  %2255 = vmatprep.mubr.f32.mxu0 0.0
  %2256 = vmatmul.mubr.f32.gmra.mxu0 %v1976
  %v2257 = vpop.f32.mrf.mxu0
  %v2258 = vadd.f32 0.0, %v2257
  %v2259 = vpop.f32.mrf.mxu0
  %2260 = vmatprep.mubr.f32.mxu0 0.0
  %2261 = vmatmul.mubr.f32.gmra.mxu0 %v1979
  %v2262 = vpop.f32.mrf.mxu0
  %v2263 = vadd.f32 0.0, %v2262
  %v2264 = vpop.f32.mrf.mxu0
  %2265 = vmatprep.mubr.f32.mxu0 0.0
  %2266 = vmatmul.mubr.f32.gmra.mxu0 %v1982
  %v2267 = vpop.f32.mrf.mxu0
  %v2268 = vadd.f32 0.0, %v2267
  %v2269 = vpop.f32.mrf.mxu0
  %2270 = vmatprep.mubr.f32.mxu0 0.0
  %2271 = vmatmul.mubr.f32.gmra.mxu0 %v1985
  %v2272 = vpop.f32.mrf.mxu0
  %v2273 = vadd.f32 0.0, %v2272
  %v2274 = vpop.f32.mrf.mxu0
  %2275 = vmatprep.mubr.f32.mxu0 0.0
  %2276 = vmatmul.mubr.f32.gmra.mxu0 %v1988
  %v2277 = vpop.f32.mrf.mxu0
  %v2278 = vadd.f32 0.0, %v2277
  %v2279 = vpop.f32.mrf.mxu0
  %2280 = vmatprep.mubr.f32.mxu0 0.0
  %2281 = vmatmul.mubr.f32.gmra.mxu0 %v1991
  %v2282 = vpop.f32.mrf.mxu0
  %v2283 = vadd.f32 0.0, %v2282
  %v2284 = vpop.f32.mrf.mxu0
  %2285 = vmatprep.mubr.f32.mxu0 0.0
  %2286 = vmatmul.mubr.f32.gmra.mxu0 %v1994
  %v2287 = vpop.f32.mrf.mxu0
  %v2288 = vadd.f32 0.0, %v2287
  %v2289 = vpop.f32.mrf.mxu0
  %2290 = vmatprep.mubr.f32.mxu0 0.0
  %2291 = vmatmul.mubr.f32.gmra.mxu0 %v1997
  %v2292 = vpop.f32.mrf.mxu0
  %v2293 = vadd.f32 0.0, %v2292
  %v2294 = vpop.f32.mrf.mxu0
  %2295 = vmatprep.mubr.f32.mxu0 0.0
  %2296 = vmatmul.mubr.f32.gmra.mxu0 %v2000
  %v2297 = vpop.f32.mrf.mxu0
  %v2298 = vadd.f32 0.0, %v2297
  %v2299 = vpop.f32.mrf.mxu0
  %2300 = vmatprep.mubr.f32.mxu0 0.0
  %2301 = vmatmul.mubr.f32.gmra.mxu0 %v2003
  %v2302 = vpop.f32.mrf.mxu0
  %v2303 = vadd.f32 0.0, %v2302
  %v2304 = vpop.f32.mrf.mxu0
  %2305 = vmatprep.mubr.f32.mxu0 0.0
  %2306 = vmatmul.mubr.f32.gmra.mxu0 %v2006
  %v2307 = vpop.f32.mrf.mxu0
  %v2308 = vadd.f32 0.0, %v2307
  %v2309 = vpop.f32.mrf.mxu0
  %2310 = vmatprep.mubr.f32.mxu0 0.0
  %2311 = vmatmul.mubr.f32.gmra.mxu0 %v2009
  %v2312 = vpop.f32.mrf.mxu0
  %v2313 = vadd.f32 0.0, %v2312
  %v2314 = vpop.f32.mrf.mxu0
  %2315 = vmatprep.mubr.f32.mxu0 0.0
  %2316 = vmatmul.mubr.f32.gmra.mxu0 %v2012
  %v2317 = vpop.f32.mrf.mxu0
  %v2318 = vadd.f32 0.0, %v2317
  %v2319 = vpop.f32.mrf.mxu0
  %2320 = vmatprep.mubr.f32.mxu0 0.0
  %2321 = vmatmul.mubr.f32.gmra.mxu0 %v2015
  %v2322 = vpop.f32.mrf.mxu0
  %v2323 = vadd.f32 0.0, %v2322
  %v2324 = vpop.f32.mrf.mxu0
  %2325 = vmatprep.mubr.f32.mxu0 0.0
  %2326 = vmatmul.mubr.f32.gmra.mxu0 %v2018
  %v2327 = vpop.f32.mrf.mxu0
  %v2328 = vadd.f32 0.0, %v2327
  %v2329 = vpop.f32.mrf.mxu0
  %2330 = vmatprep.mubr.f32.mxu0 0.0
  %2331 = vmatmul.mubr.f32.gmra.mxu0 %v2021
  %v2332 = vpop.f32.mrf.mxu0
  %v2333 = vadd.f32 0.0, %v2332
  %v2334 = vpop.f32.mrf.mxu0
  %2335 = vmatprep.mubr.f32.mxu0 0.0
  %2336 = vmatmul.mubr.f32.gmra.mxu0 %v2024
  %v2337 = vpop.f32.mrf.mxu0
  %v2338 = vadd.f32 0.0, %v2337
  %v2339 = vpop.f32.mrf.mxu0
  %2340 = vmatprep.mubr.f32.mxu0 0.0
  %2341 = vmatmul.mubr.f32.gmra.mxu0 %v2027
  %v2342 = vpop.f32.mrf.mxu0
  %v2343 = vadd.f32 0.0, %v2342
  %v2344 = vpop.f32.mrf.mxu0
  %2345 = vmatprep.mubr.f32.mxu0 0.0
  %2346 = vmatmul.mubr.f32.gmra.mxu0 %v2030
  %v2347 = vpop.f32.mrf.mxu0
  %v2348 = vadd.f32 0.0, %v2347
  %v2349 = vpop.f32.mrf.mxu0
  %2350 = vmatprep.mubr.f32.mxu0 0.0
  %2351 = vmatmul.mubr.f32.gmra.mxu0 %v2033
  %v2352 = vpop.f32.mrf.mxu0
  %v2353 = vadd.f32 0.0, %v2352
  %v2354 = vpop.f32.mrf.mxu0
  %2355 = vmatprep.mubr.f32.mxu0 0.0
  %2356 = vmatmul.mubr.f32.gmra.mxu0 %v2036
  %v2357 = vpop.f32.mrf.mxu0
  %v2358 = vadd.f32 0.0, %v2357
  %v2359 = vpop.f32.mrf.mxu0
  %2360 = vmatprep.mubr.f32.mxu0 0.0
  %2361 = vmatmul.mubr.f32.gmra.mxu0 %v2039
  %v2362 = vpop.f32.mrf.mxu0
  %v2363 = vadd.f32 0.0, %v2362
  %v2364 = vpop.f32.mrf.mxu0
  %2365 = vmatprep.mubr.f32.mxu0 0.0
  %2366 = vmatmul.mubr.f32.gmra.mxu0 %v2042
  %v2367 = vpop.f32.mrf.mxu0
  %v2368 = vadd.f32 0.0, %v2367
  %v2369 = vpop.f32.mrf.mxu0
  %2370 = vmatprep.mubr.f32.mxu0 0.0
  %2371 = vmatmul.mubr.f32.gmra.mxu0 %v2045
  %v2372 = vpop.f32.mrf.mxu0
  %v2373 = vadd.f32 0.0, %v2372
  %v2374 = vpop.f32.mrf.mxu0
  %2375 = vmatprep.mubr.f32.mxu0 0.0
  %2376 = vmatmul.mubr.f32.gmra.mxu0 %v2048
  %v2377 = vpop.f32.mrf.mxu0
  %v2378 = vadd.f32 0.0, %v2377
  %v2379 = vpop.f32.mrf.mxu0
  %2380 = vmatprep.mubr.f32.mxu0 0.0
  %2381 = vmatmul.mubr.f32.gmra.mxu0 %v2051
  %v2382 = vpop.f32.mrf.mxu0
  %v2383 = vadd.f32 0.0, %v2382
  %v2384 = vpop.f32.mrf.mxu0
  %2385 = vmatprep.mubr.f32.mxu0 0.0
  %2386 = vmatmul.mubr.f32.gmra.mxu0 %v2054
  %v2387 = vpop.f32.mrf.mxu0
  %v2388 = vadd.f32 0.0, %v2387
  %v2389 = vpop.f32.mrf.mxu0
  %2390 = vmatprep.mubr.f32.mxu0 0.0
  %2391 = vmatmul.mubr.f32.gmra.mxu0 %v2057
  %v2392 = vpop.f32.mrf.mxu0
  %v2393 = vadd.f32 0.0, %v2392
  %v2394 = vpop.f32.mrf.mxu0
  %2395 = vmatprep.mubr.f32.mxu0 0.0
  %2396 = vmatmul.mubr.f32.gmra.mxu0 %v2060
  %v2397 = vpop.f32.mrf.mxu0
  %v2398 = vadd.f32 0.0, %v2397
  %v2399 = vpop.f32.mrf.mxu0
  %2400 = vmatprep.mubr.f32.mxu0 0.0
  %2401 = vmatmul.mubr.f32.gmra.mxu0 %v2063
  %v2402 = vpop.f32.mrf.mxu0
  %v2403 = vadd.f32 0.0, %v2402
  %v2404 = vpop.f32.mrf.mxu0
  %2405 = vmatprep.mubr.f32.mxu0 0.0
  %2406 = vmatmul.mubr.f32.gmra.mxu0 %v2066
  %v2407 = vpop.f32.mrf.mxu0
  %v2408 = vadd.f32 0.0, %v2407
  %v2409 = vpop.f32.mrf.mxu0
  %2410 = vmatprep.mubr.f32.mxu0 0.0
  %2411 = vmatmul.mubr.f32.gmra.mxu0 %v2069
  %v2412 = vpop.f32.mrf.mxu0
  %v2413 = vadd.f32 0.0, %v2412
  %v2414 = vpop.f32.mrf.mxu0
  %2415 = vmatprep.mubr.f32.mxu0 0.0
  %2416 = vmatmul.mubr.f32.gmra.mxu0 %v2072
  %v2417 = vpop.f32.mrf.mxu0
  %v2418 = vadd.f32 0.0, %v2417
  %v2419 = vpop.f32.mrf.mxu0
  %2420 = vmatprep.mubr.f32.mxu0 0.0
  %2421 = vmatmul.mubr.f32.gmra.mxu0 %v2075
  %v2422 = vpop.f32.mrf.mxu0
  %v2423 = vadd.f32 0.0, %v2422
  %v2424 = vpop.f32.mrf.mxu0
  %2425 = vmatprep.mubr.f32.mxu0 0.0
  %2426 = vmatmul.mubr.f32.gmra.mxu0 %v2078
  %v2427 = vpop.f32.mrf.mxu0
  %v2428 = vadd.f32 0.0, %v2427
  %v2429 = vpop.f32.mrf.mxu0
  %2430 = vmatprep.mubr.f32.mxu0 0.0
  %2431 = vmatmul.mubr.f32.gmra.mxu0 %v2081
  %v2432 = vpop.f32.mrf.mxu0
  %v2433 = vadd.f32 0.0, %v2432
  %v2434 = vpop.f32.mrf.mxu0
  %2435 = vmatprep.mubr.f32.mxu0 0.0
  %2436 = vmatmul.mubr.f32.gmra.mxu0 %v2084
  %v2437 = vpop.f32.mrf.mxu0
  %v2438 = vadd.f32 0.0, %v2437
  %v2439 = vpop.f32.mrf.mxu0
  %2440 = vmatprep.mubr.f32.mxu0 0.0
  %2441 = vmatmul.mubr.f32.gmra.mxu0 %v2087
  %v2442 = vpop.f32.mrf.mxu0
  %v2443 = vadd.f32 0.0, %v2442
  %v2444 = vpop.f32.mrf.mxu0
  %2445 = vmatprep.mubr.f32.mxu0 0.0
  %2446 = vmatmul.mubr.f32.gmra.mxu0 %v2090
  %v2447 = vpop.f32.mrf.mxu0
  %v2448 = vadd.f32 0.0, %v2447
  %v2449 = vpop.f32.mrf.mxu0
  %2450 = vmatprep.mubr.f32.mxu0 0.0
  %2451 = vmatmul.mubr.f32.gmra.mxu0 %v2093
  %v2452 = vpop.f32.mrf.mxu0
  %v2453 = vadd.f32 0.0, %v2452
  %v2454 = vpop.f32.mrf.mxu0
  %2455 = vmatprep.mubr.f32.mxu0 0.0
  %2456 = vmatmul.mubr.f32.gmra.mxu0 %v2096
  %v2457 = vpop.f32.mrf.mxu0
  %v2458 = vadd.f32 0.0, %v2457
  %v2459 = vpop.f32.mrf.mxu0
  %2460 = vmatprep.mubr.f32.mxu0 0.0
  %2461 = vmatmul.mubr.f32.gmra.mxu0 %v2099
  %v2462 = vpop.f32.mrf.mxu0
  %v2463 = vadd.f32 0.0, %v2462
  %v2464 = vpop.f32.mrf.mxu0
  %2465 = vmatprep.mubr.f32.mxu0 0.0
  %2466 = vmatmul.mubr.f32.gmra.mxu0 %v2102
  %v2467 = vpop.f32.mrf.mxu0
  %v2468 = vadd.f32 0.0, %v2467
  %v2469 = vpop.f32.mrf.mxu0
  %2470 = vmatprep.mubr.f32.mxu0 0.0
  %2471 = vmatmul.mubr.f32.gmra.mxu0 %v2105
  %v2472 = vpop.f32.mrf.mxu0
  %v2473 = vadd.f32 0.0, %v2472
  %v2474 = vpop.f32.mrf.mxu0
  %2475 = vmatprep.mubr.f32.mxu0 0.0
  %2476 = vmatmul.mubr.f32.gmra.mxu0 %v2108
  %v2477 = vpop.f32.mrf.mxu0
  %v2478 = vadd.f32 0.0, %v2477
  %v2479 = vpop.f32.mrf.mxu0
  %2480 = vmatprep.mubr.f32.mxu0 0.0
  %2481 = vmatmul.mubr.f32.gmra.mxu0 %v2111
  %v2482 = vpop.f32.mrf.mxu0
  %v2483 = vadd.f32 0.0, %v2482
  %v2484 = vpop.f32.mrf.mxu0
  %2485 = vmatprep.mubr.f32.mxu0 0.0
  %2486 = vmatmul.mubr.f32.gmra.mxu0 %v2114
  %v2487 = vpop.f32.mrf.mxu0
  %v2488 = vadd.f32 0.0, %v2487
  %v2489 = vpop.f32.mrf.mxu0
  %2490 = vmatprep.mubr.f32.mxu0 0.0
  %2491 = vmatmul.mubr.f32.gmra.mxu0 %v2117
  %v2492 = vpop.f32.mrf.mxu0
  %v2493 = vadd.f32 0.0, %v2492
  %v2494 = vpop.f32.mrf.mxu0
  %2495 = vmatprep.mubr.f32.mxu0 0.0
  %2496 = vmatmul.mubr.f32.gmra.mxu0 %v2120
  %v2497 = vpop.f32.mrf.mxu0
  %v2498 = vadd.f32 0.0, %v2497
  %v2499 = vpop.f32.mrf.mxu0
  %2500 = vmatprep.mubr.f32.mxu0 0.0
  %2501 = vmatmul.mubr.f32.gmra.mxu0 %v2123
  %v2502 = vpop.f32.mrf.mxu0
  %v2503 = vadd.f32 0.0, %v2502
  %v2504 = vpop.f32.mrf.mxu0
  %2505 = vmatprep.mubr.f32.mxu0 0.0
  %2506 = vmatmul.mubr.f32.gmra.mxu0 %v2126
  %v2507 = vpop.f32.mrf.mxu0
  %v2508 = vadd.f32 0.0, %v2507
  %v2509 = vpop.f32.mrf.mxu0
  %2510 = vmatprep.mubr.f32.mxu0 0.0
  %2511 = vmatmul.mubr.f32.gmra.mxu0 %v2129
  %v2512 = vpop.f32.mrf.mxu0
  %v2513 = vadd.f32 0.0, %v2512
  %v2514 = vpop.f32.mrf.mxu0
  %2515 = vdwg.mxu0
  %v2516 = vmax.f32 %v2198, 0.0
  %v2517 = vmax.f32 %v2203, 0.0
  %v2518 = vmax.f32 %v2208, 0.0
  %v2519 = vmax.f32 %v2213, 0.0
  %v2520 = vmax.f32 %v2218, 0.0
  %v2521 = vmax.f32 %v2223, 0.0
  %v2522 = vmax.f32 %v2228, 0.0
  %v2523 = vmax.f32 %v2233, 0.0
  %v2524 = vmax.f32 %v2238, 0.0
  %v2525 = vmax.f32 %v2243, 0.0
  %v2526 = vmax.f32 %v2248, 0.0
  %v2527 = vmax.f32 %v2253, 0.0
  %v2528 = vmax.f32 %v2258, 0.0
  %v2529 = vmax.f32 %v2263, 0.0
  %v2530 = vmax.f32 %v2268, 0.0
  %v2531 = vmax.f32 %v2273, 0.0
  %v2532 = vmax.f32 %v2278, 0.0
  %v2533 = vmax.f32 %v2283, 0.0
  %v2534 = vmax.f32 %v2288, 0.0
  %v2535 = vmax.f32 %v2293, 0.0
  %v2536 = vmax.f32 %v2298, 0.0
  %v2537 = vmax.f32 %v2303, 0.0
  %v2538 = vmax.f32 %v2308, 0.0
  %v2539 = vmax.f32 %v2313, 0.0
  %v2540 = vmax.f32 %v2318, 0.0
  %v2541 = vmax.f32 %v2323, 0.0
  %v2542 = vmax.f32 %v2328, 0.0
  %v2543 = vmax.f32 %v2333, 0.0
  %v2544 = vmax.f32 %v2338, 0.0
  %v2545 = vmax.f32 %v2343, 0.0
  %v2546 = vmax.f32 %v2348, 0.0
  %v2547 = vmax.f32 %v2353, 0.0
  %v2548 = vmax.f32 %v2358, 0.0
  %v2549 = vmax.f32 %v2363, 0.0
  %v2550 = vmax.f32 %v2368, 0.0
  %v2551 = vmax.f32 %v2373, 0.0
  %v2552 = vmax.f32 %v2378, 0.0
  %v2553 = vmax.f32 %v2383, 0.0
  %v2554 = vmax.f32 %v2388, 0.0
  %v2555 = vmax.f32 %v2393, 0.0
  %v2556 = vmax.f32 %v2398, 0.0
  %v2557 = vmax.f32 %v2403, 0.0
  %v2558 = vmax.f32 %v2408, 0.0
  %v2559 = vmax.f32 %v2413, 0.0
  %v2560 = vmax.f32 %v2418, 0.0
  %v2561 = vmax.f32 %v2423, 0.0
  %v2562 = vmax.f32 %v2428, 0.0
  %v2563 = vmax.f32 %v2433, 0.0
  %v2564 = vmax.f32 %v2438, 0.0
  %v2565 = vmax.f32 %v2443, 0.0
  %v2566 = vmax.f32 %v2448, 0.0
  %v2567 = vmax.f32 %v2453, 0.0
  %v2568 = vmax.f32 %v2458, 0.0
  %v2569 = vmax.f32 %v2463, 0.0
  %v2570 = vmax.f32 %v2468, 0.0
  %v2571 = vmax.f32 %v2473, 0.0
  %v2572 = vmax.f32 %v2478, 0.0
  %v2573 = vmax.f32 %v2483, 0.0
  %v2574 = vmax.f32 %v2488, 0.0
  %v2575 = vmax.f32 %v2493, 0.0
  %v2576 = vmax.f32 %v2498, 0.0
  %v2577 = vmax.f32 %v2503, 0.0
  %v2578 = vmax.f32 %v2508, 0.0
  %v2579 = vmax.f32 %v2513, 0.0
  %vm2580 = vcmask 130048
  %v2581 = vsel %vm2580, %v2516, 0.0
  %v2582 = vsel %vm2580, %v2517, 0.0
  %v2583 = vadd.f32 %v2581, %v2582
  %v2584 = vsel %vm2580, %v2518, 0.0
  %v2585 = vadd.f32 %v2583, %v2584
  %v2586 = vsel %vm2580, %v2519, 0.0
  %v2587 = vadd.f32 %v2585, %v2586
  %v2588 = vsel %vm2580, %v2520, 0.0
  %v2589 = vadd.f32 %v2587, %v2588
  %v2590 = vsel %vm2580, %v2521, 0.0
  %v2591 = vadd.f32 %v2589, %v2590
  %v2592 = vsel %vm2580, %v2522, 0.0
  %v2593 = vadd.f32 %v2591, %v2592
  %v2594 = vsel %vm2580, %v2523, 0.0
  %v2595 = vadd.f32 %v2593, %v2594
  %v2596 = vsel %vm2580, %v2524, 0.0
  %v2597 = vadd.f32 %v2595, %v2596
  %v2598 = vsel %vm2580, %v2525, 0.0
  %v2599 = vadd.f32 %v2597, %v2598
  %v2600 = vsel %vm2580, %v2526, 0.0
  %v2601 = vadd.f32 %v2599, %v2600
  %v2602 = vsel %vm2580, %v2527, 0.0
  %v2603 = vadd.f32 %v2601, %v2602
  %v2604 = vsel %vm2580, %v2528, 0.0
  %v2605 = vadd.f32 %v2603, %v2604
  %v2606 = vsel %vm2580, %v2529, 0.0
  %v2607 = vadd.f32 %v2605, %v2606
  %v2608 = vsel %vm2580, %v2530, 0.0
  %v2609 = vadd.f32 %v2607, %v2608
  %v2610 = vsel %vm2580, %v2531, 0.0
  %v2611 = vadd.f32 %v2609, %v2610
  %v2612 = vsel %vm2580, %v2532, 0.0
  %v2613 = vadd.f32 %v2611, %v2612
  %v2614 = vsel %vm2580, %v2533, 0.0
  %v2615 = vadd.f32 %v2613, %v2614
  %v2616 = vsel %vm2580, %v2534, 0.0
  %v2617 = vadd.f32 %v2615, %v2616
  %v2618 = vsel %vm2580, %v2535, 0.0
  %v2619 = vadd.f32 %v2617, %v2618
  %v2620 = vsel %vm2580, %v2536, 0.0
  %v2621 = vadd.f32 %v2619, %v2620
  %v2622 = vsel %vm2580, %v2537, 0.0
  %v2623 = vadd.f32 %v2621, %v2622
  %v2624 = vsel %vm2580, %v2538, 0.0
  %v2625 = vadd.f32 %v2623, %v2624
  %v2626 = vsel %vm2580, %v2539, 0.0
  %v2627 = vadd.f32 %v2625, %v2626
  %v2628 = vsel %vm2580, %v2540, 0.0
  %v2629 = vadd.f32 %v2627, %v2628
  %v2630 = vsel %vm2580, %v2541, 0.0
  %v2631 = vadd.f32 %v2629, %v2630
  %v2632 = vsel %vm2580, %v2542, 0.0
  %v2633 = vadd.f32 %v2631, %v2632
  %v2634 = vsel %vm2580, %v2543, 0.0
  %v2635 = vadd.f32 %v2633, %v2634
  %v2636 = vsel %vm2580, %v2544, 0.0
  %v2637 = vadd.f32 %v2635, %v2636
  %v2638 = vsel %vm2580, %v2545, 0.0
  %v2639 = vadd.f32 %v2637, %v2638
  %v2640 = vsel %vm2580, %v2546, 0.0
  %v2641 = vadd.f32 %v2639, %v2640
  %v2642 = vsel %vm2580, %v2547, 0.0
  %v2643 = vadd.f32 %v2641, %v2642
  %v2644 = vsel %vm2580, %v2548, 0.0
  %v2645 = vadd.f32 %v2643, %v2644
  %v2646 = vsel %vm2580, %v2549, 0.0
  %v2647 = vadd.f32 %v2645, %v2646
  %v2648 = vsel %vm2580, %v2550, 0.0
  %v2649 = vadd.f32 %v2647, %v2648
  %v2650 = vsel %vm2580, %v2551, 0.0
  %v2651 = vadd.f32 %v2649, %v2650
  %v2652 = vsel %vm2580, %v2552, 0.0
  %v2653 = vadd.f32 %v2651, %v2652
  %v2654 = vsel %vm2580, %v2553, 0.0
  %v2655 = vadd.f32 %v2653, %v2654
  %v2656 = vsel %vm2580, %v2554, 0.0
  %v2657 = vadd.f32 %v2655, %v2656
  %v2658 = vsel %vm2580, %v2555, 0.0
  %v2659 = vadd.f32 %v2657, %v2658
  %v2660 = vsel %vm2580, %v2556, 0.0
  %v2661 = vadd.f32 %v2659, %v2660
  %v2662 = vsel %vm2580, %v2557, 0.0
  %v2663 = vadd.f32 %v2661, %v2662
  %v2664 = vsel %vm2580, %v2558, 0.0
  %v2665 = vadd.f32 %v2663, %v2664
  %v2666 = vsel %vm2580, %v2559, 0.0
  %v2667 = vadd.f32 %v2665, %v2666
  %v2668 = vsel %vm2580, %v2560, 0.0
  %v2669 = vadd.f32 %v2667, %v2668
  %v2670 = vsel %vm2580, %v2561, 0.0
  %v2671 = vadd.f32 %v2669, %v2670
  %v2672 = vsel %vm2580, %v2562, 0.0
  %v2673 = vadd.f32 %v2671, %v2672
  %v2674 = vsel %vm2580, %v2563, 0.0
  %v2675 = vadd.f32 %v2673, %v2674
  %v2676 = vsel %vm2580, %v2564, 0.0
  %v2677 = vadd.f32 %v2675, %v2676
  %v2678 = vsel %vm2580, %v2565, 0.0
  %v2679 = vadd.f32 %v2677, %v2678
  %v2680 = vsel %vm2580, %v2566, 0.0
  %v2681 = vadd.f32 %v2679, %v2680
  %v2682 = vsel %vm2580, %v2567, 0.0
  %v2683 = vadd.f32 %v2681, %v2682
  %v2684 = vsel %vm2580, %v2568, 0.0
  %v2685 = vadd.f32 %v2683, %v2684
  %v2686 = vsel %vm2580, %v2569, 0.0
  %v2687 = vadd.f32 %v2685, %v2686
  %v2688 = vsel %vm2580, %v2570, 0.0
  %v2689 = vadd.f32 %v2687, %v2688
  %v2690 = vsel %vm2580, %v2571, 0.0
  %v2691 = vadd.f32 %v2689, %v2690
  %v2692 = vsel %vm2580, %v2572, 0.0
  %v2693 = vadd.f32 %v2691, %v2692
  %v2694 = vsel %vm2580, %v2573, 0.0
  %v2695 = vadd.f32 %v2693, %v2694
  %v2696 = vsel %vm2580, %v2574, 0.0
  %v2697 = vadd.f32 %v2695, %v2696
  %v2698 = vsel %vm2580, %v2575, 0.0
  %v2699 = vadd.f32 %v2697, %v2698
  %v2700 = vsel %vm2580, %v2576, 0.0
  %v2701 = vadd.f32 %v2699, %v2700
  %v2702 = vsel %vm2580, %v2577, 0.0
  %v2703 = vadd.f32 %v2701, %v2702
  %v2704 = vsel %vm2580, %v2578, 0.0
  %v2705 = vadd.f32 %v2703, %v2704
  %v2706 = vsel %vm2580, %v2579, 0.0
  %v2707 = vadd.f32 %v2705, %v2706
  %v2708 = vrot.slane %v2707, 4
  %v2709 = vadd.f32 %v2707, %v2708
  %v2710 = vrot.slane %v2709, 2
  %v2711 = vadd.f32 %v2709, %v2710
  %v2712 = vrot.slane %v2711, 1
  %v2713 = vadd.f32 %v2711, %v2712
  %v2714 = vmul.f32 %v2713, 0.001953125
  %v2715 = vsub.f32 %v2516, %v2714
  %v2716 = vsub.f32 %v2517, %v2714
  %v2717 = vsub.f32 %v2518, %v2714
  %v2718 = vsub.f32 %v2519, %v2714
  %v2719 = vsub.f32 %v2520, %v2714
  %v2720 = vsub.f32 %v2521, %v2714
  %v2721 = vsub.f32 %v2522, %v2714
  %v2722 = vsub.f32 %v2523, %v2714
  %v2723 = vsub.f32 %v2524, %v2714
  %v2724 = vsub.f32 %v2525, %v2714
  %v2725 = vsub.f32 %v2526, %v2714
  %v2726 = vsub.f32 %v2527, %v2714
  %v2727 = vsub.f32 %v2528, %v2714
  %v2728 = vsub.f32 %v2529, %v2714
  %v2729 = vsub.f32 %v2530, %v2714
  %v2730 = vsub.f32 %v2531, %v2714
  %v2731 = vsub.f32 %v2532, %v2714
  %v2732 = vsub.f32 %v2533, %v2714
  %v2733 = vsub.f32 %v2534, %v2714
  %v2734 = vsub.f32 %v2535, %v2714
  %v2735 = vsub.f32 %v2536, %v2714
  %v2736 = vsub.f32 %v2537, %v2714
  %v2737 = vsub.f32 %v2538, %v2714
  %v2738 = vsub.f32 %v2539, %v2714
  %v2739 = vsub.f32 %v2540, %v2714
  %v2740 = vsub.f32 %v2541, %v2714
  %v2741 = vsub.f32 %v2542, %v2714
  %v2742 = vsub.f32 %v2543, %v2714
  %v2743 = vsub.f32 %v2544, %v2714
  %v2744 = vsub.f32 %v2545, %v2714
  %v2745 = vsub.f32 %v2546, %v2714
  %v2746 = vsub.f32 %v2547, %v2714
  %v2747 = vsub.f32 %v2548, %v2714
  %v2748 = vsub.f32 %v2549, %v2714
  %v2749 = vsub.f32 %v2550, %v2714
  %v2750 = vsub.f32 %v2551, %v2714
  %v2751 = vsub.f32 %v2552, %v2714
  %v2752 = vsub.f32 %v2553, %v2714
  %v2753 = vsub.f32 %v2554, %v2714
  %v2754 = vsub.f32 %v2555, %v2714
  %v2755 = vsub.f32 %v2556, %v2714
  %v2756 = vsub.f32 %v2557, %v2714
  %v2757 = vsub.f32 %v2558, %v2714
  %v2758 = vsub.f32 %v2559, %v2714
  %v2759 = vsub.f32 %v2560, %v2714
  %v2760 = vsub.f32 %v2561, %v2714
  %v2761 = vsub.f32 %v2562, %v2714
  %v2762 = vsub.f32 %v2563, %v2714
  %v2763 = vsub.f32 %v2564, %v2714
  %v2764 = vsub.f32 %v2565, %v2714
  %v2765 = vsub.f32 %v2566, %v2714
  %v2766 = vsub.f32 %v2567, %v2714
  %v2767 = vsub.f32 %v2568, %v2714
  %v2768 = vsub.f32 %v2569, %v2714
  %v2769 = vsub.f32 %v2570, %v2714
  %v2770 = vsub.f32 %v2571, %v2714
  %v2771 = vsub.f32 %v2572, %v2714
  %v2772 = vsub.f32 %v2573, %v2714
  %v2773 = vsub.f32 %v2574, %v2714
  %v2774 = vsub.f32 %v2575, %v2714
  %v2775 = vsub.f32 %v2576, %v2714
  %v2776 = vsub.f32 %v2577, %v2714
  %v2777 = vsub.f32 %v2578, %v2714
  %v2778 = vsub.f32 %v2579, %v2714
  %v2779 = vmul.f32 %v2715, %v2715
  %v2780 = vmul.f32 %v2716, %v2716
  %v2781 = vmul.f32 %v2717, %v2717
  %v2782 = vmul.f32 %v2718, %v2718
  %v2783 = vmul.f32 %v2719, %v2719
  %v2784 = vmul.f32 %v2720, %v2720
  %v2785 = vmul.f32 %v2721, %v2721
  %v2786 = vmul.f32 %v2722, %v2722
  %v2787 = vmul.f32 %v2723, %v2723
  %v2788 = vmul.f32 %v2724, %v2724
  %v2789 = vmul.f32 %v2725, %v2725
  %v2790 = vmul.f32 %v2726, %v2726
  %v2791 = vmul.f32 %v2727, %v2727
  %v2792 = vmul.f32 %v2728, %v2728
  %v2793 = vmul.f32 %v2729, %v2729
  %v2794 = vmul.f32 %v2730, %v2730
  %v2795 = vmul.f32 %v2731, %v2731
  %v2796 = vmul.f32 %v2732, %v2732
  %v2797 = vmul.f32 %v2733, %v2733
  %v2798 = vmul.f32 %v2734, %v2734
  %v2799 = vmul.f32 %v2735, %v2735
  %v2800 = vmul.f32 %v2736, %v2736
  %v2801 = vmul.f32 %v2737, %v2737
  %v2802 = vmul.f32 %v2738, %v2738
  %v2803 = vmul.f32 %v2739, %v2739
  %v2804 = vmul.f32 %v2740, %v2740
  %v2805 = vmul.f32 %v2741, %v2741
  %v2806 = vmul.f32 %v2742, %v2742
  %v2807 = vmul.f32 %v2743, %v2743
  %v2808 = vmul.f32 %v2744, %v2744
  %v2809 = vmul.f32 %v2745, %v2745
  %v2810 = vmul.f32 %v2746, %v2746
  %v2811 = vmul.f32 %v2747, %v2747
  %v2812 = vmul.f32 %v2748, %v2748
  %v2813 = vmul.f32 %v2749, %v2749
  %v2814 = vmul.f32 %v2750, %v2750
  %v2815 = vmul.f32 %v2751, %v2751
  %v2816 = vmul.f32 %v2752, %v2752
  %v2817 = vmul.f32 %v2753, %v2753
  %v2818 = vmul.f32 %v2754, %v2754
  %v2819 = vmul.f32 %v2755, %v2755
  %v2820 = vmul.f32 %v2756, %v2756
  %v2821 = vmul.f32 %v2757, %v2757
  %v2822 = vmul.f32 %v2758, %v2758
  %v2823 = vmul.f32 %v2759, %v2759
  %v2824 = vmul.f32 %v2760, %v2760
  %v2825 = vmul.f32 %v2761, %v2761
  %v2826 = vmul.f32 %v2762, %v2762
  %v2827 = vmul.f32 %v2763, %v2763
  %v2828 = vmul.f32 %v2764, %v2764
  %v2829 = vmul.f32 %v2765, %v2765
  %v2830 = vmul.f32 %v2766, %v2766
  %v2831 = vmul.f32 %v2767, %v2767
  %v2832 = vmul.f32 %v2768, %v2768
  %v2833 = vmul.f32 %v2769, %v2769
  %v2834 = vmul.f32 %v2770, %v2770
  %v2835 = vmul.f32 %v2771, %v2771
  %v2836 = vmul.f32 %v2772, %v2772
  %v2837 = vmul.f32 %v2773, %v2773
  %v2838 = vmul.f32 %v2774, %v2774
  %v2839 = vmul.f32 %v2775, %v2775
  %v2840 = vmul.f32 %v2776, %v2776
  %v2841 = vmul.f32 %v2777, %v2777
  %v2842 = vmul.f32 %v2778, %v2778
  %v2843 = vsel %vm2580, %v2779, 0.0
  %v2844 = vsel %vm2580, %v2780, 0.0
  %v2845 = vadd.f32 %v2843, %v2844
  %v2846 = vsel %vm2580, %v2781, 0.0
  %v2847 = vadd.f32 %v2845, %v2846
  %v2848 = vsel %vm2580, %v2782, 0.0
  %v2849 = vadd.f32 %v2847, %v2848
  %v2850 = vsel %vm2580, %v2783, 0.0
  %v2851 = vadd.f32 %v2849, %v2850
  %v2852 = vsel %vm2580, %v2784, 0.0
  %v2853 = vadd.f32 %v2851, %v2852
  %v2854 = vsel %vm2580, %v2785, 0.0
  %v2855 = vadd.f32 %v2853, %v2854
  %v2856 = vsel %vm2580, %v2786, 0.0
  %v2857 = vadd.f32 %v2855, %v2856
  %v2858 = vsel %vm2580, %v2787, 0.0
  %v2859 = vadd.f32 %v2857, %v2858
  %v2860 = vsel %vm2580, %v2788, 0.0
  %v2861 = vadd.f32 %v2859, %v2860
  %v2862 = vsel %vm2580, %v2789, 0.0
  %v2863 = vadd.f32 %v2861, %v2862
  %v2864 = vsel %vm2580, %v2790, 0.0
  %v2865 = vadd.f32 %v2863, %v2864
  %v2866 = vsel %vm2580, %v2791, 0.0
  %v2867 = vadd.f32 %v2865, %v2866
  %v2868 = vsel %vm2580, %v2792, 0.0
  %v2869 = vadd.f32 %v2867, %v2868
  %v2870 = vsel %vm2580, %v2793, 0.0
  %v2871 = vadd.f32 %v2869, %v2870
  %v2872 = vsel %vm2580, %v2794, 0.0
  %v2873 = vadd.f32 %v2871, %v2872
  %v2874 = vsel %vm2580, %v2795, 0.0
  %v2875 = vadd.f32 %v2873, %v2874
  %v2876 = vsel %vm2580, %v2796, 0.0
  %v2877 = vadd.f32 %v2875, %v2876
  %v2878 = vsel %vm2580, %v2797, 0.0
  %v2879 = vadd.f32 %v2877, %v2878
  %v2880 = vsel %vm2580, %v2798, 0.0
  %v2881 = vadd.f32 %v2879, %v2880
  %v2882 = vsel %vm2580, %v2799, 0.0
  %v2883 = vadd.f32 %v2881, %v2882
  %v2884 = vsel %vm2580, %v2800, 0.0
  %v2885 = vadd.f32 %v2883, %v2884
  %v2886 = vsel %vm2580, %v2801, 0.0
  %v2887 = vadd.f32 %v2885, %v2886
  %v2888 = vsel %vm2580, %v2802, 0.0
  %v2889 = vadd.f32 %v2887, %v2888
  %v2890 = vsel %vm2580, %v2803, 0.0
  %v2891 = vadd.f32 %v2889, %v2890
  %v2892 = vsel %vm2580, %v2804, 0.0
  %v2893 = vadd.f32 %v2891, %v2892
  %v2894 = vsel %vm2580, %v2805, 0.0
  %v2895 = vadd.f32 %v2893, %v2894
  %v2896 = vsel %vm2580, %v2806, 0.0
  %v2897 = vadd.f32 %v2895, %v2896
  %v2898 = vsel %vm2580, %v2807, 0.0
  %v2899 = vadd.f32 %v2897, %v2898
  %v2900 = vsel %vm2580, %v2808, 0.0
  %v2901 = vadd.f32 %v2899, %v2900
  %v2902 = vsel %vm2580, %v2809, 0.0
  %v2903 = vadd.f32 %v2901, %v2902
  %v2904 = vsel %vm2580, %v2810, 0.0
  %v2905 = vadd.f32 %v2903, %v2904
  %v2906 = vsel %vm2580, %v2811, 0.0
  %v2907 = vadd.f32 %v2905, %v2906
  %v2908 = vsel %vm2580, %v2812, 0.0
  %v2909 = vadd.f32 %v2907, %v2908
  %v2910 = vsel %vm2580, %v2813, 0.0
  %v2911 = vadd.f32 %v2909, %v2910
  %v2912 = vsel %vm2580, %v2814, 0.0
  %v2913 = vadd.f32 %v2911, %v2912
  %v2914 = vsel %vm2580, %v2815, 0.0
  %v2915 = vadd.f32 %v2913, %v2914
  %v2916 = vsel %vm2580, %v2816, 0.0
  %v2917 = vadd.f32 %v2915, %v2916
  %v2918 = vsel %vm2580, %v2817, 0.0
  %v2919 = vadd.f32 %v2917, %v2918
  %v2920 = vsel %vm2580, %v2818, 0.0
  %v2921 = vadd.f32 %v2919, %v2920
  %v2922 = vsel %vm2580, %v2819, 0.0
  %v2923 = vadd.f32 %v2921, %v2922
  %v2924 = vsel %vm2580, %v2820, 0.0
  %v2925 = vadd.f32 %v2923, %v2924
  %v2926 = vsel %vm2580, %v2821, 0.0
  %v2927 = vadd.f32 %v2925, %v2926
  %v2928 = vsel %vm2580, %v2822, 0.0
  %v2929 = vadd.f32 %v2927, %v2928
  %v2930 = vsel %vm2580, %v2823, 0.0
  %v2931 = vadd.f32 %v2929, %v2930
  %v2932 = vsel %vm2580, %v2824, 0.0
  %v2933 = vadd.f32 %v2931, %v2932
  %v2934 = vsel %vm2580, %v2825, 0.0
  %v2935 = vadd.f32 %v2933, %v2934
  %v2936 = vsel %vm2580, %v2826, 0.0
  %v2937 = vadd.f32 %v2935, %v2936
  %v2938 = vsel %vm2580, %v2827, 0.0
  %v2939 = vadd.f32 %v2937, %v2938
  %v2940 = vsel %vm2580, %v2828, 0.0
  %v2941 = vadd.f32 %v2939, %v2940
  %v2942 = vsel %vm2580, %v2829, 0.0
  %v2943 = vadd.f32 %v2941, %v2942
  %v2944 = vsel %vm2580, %v2830, 0.0
  %v2945 = vadd.f32 %v2943, %v2944
  %v2946 = vsel %vm2580, %v2831, 0.0
  %v2947 = vadd.f32 %v2945, %v2946
  %v2948 = vsel %vm2580, %v2832, 0.0
  %v2949 = vadd.f32 %v2947, %v2948
  %v2950 = vsel %vm2580, %v2833, 0.0
  %v2951 = vadd.f32 %v2949, %v2950
  %v2952 = vsel %vm2580, %v2834, 0.0
  %v2953 = vadd.f32 %v2951, %v2952
  %v2954 = vsel %vm2580, %v2835, 0.0
  %v2955 = vadd.f32 %v2953, %v2954
  %v2956 = vsel %vm2580, %v2836, 0.0
  %v2957 = vadd.f32 %v2955, %v2956
  %v2958 = vsel %vm2580, %v2837, 0.0
  %v2959 = vadd.f32 %v2957, %v2958
  %v2960 = vsel %vm2580, %v2838, 0.0
  %v2961 = vadd.f32 %v2959, %v2960
  %v2962 = vsel %vm2580, %v2839, 0.0
  %v2963 = vadd.f32 %v2961, %v2962
  %v2964 = vsel %vm2580, %v2840, 0.0
  %v2965 = vadd.f32 %v2963, %v2964
  %v2966 = vsel %vm2580, %v2841, 0.0
  %v2967 = vadd.f32 %v2965, %v2966
  %v2968 = vsel %vm2580, %v2842, 0.0
  %v2969 = vadd.f32 %v2967, %v2968
  %v2970 = vrot.slane %v2969, 4
  %v2971 = vadd.f32 %v2969, %v2970
  %v2972 = vrot.slane %v2971, 2
  %v2973 = vadd.f32 %v2971, %v2972
  %v2974 = vrot.slane %v2973, 1
  %v2975 = vadd.f32 %v2973, %v2974
  %v2976 = vmul.f32 %v2975, 0.001953125
  %v2977 = vadd.f32 %v2976, 1e-05
  %v2978 = vrsqrt.pop %v2977
  %2979 = vst.msk [vmem:[#allocation3] sm:$0xff] %vm2580, -inf
  %2980 = vst.msk [vmem:[#allocation3 + $0x8] sm:$0xff] %vm2580, -inf
  %vm2981 = vcmask 123904
  %2982 = vst.msk [vmem:[#allocation3 + $0x10] sm:$0x3] %vm2981, -inf
  %2983 = vst.msk [vmem:[#allocation3 + $0x1b0] sm:$0xff] %vm2580, -inf
  %2984 = vst.msk [vmem:[#allocation3 + $0x1b8] sm:$0xff] %vm2580, -inf
  %2985 = vst.msk [vmem:[#allocation3 + $0x1c0] sm:$0x3] %vm2981, -inf
  %s2986 = scalar_lea.vmem [#allocation3], 408
  %2987 = vst.msk [vmem:[%s2986] sm:$0xff] %vm2580, -inf
  %2988 = vst.msk [vmem:[%s2986 + $0x8] sm:$0xff] %vm2580, -inf
  %2989 = vst.msk [vmem:[%s2986 + $0x10] sm:$0x3] %vm2981, -inf
  %2990 = vst.msk [vmem:[%s2986 + $0x1b0] sm:$0xff] %vm2580, -inf
  %2991 = vst.msk [vmem:[%s2986 + $0x1b8] sm:$0xff] %vm2580, -inf
  %2992 = vst.msk [vmem:[%s2986 + $0x1c0] sm:$0x3] %vm2981, -inf
  %s2993 = scalar_lea.vmem [#allocation3], 24
  %vm2994 = vcmask 122880
  %2995 = vst.msk [vmem:[%s2993] sm:$0x1] %vm2994, -inf
  %2996 = vst.msk [vmem:[%s2993 + $0x18] sm:$0x1] %vm2994, -inf
  %2997 = vst.msk [vmem:[%s2993 + $0x30] sm:$0x1] %vm2994, -inf
  %2998 = vst.msk [vmem:[%s2993 + $0x48] sm:$0x1] %vm2994, -inf
  %2999 = vst.msk [vmem:[%s2993 + $0x60] sm:$0x1] %vm2994, -inf
  %3000 = vst.msk [vmem:[%s2993 + $0x78] sm:$0x1] %vm2994, -inf
  %3001 = vst.msk [vmem:[%s2993 + $0x90] sm:$0x1] %vm2994, -inf
  %3002 = vst.msk [vmem:[%s2993 + $0xa8] sm:$0x1] %vm2994, -inf
  %3003 = vst.msk [vmem:[%s2993 + $0xc0] sm:$0x1] %vm2994, -inf
  %3004 = vst.msk [vmem:[%s2993 + $0xd8] sm:$0x1] %vm2994, -inf
  %3005 = vst.msk [vmem:[%s2993 + $0xf0] sm:$0x1] %vm2994, -inf
  %3006 = vst.msk [vmem:[%s2993 + $0x108] sm:$0x1] %vm2994, -inf
  %3007 = vst.msk [vmem:[%s2993 + $0x120] sm:$0x1] %vm2994, -inf
  %3008 = vst.msk [vmem:[%s2993 + $0x138] sm:$0x1] %vm2994, -inf
  %3009 = vst.msk [vmem:[%s2993 + $0x150] sm:$0x1] %vm2994, -inf
  %3010 = vst.msk [vmem:[%s2993 + $0x168] sm:$0x1] %vm2994, -inf
  %3011 = vst.msk [vmem:[%s2993 + $0x1b0] sm:$0x1] %vm2994, -inf
  %3012 = vst.msk [vmem:[%s2993 + $0x1c8] sm:$0x1] %vm2994, -inf
  %3013 = vst.msk [vmem:[%s2993 + $0x1e0] sm:$0x1] %vm2994, -inf
  %3014 = vst.msk [vmem:[%s2993 + $0x1f8] sm:$0x1] %vm2994, -inf
  %3015 = vst.msk [vmem:[%s2993 + $0x210] sm:$0x1] %vm2994, -inf
  %3016 = vst.msk [vmem:[%s2993 + $0x228] sm:$0x1] %vm2994, -inf
  %3017 = vst.msk [vmem:[%s2993 + $0x240] sm:$0x1] %vm2994, -inf
  %3018 = vst.msk [vmem:[%s2993 + $0x258] sm:$0x1] %vm2994, -inf
  %3019 = vst.msk [vmem:[%s2993 + $0x270] sm:$0x1] %vm2994, -inf
  %3020 = vst.msk [vmem:[%s2993 + $0x288] sm:$0x1] %vm2994, -inf
  %3021 = vst.msk [vmem:[%s2993 + $0x2a0] sm:$0x1] %vm2994, -inf
  %3022 = vst.msk [vmem:[%s2993 + $0x2b8] sm:$0x1] %vm2994, -inf
  %3023 = vst.msk [vmem:[%s2993 + $0x2d0] sm:$0x1] %vm2994, -inf
  %3024 = vst.msk [vmem:[%s2993 + $0x2e8] sm:$0x1] %vm2994, -inf
  %3025 = vst.msk [vmem:[%s2993 + $0x300] sm:$0x1] %vm2994, -inf
  %3026 = vst.msk [vmem:[%s2993 + $0x318] sm:$0x1] %vm2994, -inf
  %3027 = vst.msk [vmem:[%s2993 + $0x11] sm:$0x1] %vm2994, -inf
  %3028 = vst.msk [vmem:[%s2993 + $0x29] sm:$0x1] %vm2994, -inf
  %3029 = vst.msk [vmem:[%s2993 + $0x41] sm:$0x1] %vm2994, -inf
  %3030 = vst.msk [vmem:[%s2993 + $0x59] sm:$0x1] %vm2994, -inf
  %3031 = vst.msk [vmem:[%s2993 + $0x71] sm:$0x1] %vm2994, -inf
  %3032 = vst.msk [vmem:[%s2993 + $0x89] sm:$0x1] %vm2994, -inf
  %3033 = vst.msk [vmem:[%s2993 + $0xa1] sm:$0x1] %vm2994, -inf
  %3034 = vst.msk [vmem:[%s2993 + $0xb9] sm:$0x1] %vm2994, -inf
  %3035 = vst.msk [vmem:[%s2993 + $0xd1] sm:$0x1] %vm2994, -inf
  %3036 = vst.msk [vmem:[%s2993 + $0xe9] sm:$0x1] %vm2994, -inf
  %3037 = vst.msk [vmem:[%s2993 + $0x101] sm:$0x1] %vm2994, -inf
  %3038 = vst.msk [vmem:[%s2993 + $0x119] sm:$0x1] %vm2994, -inf
  %3039 = vst.msk [vmem:[%s2993 + $0x131] sm:$0x1] %vm2994, -inf
  %3040 = vst.msk [vmem:[%s2993 + $0x149] sm:$0x1] %vm2994, -inf
  %3041 = vst.msk [vmem:[%s2993 + $0x161] sm:$0x1] %vm2994, -inf
  %3042 = vst.msk [vmem:[%s2993 + $0x179] sm:$0x1] %vm2994, -inf
  %3043 = vst.msk [vmem:[%s2993 + $0x1c1] sm:$0x1] %vm2994, -inf
  %3044 = vst.msk [vmem:[%s2993 + $0x1d9] sm:$0x1] %vm2994, -inf
  %3045 = vst.msk [vmem:[%s2993 + $0x1f1] sm:$0x1] %vm2994, -inf
  %3046 = vst.msk [vmem:[%s2993 + $0x209] sm:$0x1] %vm2994, -inf
  %3047 = vst.msk [vmem:[%s2993 + $0x221] sm:$0x1] %vm2994, -inf
  %3048 = vst.msk [vmem:[%s2993 + $0x239] sm:$0x1] %vm2994, -inf
  %3049 = vst.msk [vmem:[%s2993 + $0x251] sm:$0x1] %vm2994, -inf
  %3050 = vst.msk [vmem:[%s2993 + $0x269] sm:$0x1] %vm2994, -inf
  %3051 = vst.msk [vmem:[%s2993 + $0x281] sm:$0x1] %vm2994, -inf
  %3052 = vst.msk [vmem:[%s2993 + $0x299] sm:$0x1] %vm2994, -inf
  %3053 = vst.msk [vmem:[%s2993 + $0x2b1] sm:$0x1] %vm2994, -inf
  %3054 = vst.msk [vmem:[%s2993 + $0x2c9] sm:$0x1] %vm2994, -inf
  %3055 = vst.msk [vmem:[%s2993 + $0x2e1] sm:$0x1] %vm2994, -inf
  %3056 = vst.msk [vmem:[%s2993 + $0x2f9] sm:$0x1] %vm2994, -inf
  %3057 = vst.msk [vmem:[%s2993 + $0x311] sm:$0x1] %vm2994, -inf
  %3058 = vst.msk [vmem:[%s2993 + $0x329] sm:$0x1] %vm2994, -inf
  %3059 = vst.msk [vmem:[%s2993 + $0x1] sm:$0xff] %vm2580, %v2516
  %3060 = vst.msk [vmem:[%s2993 + $0x9] sm:$0xff] %vm2580, %v2517
  %3061 = vst.msk [vmem:[%s2993 + $0x19] sm:$0xff] %vm2580, %v2518
  %3062 = vst.msk [vmem:[%s2993 + $0x21] sm:$0xff] %vm2580, %v2519
  %3063 = vst.msk [vmem:[%s2993 + $0x31] sm:$0xff] %vm2580, %v2520
  %3064 = vst.msk [vmem:[%s2993 + $0x39] sm:$0xff] %vm2580, %v2521
  %3065 = vst.msk [vmem:[%s2993 + $0x49] sm:$0xff] %vm2580, %v2522
  %3066 = vst.msk [vmem:[%s2993 + $0x51] sm:$0xff] %vm2580, %v2523
  %3067 = vst.msk [vmem:[%s2993 + $0x61] sm:$0xff] %vm2580, %v2524
  %3068 = vst.msk [vmem:[%s2993 + $0x69] sm:$0xff] %vm2580, %v2525
  %3069 = vst.msk [vmem:[%s2993 + $0x79] sm:$0xff] %vm2580, %v2526
  %3070 = vst.msk [vmem:[%s2993 + $0x81] sm:$0xff] %vm2580, %v2527
  %3071 = vst.msk [vmem:[%s2993 + $0x91] sm:$0xff] %vm2580, %v2528
  %3072 = vst.msk [vmem:[%s2993 + $0x99] sm:$0xff] %vm2580, %v2529
  %3073 = vst.msk [vmem:[%s2993 + $0xa9] sm:$0xff] %vm2580, %v2530
  %3074 = vst.msk [vmem:[%s2993 + $0xb1] sm:$0xff] %vm2580, %v2531
  %3075 = vst.msk [vmem:[%s2993 + $0xc1] sm:$0xff] %vm2580, %v2532
  %3076 = vst.msk [vmem:[%s2993 + $0xc9] sm:$0xff] %vm2580, %v2533
  %3077 = vst.msk [vmem:[%s2993 + $0xd9] sm:$0xff] %vm2580, %v2534
  %3078 = vst.msk [vmem:[%s2993 + $0xe1] sm:$0xff] %vm2580, %v2535
  %3079 = vst.msk [vmem:[%s2993 + $0xf1] sm:$0xff] %vm2580, %v2536
  %3080 = vst.msk [vmem:[%s2993 + $0xf9] sm:$0xff] %vm2580, %v2537
  %3081 = vst.msk [vmem:[%s2993 + $0x109] sm:$0xff] %vm2580, %v2538
  %3082 = vst.msk [vmem:[%s2993 + $0x111] sm:$0xff] %vm2580, %v2539
  %3083 = vst.msk [vmem:[%s2993 + $0x121] sm:$0xff] %vm2580, %v2540
  %3084 = vst.msk [vmem:[%s2993 + $0x129] sm:$0xff] %vm2580, %v2541
  %3085 = vst.msk [vmem:[%s2993 + $0x139] sm:$0xff] %vm2580, %v2542
  %3086 = vst.msk [vmem:[%s2993 + $0x141] sm:$0xff] %vm2580, %v2543
  %3087 = vst.msk [vmem:[%s2993 + $0x151] sm:$0xff] %vm2580, %v2544
  %3088 = vst.msk [vmem:[%s2993 + $0x159] sm:$0xff] %vm2580, %v2545
  %3089 = vst.msk [vmem:[%s2993 + $0x169] sm:$0xff] %vm2580, %v2546
  %3090 = vst.msk [vmem:[%s2993 + $0x171] sm:$0xff] %vm2580, %v2547
  %3091 = vst.msk [vmem:[%s2993 + $0x1b1] sm:$0xff] %vm2580, %v2548
  %3092 = vst.msk [vmem:[%s2993 + $0x1b9] sm:$0xff] %vm2580, %v2549
  %3093 = vst.msk [vmem:[%s2993 + $0x1c9] sm:$0xff] %vm2580, %v2550
  %3094 = vst.msk [vmem:[%s2993 + $0x1d1] sm:$0xff] %vm2580, %v2551
  %3095 = vst.msk [vmem:[%s2993 + $0x1e1] sm:$0xff] %vm2580, %v2552
  %3096 = vst.msk [vmem:[%s2993 + $0x1e9] sm:$0xff] %vm2580, %v2553
  %3097 = vst.msk [vmem:[%s2993 + $0x1f9] sm:$0xff] %vm2580, %v2554
  %3098 = vst.msk [vmem:[%s2993 + $0x201] sm:$0xff] %vm2580, %v2555
  %3099 = vst.msk [vmem:[%s2993 + $0x211] sm:$0xff] %vm2580, %v2556
  %3100 = vst.msk [vmem:[%s2993 + $0x219] sm:$0xff] %vm2580, %v2557
  %3101 = vst.msk [vmem:[%s2993 + $0x229] sm:$0xff] %vm2580, %v2558
  %3102 = vst.msk [vmem:[%s2993 + $0x231] sm:$0xff] %vm2580, %v2559
  %3103 = vst.msk [vmem:[%s2993 + $0x241] sm:$0xff] %vm2580, %v2560
  %3104 = vst.msk [vmem:[%s2993 + $0x249] sm:$0xff] %vm2580, %v2561
  %3105 = vst.msk [vmem:[%s2993 + $0x259] sm:$0xff] %vm2580, %v2562
  %3106 = vst.msk [vmem:[%s2993 + $0x261] sm:$0xff] %vm2580, %v2563
  %3107 = vst.msk [vmem:[%s2993 + $0x271] sm:$0xff] %vm2580, %v2564
  %3108 = vst.msk [vmem:[%s2993 + $0x279] sm:$0xff] %vm2580, %v2565
  %3109 = vst.msk [vmem:[%s2993 + $0x289] sm:$0xff] %vm2580, %v2566
  %3110 = vst.msk [vmem:[%s2993 + $0x291] sm:$0xff] %vm2580, %v2567
  %3111 = vst.msk [vmem:[%s2993 + $0x2a1] sm:$0xff] %vm2580, %v2568
  %3112 = vst.msk [vmem:[%s2993 + $0x2a9] sm:$0xff] %vm2580, %v2569
  %3113 = vst.msk [vmem:[%s2993 + $0x2b9] sm:$0xff] %vm2580, %v2570
  %3114 = vst.msk [vmem:[%s2993 + $0x2c1] sm:$0xff] %vm2580, %v2571
  %3115 = vst.msk [vmem:[%s2993 + $0x2d1] sm:$0xff] %vm2580, %v2572
  %3116 = vst.msk [vmem:[%s2993 + $0x2d9] sm:$0xff] %vm2580, %v2573
  %3117 = vst.msk [vmem:[%s2993 + $0x2e9] sm:$0xff] %vm2580, %v2574
  %3118 = vst.msk [vmem:[%s2993 + $0x2f1] sm:$0xff] %vm2580, %v2575
  %3119 = vst.msk [vmem:[%s2993 + $0x301] sm:$0xff] %vm2580, %v2576
  %3120 = vst.msk [vmem:[%s2993 + $0x309] sm:$0xff] %vm2580, %v2577
  %3121 = vst.msk [vmem:[%s2993 + $0x319] sm:$0xff] %vm2580, %v2578
  %3122 = vst.msk [vmem:[%s2993 + $0x321] sm:$0xff] %vm2580, %v2579
  %v3123 = vld [vmem:[#allocation3] ss:$2 sm:$0xff]
  %s3124 = scalar_lea.vmem [#allocation3], 24
  %v3125 = vld [vmem:[%s3124] ss:$2 sm:$0xff]
  %s3126 = scalar_lea.vmem [#allocation3], 48
  %v3127 = vld [vmem:[%s3126] ss:$2 sm:$0xff]
  %s3128 = scalar_lea.vmem [#allocation3], 72
  %v3129 = vld [vmem:[%s3128] ss:$2 sm:$0xff]
  %s3130 = scalar_lea.vmem [#allocation3], 96
  %v3131 = vld [vmem:[%s3130] ss:$2 sm:$0xff]
  %s3132 = scalar_lea.vmem [#allocation3], 120
  %v3133 = vld [vmem:[%s3132] ss:$2 sm:$0xff]
  %s3134 = scalar_lea.vmem [#allocation3], 144
  %v3135 = vld [vmem:[%s3134] ss:$2 sm:$0xff]
  %s3136 = scalar_lea.vmem [#allocation3], 168
  %v3137 = vld [vmem:[%s3136] ss:$2 sm:$0xff]
  %s3138 = scalar_lea.vmem [#allocation3], 192
  %v3139 = vld [vmem:[%s3138] ss:$2 sm:$0xff]
  %s3140 = scalar_lea.vmem [#allocation3], 216
  %v3141 = vld [vmem:[%s3140] ss:$2 sm:$0xff]
  %s3142 = scalar_lea.vmem [#allocation3], 240
  %v3143 = vld [vmem:[%s3142] ss:$2 sm:$0xff]
  %s3144 = scalar_lea.vmem [#allocation3], 264
  %v3145 = vld [vmem:[%s3144] ss:$2 sm:$0xff]
  %s3146 = scalar_lea.vmem [#allocation3], 288
  %v3147 = vld [vmem:[%s3146] ss:$2 sm:$0xff]
  %s3148 = scalar_lea.vmem [#allocation3], 312
  %v3149 = vld [vmem:[%s3148] ss:$2 sm:$0xff]
  %s3150 = scalar_lea.vmem [#allocation3], 336
  %v3151 = vld [vmem:[%s3150] ss:$2 sm:$0xff]
  %s3152 = scalar_lea.vmem [#allocation3], 360
  %v3153 = vld [vmem:[%s3152] ss:$2 sm:$0xff]
  %s3154 = scalar_lea.vmem [#allocation3], 384
  %v3155 = vld [vmem:[%s3154] ss:$2 sm:$0xff]
  %s3156 = scalar_lea.vmem [#allocation3], 432
  %v3157 = vld [vmem:[%s3156] ss:$2 sm:$0xff]
  %s3158 = scalar_lea.vmem [#allocation3], 456
  %v3159 = vld [vmem:[%s3158] ss:$2 sm:$0xff]
  %s3160 = scalar_lea.vmem [#allocation3], 480
  %v3161 = vld [vmem:[%s3160] ss:$2 sm:$0xff]
  %s3162 = scalar_lea.vmem [#allocation3], 504
  %v3163 = vld [vmem:[%s3162] ss:$2 sm:$0xff]
  %s3164 = scalar_lea.vmem [#allocation3], 528
  %v3165 = vld [vmem:[%s3164] ss:$2 sm:$0xff]
  %s3166 = scalar_lea.vmem [#allocation3], 552
  %v3167 = vld [vmem:[%s3166] ss:$2 sm:$0xff]
  %s3168 = scalar_lea.vmem [#allocation3], 576
  %v3169 = vld [vmem:[%s3168] ss:$2 sm:$0xff]
  %s3170 = scalar_lea.vmem [#allocation3], 600
  %v3171 = vld [vmem:[%s3170] ss:$2 sm:$0xff]
  %s3172 = scalar_lea.vmem [#allocation3], 624
  %v3173 = vld [vmem:[%s3172] ss:$2 sm:$0xff]
  %s3174 = scalar_lea.vmem [#allocation3], 648
  %v3175 = vld [vmem:[%s3174] ss:$2 sm:$0xff]
  %s3176 = scalar_lea.vmem [#allocation3], 672
  %v3177 = vld [vmem:[%s3176] ss:$2 sm:$0xff]
  %s3178 = scalar_lea.vmem [#allocation3], 696
  %v3179 = vld [vmem:[%s3178] ss:$2 sm:$0xff]
  %s3180 = scalar_lea.vmem [#allocation3], 720
  %v3181 = vld [vmem:[%s3180] ss:$2 sm:$0xff]
  %s3182 = scalar_lea.vmem [#allocation3], 744
  %v3183 = vld [vmem:[%s3182] ss:$2 sm:$0xff]
  %s3184 = scalar_lea.vmem [#allocation3], 768
  %v3185 = vld [vmem:[%s3184] ss:$2 sm:$0xff]
  %s3186 = scalar_lea.vmem [#allocation3], 792
  %v3187 = vld [vmem:[%s3186] ss:$2 sm:$0xff]
  %s3188 = scalar_lea.vmem [#allocation3], 816
  %v3189 = vld [vmem:[%s3188] ss:$2 sm:$0xff]
  %s3190 = scalar_lea.vmem [#allocation3], 1
  %v3191 = vld [vmem:[%s3190] ss:$2 sm:$0xff]
  %s3192 = scalar_lea.vmem [#allocation3], 25
  %v3193 = vld [vmem:[%s3192] ss:$2 sm:$0xff]
  %s3194 = scalar_lea.vmem [#allocation3], 49
  %v3195 = vld [vmem:[%s3194] ss:$2 sm:$0xff]
  %s3196 = scalar_lea.vmem [#allocation3], 73
  %v3197 = vld [vmem:[%s3196] ss:$2 sm:$0xff]
  %s3198 = scalar_lea.vmem [#allocation3], 97
  %v3199 = vld [vmem:[%s3198] ss:$2 sm:$0xff]
  %s3200 = scalar_lea.vmem [#allocation3], 121
  %v3201 = vld [vmem:[%s3200] ss:$2 sm:$0xff]
  %s3202 = scalar_lea.vmem [#allocation3], 145
  %v3203 = vld [vmem:[%s3202] ss:$2 sm:$0xff]
  %s3204 = scalar_lea.vmem [#allocation3], 169
  %v3205 = vld [vmem:[%s3204] ss:$2 sm:$0xff]
  %s3206 = scalar_lea.vmem [#allocation3], 193
  %v3207 = vld [vmem:[%s3206] ss:$2 sm:$0xff]
  %s3208 = scalar_lea.vmem [#allocation3], 217
  %v3209 = vld [vmem:[%s3208] ss:$2 sm:$0xff]
  %s3210 = scalar_lea.vmem [#allocation3], 241
  %v3211 = vld [vmem:[%s3210] ss:$2 sm:$0xff]
  %s3212 = scalar_lea.vmem [#allocation3], 265
  %v3213 = vld [vmem:[%s3212] ss:$2 sm:$0xff]
  %s3214 = scalar_lea.vmem [#allocation3], 289
  %v3215 = vld [vmem:[%s3214] ss:$2 sm:$0xff]
  %s3216 = scalar_lea.vmem [#allocation3], 313
  %v3217 = vld [vmem:[%s3216] ss:$2 sm:$0xff]
  %s3218 = scalar_lea.vmem [#allocation3], 337
  %v3219 = vld [vmem:[%s3218] ss:$2 sm:$0xff]
  %s3220 = scalar_lea.vmem [#allocation3], 361
  %v3221 = vld [vmem:[%s3220] ss:$2 sm:$0xff]
  %s3222 = scalar_lea.vmem [#allocation3], 385
  %v3223 = vld [vmem:[%s3222] ss:$2 sm:$0xff]
  %s3224 = scalar_lea.vmem [#allocation3], 433
  %v3225 = vld [vmem:[%s3224] ss:$2 sm:$0xff]
  %s3226 = scalar_lea.vmem [#allocation3], 457
  %v3227 = vld [vmem:[%s3226] ss:$2 sm:$0xff]
  %s3228 = scalar_lea.vmem [#allocation3], 481
  %v3229 = vld [vmem:[%s3228] ss:$2 sm:$0xff]
  %s3230 = scalar_lea.vmem [#allocation3], 505
  %v3231 = vld [vmem:[%s3230] ss:$2 sm:$0xff]
  %s3232 = scalar_lea.vmem [#allocation3], 529
  %v3233 = vld [vmem:[%s3232] ss:$2 sm:$0xff]
  %s3234 = scalar_lea.vmem [#allocation3], 553
  %v3235 = vld [vmem:[%s3234] ss:$2 sm:$0xff]
  %s3236 = scalar_lea.vmem [#allocation3], 577
  %v3237 = vld [vmem:[%s3236] ss:$2 sm:$0xff]
  %s3238 = scalar_lea.vmem [#allocation3], 601
  %v3239 = vld [vmem:[%s3238] ss:$2 sm:$0xff]
  %s3240 = scalar_lea.vmem [#allocation3], 625
  %v3241 = vld [vmem:[%s3240] ss:$2 sm:$0xff]
  %s3242 = scalar_lea.vmem [#allocation3], 649
  %v3243 = vld [vmem:[%s3242] ss:$2 sm:$0xff]
  %s3244 = scalar_lea.vmem [#allocation3], 673
  %v3245 = vld [vmem:[%s3244] ss:$2 sm:$0xff]
  %s3246 = scalar_lea.vmem [#allocation3], 697
  %v3247 = vld [vmem:[%s3246] ss:$2 sm:$0xff]
  %s3248 = scalar_lea.vmem [#allocation3], 721
  %v3249 = vld [vmem:[%s3248] ss:$2 sm:$0xff]
  %s3250 = scalar_lea.vmem [#allocation3], 745
  %v3251 = vld [vmem:[%s3250] ss:$2 sm:$0xff]
  %s3252 = scalar_lea.vmem [#allocation3], 769
  %v3253 = vld [vmem:[%s3252] ss:$2 sm:$0xff]
  %s3254 = scalar_lea.vmem [#allocation3], 793
  %v3255 = vld [vmem:[%s3254] ss:$2 sm:$0xff]
  %s3256 = scalar_lea.vmem [#allocation3], 817
  %v3257 = vld [vmem:[%s3256] ss:$2 sm:$0xff]
  %v3258 = vmax.f32 %v3123, %v3191
  %v3259 = vmax.f32 %v3125, %v3193
  %v3260 = vmax.f32 %v3127, %v3195
  %v3261 = vmax.f32 %v3129, %v3197
  %v3262 = vmax.f32 %v3131, %v3199
  %v3263 = vmax.f32 %v3133, %v3201
  %v3264 = vmax.f32 %v3135, %v3203
  %v3265 = vmax.f32 %v3137, %v3205
  %v3266 = vmax.f32 %v3139, %v3207
  %v3267 = vmax.f32 %v3141, %v3209
  %v3268 = vmax.f32 %v3143, %v3211
  %v3269 = vmax.f32 %v3145, %v3213
  %v3270 = vmax.f32 %v3147, %v3215
  %v3271 = vmax.f32 %v3149, %v3217
  %v3272 = vmax.f32 %v3151, %v3219
  %v3273 = vmax.f32 %v3153, %v3221
  %v3274 = vmax.f32 %v3155, %v3223
  %v3275 = vmax.f32 %v3157, %v3225
  %v3276 = vmax.f32 %v3159, %v3227
  %v3277 = vmax.f32 %v3161, %v3229
  %v3278 = vmax.f32 %v3163, %v3231
  %v3279 = vmax.f32 %v3165, %v3233
  %v3280 = vmax.f32 %v3167, %v3235
  %v3281 = vmax.f32 %v3169, %v3237
  %v3282 = vmax.f32 %v3171, %v3239
  %v3283 = vmax.f32 %v3173, %v3241
  %v3284 = vmax.f32 %v3175, %v3243
  %v3285 = vmax.f32 %v3177, %v3245
  %v3286 = vmax.f32 %v3179, %v3247
  %v3287 = vmax.f32 %v3181, %v3249
  %v3288 = vmax.f32 %v3183, %v3251
  %v3289 = vmax.f32 %v3185, %v3253
  %v3290 = vmax.f32 %v3187, %v3255
  %v3291 = vmax.f32 %v3189, %v3257
  %s3292 = scalar_lea.vmem [#allocation3], 2
  %v3293 = vld [vmem:[%s3292] ss:$2 sm:$0xff]
  %s3294 = scalar_lea.vmem [#allocation3], 26
  %v3295 = vld [vmem:[%s3294] ss:$2 sm:$0xff]
  %s3296 = scalar_lea.vmem [#allocation3], 50
  %v3297 = vld [vmem:[%s3296] ss:$2 sm:$0xff]
  %s3298 = scalar_lea.vmem [#allocation3], 74
  %v3299 = vld [vmem:[%s3298] ss:$2 sm:$0xff]
  %s3300 = scalar_lea.vmem [#allocation3], 98
  %v3301 = vld [vmem:[%s3300] ss:$2 sm:$0xff]
  %s3302 = scalar_lea.vmem [#allocation3], 122
  %v3303 = vld [vmem:[%s3302] ss:$2 sm:$0xff]
  %s3304 = scalar_lea.vmem [#allocation3], 146
  %v3305 = vld [vmem:[%s3304] ss:$2 sm:$0xff]
  %s3306 = scalar_lea.vmem [#allocation3], 170
  %v3307 = vld [vmem:[%s3306] ss:$2 sm:$0xff]
  %s3308 = scalar_lea.vmem [#allocation3], 194
  %v3309 = vld [vmem:[%s3308] ss:$2 sm:$0xff]
  %s3310 = scalar_lea.vmem [#allocation3], 218
  %v3311 = vld [vmem:[%s3310] ss:$2 sm:$0xff]
  %s3312 = scalar_lea.vmem [#allocation3], 242
  %v3313 = vld [vmem:[%s3312] ss:$2 sm:$0xff]
  %s3314 = scalar_lea.vmem [#allocation3], 266
  %v3315 = vld [vmem:[%s3314] ss:$2 sm:$0xff]
  %s3316 = scalar_lea.vmem [#allocation3], 290
  %v3317 = vld [vmem:[%s3316] ss:$2 sm:$0xff]
  %s3318 = scalar_lea.vmem [#allocation3], 314
  %v3319 = vld [vmem:[%s3318] ss:$2 sm:$0xff]
  %s3320 = scalar_lea.vmem [#allocation3], 338
  %v3321 = vld [vmem:[%s3320] ss:$2 sm:$0xff]
  %s3322 = scalar_lea.vmem [#allocation3], 362
  %v3323 = vld [vmem:[%s3322] ss:$2 sm:$0xff]
  %s3324 = scalar_lea.vmem [#allocation3], 386
  %v3325 = vld [vmem:[%s3324] ss:$2 sm:$0xff]
  %s3326 = scalar_lea.vmem [#allocation3], 434
  %v3327 = vld [vmem:[%s3326] ss:$2 sm:$0xff]
  %s3328 = scalar_lea.vmem [#allocation3], 458
  %v3329 = vld [vmem:[%s3328] ss:$2 sm:$0xff]
  %s3330 = scalar_lea.vmem [#allocation3], 482
  %v3331 = vld [vmem:[%s3330] ss:$2 sm:$0xff]
  %s3332 = scalar_lea.vmem [#allocation3], 506
  %v3333 = vld [vmem:[%s3332] ss:$2 sm:$0xff]
  %s3334 = scalar_lea.vmem [#allocation3], 530
  %v3335 = vld [vmem:[%s3334] ss:$2 sm:$0xff]
  %s3336 = scalar_lea.vmem [#allocation3], 554
  %v3337 = vld [vmem:[%s3336] ss:$2 sm:$0xff]
  %s3338 = scalar_lea.vmem [#allocation3], 578
  %v3339 = vld [vmem:[%s3338] ss:$2 sm:$0xff]
  %s3340 = scalar_lea.vmem [#allocation3], 602
  %v3341 = vld [vmem:[%s3340] ss:$2 sm:$0xff]
  %s3342 = scalar_lea.vmem [#allocation3], 626
  %v3343 = vld [vmem:[%s3342] ss:$2 sm:$0xff]
  %s3344 = scalar_lea.vmem [#allocation3], 650
  %v3345 = vld [vmem:[%s3344] ss:$2 sm:$0xff]
  %s3346 = scalar_lea.vmem [#allocation3], 674
  %v3347 = vld [vmem:[%s3346] ss:$2 sm:$0xff]
  %s3348 = scalar_lea.vmem [#allocation3], 698
  %v3349 = vld [vmem:[%s3348] ss:$2 sm:$0xff]
  %s3350 = scalar_lea.vmem [#allocation3], 722
  %v3351 = vld [vmem:[%s3350] ss:$2 sm:$0xff]
  %s3352 = scalar_lea.vmem [#allocation3], 746
  %v3353 = vld [vmem:[%s3352] ss:$2 sm:$0xff]
  %s3354 = scalar_lea.vmem [#allocation3], 770
  %v3355 = vld [vmem:[%s3354] ss:$2 sm:$0xff]
  %s3356 = scalar_lea.vmem [#allocation3], 794
  %v3357 = vld [vmem:[%s3356] ss:$2 sm:$0xff]
  %s3358 = scalar_lea.vmem [#allocation3], 818
  %v3359 = vld [vmem:[%s3358] ss:$2 sm:$0xff]
  %v3360 = vmax.f32 %v3258, %v3293
  %v3361 = vmax.f32 %v3259, %v3295
  %v3362 = vmax.f32 %v3260, %v3297
  %v3363 = vmax.f32 %v3261, %v3299
  %v3364 = vmax.f32 %v3262, %v3301
  %v3365 = vmax.f32 %v3263, %v3303
  %v3366 = vmax.f32 %v3264, %v3305
  %v3367 = vmax.f32 %v3265, %v3307
  %v3368 = vmax.f32 %v3266, %v3309
  %v3369 = vmax.f32 %v3267, %v3311
  %v3370 = vmax.f32 %v3268, %v3313
  %v3371 = vmax.f32 %v3269, %v3315
  %v3372 = vmax.f32 %v3270, %v3317
  %v3373 = vmax.f32 %v3271, %v3319
  %v3374 = vmax.f32 %v3272, %v3321
  %v3375 = vmax.f32 %v3273, %v3323
  %v3376 = vmax.f32 %v3274, %v3325
  %v3377 = vmax.f32 %v3275, %v3327
  %v3378 = vmax.f32 %v3276, %v3329
  %v3379 = vmax.f32 %v3277, %v3331
  %v3380 = vmax.f32 %v3278, %v3333
  %v3381 = vmax.f32 %v3279, %v3335
  %v3382 = vmax.f32 %v3280, %v3337
  %v3383 = vmax.f32 %v3281, %v3339
  %v3384 = vmax.f32 %v3282, %v3341
  %v3385 = vmax.f32 %v3283, %v3343
  %v3386 = vmax.f32 %v3284, %v3345
  %v3387 = vmax.f32 %v3285, %v3347
  %v3388 = vmax.f32 %v3286, %v3349
  %v3389 = vmax.f32 %v3287, %v3351
  %v3390 = vmax.f32 %v3288, %v3353
  %v3391 = vmax.f32 %v3289, %v3355
  %v3392 = vmax.f32 %v3290, %v3357
  %v3393 = vmax.f32 %v3291, %v3359
  %v3394 = vmax.f32 %v3360, %v3361
  %v3395 = vmax.f32 %v3362, %v3363
  %v3396 = vmax.f32 %v3364, %v3365
  %v3397 = vmax.f32 %v3366, %v3367
  %v3398 = vmax.f32 %v3368, %v3369
  %v3399 = vmax.f32 %v3370, %v3371
  %v3400 = vmax.f32 %v3372, %v3373
  %v3401 = vmax.f32 %v3374, %v3375
  %v3402 = vmax.f32 %v3377, %v3378
  %v3403 = vmax.f32 %v3379, %v3380
  %v3404 = vmax.f32 %v3381, %v3382
  %v3405 = vmax.f32 %v3383, %v3384
  %v3406 = vmax.f32 %v3385, %v3386
  %v3407 = vmax.f32 %v3387, %v3388
  %v3408 = vmax.f32 %v3389, %v3390
  %v3409 = vmax.f32 %v3391, %v3392
  %v3410 = vmax.f32 %v3394, %v3362
  %v3411 = vmax.f32 %v3395, %v3364
  %v3412 = vmax.f32 %v3396, %v3366
  %v3413 = vmax.f32 %v3397, %v3368
  %v3414 = vmax.f32 %v3398, %v3370
  %v3415 = vmax.f32 %v3399, %v3372
  %v3416 = vmax.f32 %v3400, %v3374
  %v3417 = vmax.f32 %v3401, %v3376
  %v3418 = vmax.f32 %v3402, %v3379
  %v3419 = vmax.f32 %v3403, %v3381
  %v3420 = vmax.f32 %v3404, %v3383
  %v3421 = vmax.f32 %v3405, %v3385
  %v3422 = vmax.f32 %v3406, %v3387
  %v3423 = vmax.f32 %v3407, %v3389
  %v3424 = vmax.f32 %v3408, %v3391
  %v3425 = vmax.f32 %v3409, %v3393
  %v3426 = vsub.f32 %v3410, %v2714
  %v3427 = vsub.f32 %v3411, %v2714
  %v3428 = vsub.f32 %v3412, %v2714
  %v3429 = vsub.f32 %v3413, %v2714
  %v3430 = vsub.f32 %v3414, %v2714
  %v3431 = vsub.f32 %v3415, %v2714
  %v3432 = vsub.f32 %v3416, %v2714
  %v3433 = vsub.f32 %v3417, %v2714
  %v3434 = vsub.f32 %v3418, %v2714
  %v3435 = vsub.f32 %v3419, %v2714
  %v3436 = vsub.f32 %v3420, %v2714
  %v3437 = vsub.f32 %v3421, %v2714
  %v3438 = vsub.f32 %v3422, %v2714
  %v3439 = vsub.f32 %v3423, %v2714
  %v3440 = vsub.f32 %v3424, %v2714
  %v3441 = vsub.f32 %v3425, %v2714
  %v3442 = vmul.f32 %v3426, %v2978
  %v3443 = vmul.f32 %v3427, %v2978
  %v3444 = vmul.f32 %v3428, %v2978
  %v3445 = vmul.f32 %v3429, %v2978
  %v3446 = vmul.f32 %v3430, %v2978
  %v3447 = vmul.f32 %v3431, %v2978
  %v3448 = vmul.f32 %v3432, %v2978
  %v3449 = vmul.f32 %v3433, %v2978
  %v3450 = vmul.f32 %v3434, %v2978
  %v3451 = vmul.f32 %v3435, %v2978
  %v3452 = vmul.f32 %v3436, %v2978
  %v3453 = vmul.f32 %v3437, %v2978
  %v3454 = vmul.f32 %v3438, %v2978
  %v3455 = vmul.f32 %v3439, %v2978
  %v3456 = vmul.f32 %v3440, %v2978
  %v3457 = vmul.f32 %v3441, %v2978
  %v3458 = vld [vmem:[%s0] ss:$2 sm:$0xff]
  %s3459 = scalar_lea.vmem %s0, 32
  %v3460 = vld [vmem:[%s3459] ss:$2 sm:$0xff]
  %s3461 = scalar_lea.vmem %s0, 64
  %v3462 = vld [vmem:[%s3461] ss:$2 sm:$0xff]
  %s3463 = scalar_lea.vmem %s0, 96
  %v3464 = vld [vmem:[%s3463] ss:$2 sm:$0xff]
  %s3465 = scalar_lea.vmem %s0, 128
  %v3466 = vld [vmem:[%s3465] ss:$2 sm:$0xff]
  %s3467 = scalar_lea.vmem %s0, 160
  %v3468 = vld [vmem:[%s3467] ss:$2 sm:$0xff]
  %s3469 = scalar_lea.vmem %s0, 192
  %v3470 = vld [vmem:[%s3469] ss:$2 sm:$0xff]
  %s3471 = scalar_lea.vmem %s0, 224
  %v3472 = vld [vmem:[%s3471] ss:$2 sm:$0xff]
  %s3473 = scalar_lea.vmem %s0, 256
  %v3474 = vld [vmem:[%s3473] ss:$2 sm:$0xff]
  %s3475 = scalar_lea.vmem %s0, 288
  %v3476 = vld [vmem:[%s3475] ss:$2 sm:$0xff]
  %s3477 = scalar_lea.vmem %s0, 320
  %v3478 = vld [vmem:[%s3477] ss:$2 sm:$0xff]
  %s3479 = scalar_lea.vmem %s0, 352
  %v3480 = vld [vmem:[%s3479] ss:$2 sm:$0xff]
  %s3481 = scalar_lea.vmem %s0, 384
  %v3482 = vld [vmem:[%s3481] ss:$2 sm:$0xff]
  %s3483 = scalar_lea.vmem %s0, 416
  %v3484 = vld [vmem:[%s3483] ss:$2 sm:$0xff]
  %s3485 = scalar_lea.vmem %s0, 448
  %v3486 = vld [vmem:[%s3485] ss:$2 sm:$0xff]
  %s3487 = scalar_lea.vmem %s0, 480
  %v3488 = vld [vmem:[%s3487] ss:$2 sm:$0xff]
  %v3489 = vld [vmem:[%s3] sm:$0xff]
  %v3491 = vsel %vm17, %v3458, 0
  %v3494 = vsel %vm17, %v3460, 0
  %v3497 = vsel %vm17, %v3462, 0
  %v3500 = vsel %vm17, %v3464, 0
  %v3503 = vsel %vm17, %v3466, 0
  %v3506 = vsel %vm17, %v3468, 0
  %v3509 = vsel %vm17, %v3470, 0
  %v3512 = vsel %vm17, %v3472, 0
  %v3515 = vsel %vm17, %v3474, 0
  %v3518 = vsel %vm17, %v3476, 0
  %v3521 = vsel %vm17, %v3478, 0
  %v3524 = vsel %vm17, %v3480, 0
  %v3527 = vsel %vm17, %v3482, 0
  %v3530 = vsel %vm17, %v3484, 0
  %v3533 = vsel %vm17, %v3486, 0
  %v3536 = vsel %vm17, %v3488, 0
  %3538 = vmatprep.subr.mxu0 0.0
  %3539 = vmatpush1.msra.mxu0 0.0
  %3540 = vmatprep.subr.mxu0 0.0
  %3541 = vmatpush1.msra.mxu0 0.0
  %3542 = vmatprep.subr.mxu0 0.0
  %3543 = vmatpush1.msra.mxu0 0.0
  %3544 = vmatprep.subr.mxu0 0.0
  %3545 = vmatpush1.msra.mxu0 0.0
  %3546 = vmatprep.subr.mxu0 0.0
  %3547 = vmatpush1.msra.mxu0 0.0
  %3548 = vmatprep.subr.mxu0 0.0
  %3549 = vmatpush1.msra.mxu0 0.0
  %3550 = vmatprep.subr.mxu0 0.0
  %3551 = vmatpush1.msra.mxu0 0.0
  %3552 = vmatprep.subr.mxu0 0.0
  %3553 = vmatpush1.msra.mxu0 0.0
  %3554 = vmatprep.subr.mxu0 0.0
  %3555 = vmatpush1.msra.mxu0 0.0
  %3556 = vmatprep.subr.mxu0 0.0
  %3557 = vmatpush1.msra.mxu0 0.0
  %3558 = vmatprep.subr.mxu0 0.0
  %3559 = vmatpush1.msra.mxu0 0.0
  %3560 = vmatprep.subr.mxu0 0.0
  %3561 = vmatpush1.msra.mxu0 0.0
  %3562 = vmatprep.subr.mxu0 0.0
  %3563 = vmatpush1.msra.mxu0 0.0
  %3564 = vmatprep.subr.mxu0 0.0
  %3565 = vmatpush1.msra.mxu0 0.0
  %3566 = vmatprep.subr.mxu0 0.0
  %3567 = vmatpush1.msra.mxu0 0.0
  %3568 = vmatprep.subr.mxu0 0.0
  %3569 = vmatpush1.msra.mxu0 %v3489
  %3570 = vmatprep.subr.mxu0 0.0
  %3571 = vmatpush2.msra.mxu0 0.0
  %3572 = vmatprep.subr.mxu0 0.0
  %3573 = vmatpush2.msra.mxu0 0.0
  %3574 = vmatprep.subr.mxu0 0.0
  %3575 = vmatpush2.msra.mxu0 0.0
  %3576 = vmatprep.subr.mxu0 0.0
  %3577 = vmatpush2.msra.mxu0 0.0
  %3578 = vmatprep.subr.mxu0 0.0
  %3579 = vmatpush2.msra.mxu0 0.0
  %3580 = vmatprep.subr.mxu0 0.0
  %3581 = vmatpush2.msra.mxu0 0.0
  %3582 = vmatprep.subr.mxu0 0.0
  %3583 = vmatpush2.msra.mxu0 0.0
  %3584 = vmatprep.subr.mxu0 0.0
  %3585 = vmatpush2.msra.mxu0 0.0
  %3586 = vmatprep.subr.mxu0 0.0
  %3587 = vmatpush2.msra.mxu0 0.0
  %3588 = vmatprep.subr.mxu0 0.0
  %3589 = vmatpush2.msra.mxu0 0.0
  %3590 = vmatprep.subr.mxu0 0.0
  %3591 = vmatpush2.msra.mxu0 0.0
  %3592 = vmatprep.subr.mxu0 0.0
  %3593 = vmatpush2.msra.mxu0 0.0
  %3594 = vmatprep.subr.mxu0 0.0
  %3595 = vmatpush2.msra.mxu0 0.0
  %3596 = vmatprep.subr.mxu0 0.0
  %3597 = vmatpush2.msra.mxu0 0.0
  %3598 = vmatprep.subr.mxu0 0.0
  %3599 = vmatpush2.msra.mxu0 0.0
  %3600 = vmatprep.subr.mxu0 0.0
  %3601 = vmatpush2.msra.mxu0 0.0
  %3602 = vmatprep.mubr.f32.mxu0 0.0
  %3603 = vmatmul.mubr.f32.gmra.mxu0 %v3491
  %v3604 = vpop.f32.mrf.mxu0
  %v3605 = vadd.f32 0.0, %v3604
  %v3606 = vpop.f32.mrf.mxu0
  %3607 = vmatprep.mubr.f32.mxu0 0.0
  %3608 = vmatmul.mubr.f32.gmra.mxu0 %v3494
  %v3609 = vpop.f32.mrf.mxu0
  %v3610 = vadd.f32 0.0, %v3609
  %v3611 = vpop.f32.mrf.mxu0
  %3612 = vmatprep.mubr.f32.mxu0 0.0
  %3613 = vmatmul.mubr.f32.gmra.mxu0 %v3497
  %v3614 = vpop.f32.mrf.mxu0
  %v3615 = vadd.f32 0.0, %v3614
  %v3616 = vpop.f32.mrf.mxu0
  %3617 = vmatprep.mubr.f32.mxu0 0.0
  %3618 = vmatmul.mubr.f32.gmra.mxu0 %v3500
  %v3619 = vpop.f32.mrf.mxu0
  %v3620 = vadd.f32 0.0, %v3619
  %v3621 = vpop.f32.mrf.mxu0
  %3622 = vmatprep.mubr.f32.mxu0 0.0
  %3623 = vmatmul.mubr.f32.gmra.mxu0 %v3503
  %v3624 = vpop.f32.mrf.mxu0
  %v3625 = vadd.f32 0.0, %v3624
  %v3626 = vpop.f32.mrf.mxu0
  %3627 = vmatprep.mubr.f32.mxu0 0.0
  %3628 = vmatmul.mubr.f32.gmra.mxu0 %v3506
  %v3629 = vpop.f32.mrf.mxu0
  %v3630 = vadd.f32 0.0, %v3629
  %v3631 = vpop.f32.mrf.mxu0
  %3632 = vmatprep.mubr.f32.mxu0 0.0
  %3633 = vmatmul.mubr.f32.gmra.mxu0 %v3509
  %v3634 = vpop.f32.mrf.mxu0
  %v3635 = vadd.f32 0.0, %v3634
  %v3636 = vpop.f32.mrf.mxu0
  %3637 = vmatprep.mubr.f32.mxu0 0.0
  %3638 = vmatmul.mubr.f32.gmra.mxu0 %v3512
  %v3639 = vpop.f32.mrf.mxu0
  %v3640 = vadd.f32 0.0, %v3639
  %v3641 = vpop.f32.mrf.mxu0
  %3642 = vmatprep.mubr.f32.mxu0 0.0
  %3643 = vmatmul.mubr.f32.gmra.mxu0 %v3515
  %v3644 = vpop.f32.mrf.mxu0
  %v3645 = vadd.f32 0.0, %v3644
  %v3646 = vpop.f32.mrf.mxu0
  %3647 = vmatprep.mubr.f32.mxu0 0.0
  %3648 = vmatmul.mubr.f32.gmra.mxu0 %v3518
  %v3649 = vpop.f32.mrf.mxu0
  %v3650 = vadd.f32 0.0, %v3649
  %v3651 = vpop.f32.mrf.mxu0
  %3652 = vmatprep.mubr.f32.mxu0 0.0
  %3653 = vmatmul.mubr.f32.gmra.mxu0 %v3521
  %v3654 = vpop.f32.mrf.mxu0
  %v3655 = vadd.f32 0.0, %v3654
  %v3656 = vpop.f32.mrf.mxu0
  %3657 = vmatprep.mubr.f32.mxu0 0.0
  %3658 = vmatmul.mubr.f32.gmra.mxu0 %v3524
  %v3659 = vpop.f32.mrf.mxu0
  %v3660 = vadd.f32 0.0, %v3659
  %v3661 = vpop.f32.mrf.mxu0
  %3662 = vmatprep.mubr.f32.mxu0 0.0
  %3663 = vmatmul.mubr.f32.gmra.mxu0 %v3527
  %v3664 = vpop.f32.mrf.mxu0
  %v3665 = vadd.f32 0.0, %v3664
  %v3666 = vpop.f32.mrf.mxu0
  %3667 = vmatprep.mubr.f32.mxu0 0.0
  %3668 = vmatmul.mubr.f32.gmra.mxu0 %v3530
  %v3669 = vpop.f32.mrf.mxu0
  %v3670 = vadd.f32 0.0, %v3669
  %v3671 = vpop.f32.mrf.mxu0
  %3672 = vmatprep.mubr.f32.mxu0 0.0
  %3673 = vmatmul.mubr.f32.gmra.mxu0 %v3533
  %v3674 = vpop.f32.mrf.mxu0
  %v3675 = vadd.f32 0.0, %v3674
  %v3676 = vpop.f32.mrf.mxu0
  %3677 = vmatprep.mubr.f32.mxu0 0.0
  %3678 = vmatmul.mubr.f32.gmra.mxu0 %v3536
  %v3679 = vpop.f32.mrf.mxu0
  %v3680 = vadd.f32 0.0, %v3679
  %v3681 = vpop.f32.mrf.mxu0
  %3682 = vdwg.mxu0
  %v3683 = vsel %vm2580, %v3605, 0.0
  %v3684 = vsel %vm2580, %v3610, 0.0
  %v3685 = vadd.f32 %v3683, %v3684
  %v3686 = vsel %vm2580, %v3615, 0.0
  %v3687 = vadd.f32 %v3685, %v3686
  %v3688 = vsel %vm2580, %v3620, 0.0
  %v3689 = vadd.f32 %v3687, %v3688
  %v3690 = vsel %vm2580, %v3625, 0.0
  %v3691 = vadd.f32 %v3689, %v3690
  %v3692 = vsel %vm2580, %v3630, 0.0
  %v3693 = vadd.f32 %v3691, %v3692
  %v3694 = vsel %vm2580, %v3635, 0.0
  %v3695 = vadd.f32 %v3693, %v3694
  %v3696 = vsel %vm2580, %v3640, 0.0
  %v3697 = vadd.f32 %v3695, %v3696
  %v3698 = vsel %vm2580, %v3645, 0.0
  %v3699 = vadd.f32 %v3697, %v3698
  %v3700 = vsel %vm2580, %v3650, 0.0
  %v3701 = vadd.f32 %v3699, %v3700
  %v3702 = vsel %vm2580, %v3655, 0.0
  %v3703 = vadd.f32 %v3701, %v3702
  %v3704 = vsel %vm2580, %v3660, 0.0
  %v3705 = vadd.f32 %v3703, %v3704
  %v3706 = vsel %vm2580, %v3665, 0.0
  %v3707 = vadd.f32 %v3705, %v3706
  %v3708 = vsel %vm2580, %v3670, 0.0
  %v3709 = vadd.f32 %v3707, %v3708
  %v3710 = vsel %vm2580, %v3675, 0.0
  %v3711 = vadd.f32 %v3709, %v3710
  %v3712 = vsel %vm2580, %v3680, 0.0
  %v3713 = vadd.f32 %v3711, %v3712
  %v3714 = vrot.slane %v3713, 4
  %v3715 = vadd.f32 %v3713, %v3714
  %v3716 = vrot.slane %v3715, 2
  %v3717 = vadd.f32 %v3715, %v3716
  %v3718 = vrot.slane %v3717, 1
  %v3719 = vadd.f32 %v3717, %v3718
  %v3720 = vmul.f32 %v3719, 0.0078125
  %v3721 = vsub.f32 %v3605, %v3720
  %v3722 = vsub.f32 %v3610, %v3720
  %v3723 = vsub.f32 %v3615, %v3720
  %v3724 = vsub.f32 %v3620, %v3720
  %v3725 = vsub.f32 %v3625, %v3720
  %v3726 = vsub.f32 %v3630, %v3720
  %v3727 = vsub.f32 %v3635, %v3720
  %v3728 = vsub.f32 %v3640, %v3720
  %v3729 = vsub.f32 %v3645, %v3720
  %v3730 = vsub.f32 %v3650, %v3720
  %v3731 = vsub.f32 %v3655, %v3720
  %v3732 = vsub.f32 %v3660, %v3720
  %v3733 = vsub.f32 %v3665, %v3720
  %v3734 = vsub.f32 %v3670, %v3720
  %v3735 = vsub.f32 %v3675, %v3720
  %v3736 = vsub.f32 %v3680, %v3720
  %v3737 = vmul.f32 %v3721, %v3721
  %v3738 = vmul.f32 %v3722, %v3722
  %v3739 = vmul.f32 %v3723, %v3723
  %v3740 = vmul.f32 %v3724, %v3724
  %v3741 = vmul.f32 %v3725, %v3725
  %v3742 = vmul.f32 %v3726, %v3726
  %v3743 = vmul.f32 %v3727, %v3727
  %v3744 = vmul.f32 %v3728, %v3728
  %v3745 = vmul.f32 %v3729, %v3729
  %v3746 = vmul.f32 %v3730, %v3730
  %v3747 = vmul.f32 %v3731, %v3731
  %v3748 = vmul.f32 %v3732, %v3732
  %v3749 = vmul.f32 %v3733, %v3733
  %v3750 = vmul.f32 %v3734, %v3734
  %v3751 = vmul.f32 %v3735, %v3735
  %v3752 = vmul.f32 %v3736, %v3736
  %v3753 = vsel %vm2580, %v3737, 0.0
  %v3754 = vsel %vm2580, %v3738, 0.0
  %v3755 = vadd.f32 %v3753, %v3754
  %v3756 = vsel %vm2580, %v3739, 0.0
  %v3757 = vadd.f32 %v3755, %v3756
  %v3758 = vsel %vm2580, %v3740, 0.0
  %v3759 = vadd.f32 %v3757, %v3758
  %v3760 = vsel %vm2580, %v3741, 0.0
  %v3761 = vadd.f32 %v3759, %v3760
  %v3762 = vsel %vm2580, %v3742, 0.0
  %v3763 = vadd.f32 %v3761, %v3762
  %v3764 = vsel %vm2580, %v3743, 0.0
  %v3765 = vadd.f32 %v3763, %v3764
  %v3766 = vsel %vm2580, %v3744, 0.0
  %v3767 = vadd.f32 %v3765, %v3766
  %v3768 = vsel %vm2580, %v3745, 0.0
  %v3769 = vadd.f32 %v3767, %v3768
  %v3770 = vsel %vm2580, %v3746, 0.0
  %v3771 = vadd.f32 %v3769, %v3770
  %v3772 = vsel %vm2580, %v3747, 0.0
  %v3773 = vadd.f32 %v3771, %v3772
  %v3774 = vsel %vm2580, %v3748, 0.0
  %v3775 = vadd.f32 %v3773, %v3774
  %v3776 = vsel %vm2580, %v3749, 0.0
  %v3777 = vadd.f32 %v3775, %v3776
  %v3778 = vsel %vm2580, %v3750, 0.0
  %v3779 = vadd.f32 %v3777, %v3778
  %v3780 = vsel %vm2580, %v3751, 0.0
  %v3781 = vadd.f32 %v3779, %v3780
  %v3782 = vsel %vm2580, %v3752, 0.0
  %v3783 = vadd.f32 %v3781, %v3782
  %v3784 = vrot.slane %v3783, 4
  %v3785 = vadd.f32 %v3783, %v3784
  %v3786 = vrot.slane %v3785, 2
  %v3787 = vadd.f32 %v3785, %v3786
  %v3788 = vrot.slane %v3787, 1
  %v3789 = vadd.f32 %v3787, %v3788
  %v3790 = vmul.f32 %v3789, 0.0078125
  %v3791 = vadd.f32 %v3790, 1e-05
  %v3792 = vrsqrt.pop %v3791
  %v3793 = vmul.f32 %v3721, %v3792
  %v3794 = vmul.f32 %v3722, %v3792
  %v3795 = vmul.f32 %v3723, %v3792
  %v3796 = vmul.f32 %v3724, %v3792
  %v3797 = vmul.f32 %v3725, %v3792
  %v3798 = vmul.f32 %v3726, %v3792
  %v3799 = vmul.f32 %v3727, %v3792
  %v3800 = vmul.f32 %v3728, %v3792
  %v3801 = vmul.f32 %v3729, %v3792
  %v3802 = vmul.f32 %v3730, %v3792
  %v3803 = vmul.f32 %v3731, %v3792
  %v3804 = vmul.f32 %v3732, %v3792
  %v3805 = vmul.f32 %v3733, %v3792
  %v3806 = vmul.f32 %v3734, %v3792
  %v3807 = vmul.f32 %v3735, %v3792
  %v3808 = vmul.f32 %v3736, %v3792
  %v3809 = vadd.f32 %v3442, %v3793
  %v3810 = vadd.f32 %v3443, %v3794
  %v3811 = vadd.f32 %v3444, %v3795
  %v3812 = vadd.f32 %v3445, %v3796
  %v3813 = vadd.f32 %v3446, %v3797
  %v3814 = vadd.f32 %v3447, %v3798
  %v3815 = vadd.f32 %v3448, %v3799
  %v3816 = vadd.f32 %v3449, %v3800
  %v3817 = vadd.f32 %v3450, %v3801
  %v3818 = vadd.f32 %v3451, %v3802
  %v3819 = vadd.f32 %v3452, %v3803
  %v3820 = vadd.f32 %v3453, %v3804
  %v3821 = vadd.f32 %v3454, %v3805
  %v3822 = vadd.f32 %v3455, %v3806
  %v3823 = vadd.f32 %v3456, %v3807
  %v3824 = vadd.f32 %v3457, %v3808
  %3825 = vxpose.xlu0.b32.start [1/16] %v3809, 128
  %3826 = vxpose.xlu0.b32.cont [2/16] %v3810, 128
  %3827 = vxpose.xlu0.b32.cont [3/16] %v3811, 128
  %3828 = vxpose.xlu0.b32.cont [4/16] %v3812, 128
  %3829 = vxpose.xlu0.b32.cont [5/16] %v3813, 128
  %3830 = vxpose.xlu0.b32.cont [6/16] %v3814, 128
  %3831 = vxpose.xlu0.b32.cont [7/16] %v3815, 128
  %3832 = vxpose.xlu0.b32.cont [8/16] %v3816, 128
  %3833 = vxpose.xlu0.b32.cont [9/16] %v3817, 128
  %3834 = vxpose.xlu0.b32.cont [10/16] %v3818, 128
  %3835 = vxpose.xlu0.b32.cont [11/16] %v3819, 128
  %3836 = vxpose.xlu0.b32.cont [12/16] %v3820, 128
  %3837 = vxpose.xlu0.b32.cont [13/16] %v3821, 128
  %3838 = vxpose.xlu0.b32.cont [14/16] %v3822, 128
  %3839 = vxpose.xlu0.b32.cont [15/16] %v3823, 128
  %3840 = vxpose.xlu0.b32.end [16/16] %v3824, 128
  %v3841 = vpop.trf.xlu0
  %v3842 = vpop.trf.xlu0
  %v3843 = vpop.trf.xlu0
  %v3844 = vpop.trf.xlu0
  %v3845 = vpop.trf.xlu0
  %v3846 = vpop.trf.xlu0
  %v3847 = vpop.trf.xlu0
  %v3848 = vpop.trf.xlu0
  %v3849 = vpop.trf.xlu0
  %v3850 = vpop.trf.xlu0
  %v3851 = vpop.trf.xlu0
  %v3852 = vpop.trf.xlu0
  %v3853 = vpop.trf.xlu0
  %v3854 = vpop.trf.xlu0
  %v3855 = vpop.trf.xlu0
  %v3856 = vpop.trf.xlu0
  %3857 = vst [vmem:[%s4] sm:$0xff] %v3841
  %3858 = vst [vmem:[%s4 + $0x8] sm:$0xff] %v3842
  // Predicated region
  $region18: #{downsampling_block.1} parent=0 // pred_check
    _
  $region19: #{downsampling_block.1} parent=0 // pred_check_branch
    %3860 = sbr.rel (0) target = $region21
  $region20: #{downsampling_block.1} parent=0 // pred_region
    _
  $region21: #{downsampling_block.1} parent=0 // pred_fallthru
    _
  // Predicated region
  $region22: #{downsampling_block.1} parent=0 // pred_check
    _
  $region23: #{downsampling_block.1} parent=0 // pred_check_branch
    %3862 = sbr.rel (0) target = $region25
  $region24: #{downsampling_block.1} parent=0 // pred_region
    _
  $region25: #{downsampling_block.1} parent=0 // pred_fallthru
    _

</llo_original>
